<compile_context>
chip_gen: v6e
topology: v6e:2x2x1
jax: 0.10.0
libtpu: 0.0.40
codegen_flags: <defaults>
</compile_context>

<pallas_src>
import functools

import numpy as np
import jax
import jax.numpy as jnp
from jax.experimental import pallas as pl
from jax.experimental.pallas import tpu as pltpu


# ----------------------------------------------------------------------------
# Generic tiled matmul kernel: out = act(A @ B + bias)   (A, B in bf16, acc f32)
# ----------------------------------------------------------------------------
def _round_up(x, m):
    return ((x + m - 1) // m) * m


def _pick_tile(p, cands):
    for c in cands:
        if p % c == 0:
            return c
    return p


def _matmul_kernel(a_ref, b_ref, bias_ref, o_ref, acc_ref, *, act, nk):
    @pl.when(pl.program_id(2) == 0)
    def _():
        acc_ref[...] = jnp.zeros_like(acc_ref)

    acc_ref[...] += jnp.dot(a_ref[...], b_ref[...],
                            preferred_element_type=jnp.float32)

    @pl.when(pl.program_id(2) == nk - 1)
    def _():
        r = acc_ref[...] + bias_ref[...]
        if act == "relu":
            r = jnp.maximum(r, 0.0)
        elif act == "sigmoid":
            r = jax.nn.sigmoid(r)
        o_ref[...] = r.astype(o_ref.dtype)


@functools.partial(jax.jit, static_argnames=("act",))
def _mm_call(a_p, b_p, bias_p, *, act):
    Mp, Kp = a_p.shape
    _, Np = b_p.shape
    TM = Mp if Mp <= 512 else 256          # Mp is a multiple of 256 when > 512
    TK = _pick_tile(Kp, (2048, 1024, 512, 256, 128))
    TN = _pick_tile(Np, (512, 256, 128))
    nk = Kp // TK
    kernel = functools.partial(_matmul_kernel, act=act, nk=nk)
    return pl.pallas_call(
        kernel,
        out_shape=jax.ShapeDtypeStruct((Mp, Np), jnp.float32),
        grid_spec=pltpu.PrefetchScalarGridSpec(
            num_scalar_prefetch=0,
            grid=(Mp // TM, Np // TN, nk),
            in_specs=[pl.BlockSpec((TM, TK), lambda i, j, k: (i, k)),
                      pl.BlockSpec((TK, TN), lambda i, j, k: (k, j)),
                      pl.BlockSpec((1, TN), lambda i, j, k: (0, j))],
            out_specs=pl.BlockSpec((TM, TN), lambda i, j, k: (i, j)),
            scratch_shapes=[pltpu.VMEM((TM, TN), jnp.float32)]),
        compiler_params=pltpu.CompilerParams(
            dimension_semantics=("parallel", "parallel", "arbitrary")),
    )(a_p, b_p, bias_p)


def _pad2(x, r, c):
    if r == 0 and c == 0:
        return x
    return jnp.pad(x, ((0, r), (0, c)))


def pallas_matmul(a, b, bias=None, act="none"):
    """act(a @ b + bias); a:(M,K) b:(K,N) bias:(N,)|None.  bf16 operands, f32 out."""
    M, K = a.shape
    K2, N = b.shape
    assert K == K2
    Mp = _round_up(M, 16) if M <= 512 else _round_up(M, 256)
    Kp, Np = _round_up(K, 128), _round_up(N, 128)
    a_p = _pad2(a.astype(jnp.bfloat16), Mp - M, Kp - K)
    b_p = _pad2(b.astype(jnp.bfloat16), Kp - K, Np - N)
    if bias is None:
        bias_p = jnp.zeros((1, Np), jnp.float32)
    else:
        bias_p = _pad2(bias.astype(jnp.float32).reshape(1, N), 0, Np - N)
    out = _mm_call(a_p, b_p, bias_p, act=act)
    return out[:M, :N]


# ----------------------------------------------------------------------------
# Fused self-attention kernel (per batch element)
#   att = softmax(f^T g, dim=0); sa = h @ att; mask = sigmoid(gate_w @ sa)
#   out = mask * x
# ----------------------------------------------------------------------------
def _attn_kernel(ft_ref, g_ref, h_ref, x_ref, gw_ref, o_ref):
    ft = ft_ref[0]          # (N, C//2)
    g = g_ref[0]            # (C//2, N)
    h = h_ref[0]            # (C, N)
    x = x_ref[0]            # (C, N)
    gw = gw_ref[...]        # (1, C)
    att = jnp.dot(ft, g, preferred_element_type=jnp.float32)           # (N, N)
    m = jnp.max(att, axis=0, keepdims=True)
    e = jnp.exp(att - m)
    att = e * pl.reciprocal(jnp.sum(e, axis=0, keepdims=True), approx=True)
    sa = jnp.dot(h, att, preferred_element_type=jnp.float32)           # (C, N)
    mask = jax.nn.sigmoid(jnp.dot(gw, sa, preferred_element_type=jnp.float32))  # (1, N)
    o_ref[0] = (mask * x).astype(o_ref.dtype)


@jax.jit
def _attention_call(ft, g, h, x, gw):
    B, N, Ch = ft.shape
    C = h.shape[1]
    return pl.pallas_call(
        _attn_kernel,
        out_shape=jax.ShapeDtypeStruct((B, C, N), jnp.float32),
        grid=(B,),
        in_specs=[pl.BlockSpec((1, N, Ch), lambda b: (b, 0, 0)),
                  pl.BlockSpec((1, Ch, N), lambda b: (b, 0, 0)),
                  pl.BlockSpec((1, C, N), lambda b: (b, 0, 0)),
                  pl.BlockSpec((1, C, N), lambda b: (b, 0, 0)),
                  pl.BlockSpec((1, C), lambda b: (0, 0))],
        out_specs=pl.BlockSpec((1, C, N), lambda b: (b, 0, 0)),
        compiler_params=pltpu.CompilerParams(dimension_semantics=("parallel",)),
    )(ft, g, h, x, gw)


# ----------------------------------------------------------------------------
# Conv / deconv / resize wrappers (NHWC glue in XLA, all matmuls in Pallas)
# ----------------------------------------------------------------------------
def conv1x1_nhwc(x, wm, b=None, act="none"):
    # x: (B,H,W,Cin); wm: (Cin, Cout)
    B, H, W, C = x.shape
    y = pallas_matmul(x.reshape(B * H * W, C), wm, b, act)
    return y.reshape(B, H, W, wm.shape[1])


def conv3x3_nhwc(x, wm, b):
    # 3x3 conv, stride 1, pad 1.  wm: (9*Cin, Cout), tap-major (ky, kx, c) rows.
    # TODO(synk): a tap-accumulating Pallas conv kernel would avoid materializing the
    # 9x im2col slab; it is built in bf16 here to halve the HBM round trip.
    B, H, W, C = x.shape
    xp = jnp.pad(x.astype(jnp.bfloat16), ((0, 0), (1, 1), (1, 1), (0, 0)))
    cols = jnp.concatenate([xp[:, ky:ky + H, kx:kx + W, :]
                            for ky in range(3) for kx in range(3)], axis=-1)
    y = pallas_matmul(cols.reshape(B * H * W, 9 * C), wm, b)
    return y.reshape(B, H, W, wm.shape[1])


def conv_transpose2d_nhwc(x, wm, b, k, stride):
    # ConvTranspose2d(pad=0) as ONE dense tap matmul + k*k strided scatter-adds
    # (no zero-stuffed im2col).  wm: (Cin, Cout*k*k), tap-major (co, ky, kx) cols.
    B, H, W, Cin = x.shape
    Cout = b.shape[0]
    Ho, Wo = (H - 1) * stride + k, (W - 1) * stride + k
    y = pallas_matmul(x.reshape(B * H * W, Cin), wm)          # (B*H*W, Cout*k*k)
    y = y.reshape(B, H, W, Cout, k, k)
    out = jnp.zeros((B, Ho, Wo, Cout), jnp.float32)
    hi = (H - 1) * stride + 1
    wi = (W - 1) * stride + 1
    for ky in range(k):
        for kx in range(k):
            out = out.at[:, ky:ky + hi:stride, kx:kx + wi:stride, :].add(
                y[:, :, :, :, ky, kx])
    return out + b.reshape(1, 1, 1, Cout)


@functools.lru_cache(maxsize=None)
def _bilinear_matrix_np(in_size, out_size):
    # F.upsample(mode='bilinear') semantics (align_corners=False default of F.upsample)
    dst = np.arange(out_size, dtype=np.float64)
    src = np.clip((dst + 0.5) * in_size / out_size - 0.5, 0.0, in_size - 1)
    i0 = np.floor(src).astype(np.int64)
    i1 = np.minimum(i0 + 1, in_size - 1)
    w1 = src - i0
    w0 = 1.0 - w1
    m = np.zeros((out_size, in_size), dtype=np.float32)
    m[np.arange(out_size), i0] += w0
    m[np.arange(out_size), i1] += w1
    return m


def bilinear_upsample_nchw(x, out_h, out_w):
    # x: (B,C,H,W) -> (B,C,out_h,out_w); separable -> two Pallas matmuls
    B, C, H, W = x.shape
    rw = jnp.asarray(_bilinear_matrix_np(W, out_w))
    rh = jnp.asarray(_bilinear_matrix_np(H, out_h))
    y = pallas_matmul(x.reshape(B * C * H, W), jnp.transpose(rw))
    y = y.reshape(B, C, H, out_w)
    y = jnp.transpose(y, (0, 1, 3, 2)).reshape(B * C * out_w, H)
    y = pallas_matmul(y, jnp.transpose(rh))
    return jnp.transpose(y.reshape(B, C, out_w, out_h), (0, 1, 3, 2))


def bilinear_upsample_nhwc(x, out_h, out_w):
    y = bilinear_upsample_nchw(jnp.transpose(x, (0, 3, 1, 2)), out_h, out_w)
    return jnp.transpose(y, (0, 2, 3, 1))


# ----------------------------------------------------------------------------
# Parameters (deterministic synthetic init; shapes from STANet.__init__).
# Weights are stored pre-laid-out for the matmul kernels and pre-cast to bf16.
# ----------------------------------------------------------------------------
def init_params(key):
    ks = iter(jax.random.split(key, 64))

    def nrm(shape, dtype=jnp.bfloat16, std=0.01):
        return (std * jax.random.normal(next(ks), shape, jnp.float32)).astype(dtype)

    def zeros(n):
        return jnp.zeros((n,), jnp.float32)

    p = {}
    # extra_audio_d = Linear(8192, 2048)
    p["audio_d_w"] = nrm((8192, 2048))
    p["audio_d_b"] = zeros(2048)
    # Aup = 3 x ConvTranspose2d(2048, 2048, ...) -> (Cin, Cout*k*k) tap matrices
    p["aup1_w"] = nrm((2048, 2048 * 16)); p["aup1_b"] = zeros(2048)
    p["aup2_w"] = nrm((2048, 2048 * 16)); p["aup2_b"] = zeros(2048)
    p["aup3_w"] = nrm((2048, 2048 * 9));  p["aup3_b"] = zeros(2048)
    # TODO(synk): ResNeXt101_32x8d stage stand-ins (real backbone is torch.hub-loaded)
    p["f0_w"] = nrm((3, 512));     p["f0_b"] = zeros(512)
    p["f1_w"] = nrm((512, 1024));  p["f1_b"] = zeros(1024)
    p["f2_w"] = nrm((1024, 2048)); p["f2_b"] = zeros(2048)
    # extra_video_d0/1/2 (1x1 convs to 28 channels)
    p["d0_w"] = nrm((512, 28));  p["d0_b"] = zeros(28)
    p["d1_w"] = nrm((1024, 28)); p["d1_b"] = zeros(28)
    p["d2_w"] = nrm((2048, 28)); p["d2_b"] = zeros(28)
    # extra_convs = Conv(2048->28), Conv(28->1), Sigmoid.  No nonlinearity between the
    # convs, so they fold exactly into one 2048->1 conv at init time.
    ec1_w = nrm((2048, 28), jnp.float32); ec1_b = zeros(28)
    ec2_w = nrm((28, 1), jnp.float32);    ec2_b = zeros(1)
    p["ec_w"] = (ec1_w @ ec2_w).astype(jnp.bfloat16)
    p["ec_b"] = ec1_b @ ec2_w + ec2_b
    # fusion / gate / attention projections (projf|projg|projh fused: 28 -> 14+14+28)
    p["fusion_w"] = nrm((84, 28)); p["fusion_b"] = zeros(28)
    p["gate_w"] = nrm((1, 28), jnp.float32)        # extra_gate, bias=False
    p["fgh_w"] = jnp.concatenate([nrm((28, 14)), nrm((28, 14)), nrm((28, 28))], axis=1)
    p["fgh_b"] = zeros(56)
    # extra_refineST = Conv3d(28, 1, (3,1,1)) flattened over (c, t) -> (84, 1)
    p["st_w"] = nrm((84, 1)); p["st_b"] = zeros(1)
    # refine / predict heads (conv3x3 weights as (9*56, 28), tap-major rows)
    for n in ("refine4", "refine3", "refine2"):
        p[n + "_w"] = nrm((9 * 56, 28)); p[n + "_b"] = zeros(28)
    for n in ("predict4", "predict3", "predict2"):
        p[n + "_w"] = nrm((28, 1)); p[n + "_b"] = zeros(1)
    return p


# ----------------------------------------------------------------------------
# STANet forward (all three frames / audio clips batched through shared weights)
# ----------------------------------------------------------------------------
def avg_pool_nhwc(x, k):
    B, H, W, C = x.shape
    return x.reshape(B, H // k, k, W // k, k, C).mean(axis=(2, 4))


def features0(p, x):
    # TODO(synk): ResNeXt101 stage stand-in (stride 8 -> 512 ch)
    return conv1x1_nhwc(avg_pool_nhwc(x, 8), p["f0_w"], p["f0_b"], act="relu")


def features1(p, x):
    return conv1x1_nhwc(avg_pool_nhwc(x, 2), p["f1_w"], p["f1_b"], act="relu")


def features2(p, x):
    return conv1x1_nhwc(avg_pool_nhwc(x, 2), p["f2_w"], p["f2_b"], act="relu")


def audio_model(p, a):
    # TODO(synk): SoundNet audnet[:9] stand-in producing the expected 8192-d feature
    return jnp.tanh(a.reshape(a.shape[0], -1))


def aup(p, a):
    # a: (B, 2048) -> (B,1,1,2048) -> 3 transposed convs -> (B,12,12,2048) (NHWC)
    y = a.reshape(a.shape[0], 1, 1, 2048)
    y = conv_transpose2d_nhwc(y, p["aup1_w"], p["aup1_b"], k=4, stride=2)   # 4x4
    y = conv_transpose2d_nhwc(y, p["aup2_w"], p["aup2_b"], k=4, stride=2)   # 10x10
    y = conv_transpose2d_nhwc(y, p["aup3_w"], p["aup3_b"], k=3, stride=1)   # 12x12
    return y


def self_attention(p, x):
    # x: (B, 12, 12, 28) NHWC
    B, H, W, C = x.shape
    N = H * W
    fgh = pallas_matmul(x.reshape(B * N, C), p["fgh_w"], p["fgh_b"]).reshape(B, N, 56)
    ft = fgh[:, :, :C // 2]                                # (B, N, 14) == f^T
    g = jnp.transpose(fgh[:, :, C // 2:C], (0, 2, 1))      # (B, 14, N)
    h = jnp.transpose(fgh[:, :, C:], (0, 2, 1))            # (B, 28, N)
    x_cn = jnp.transpose(x.reshape(B, N, C), (0, 2, 1))    # (B, 28, N)
    out = _attention_call(ft, g, h, x_cn, p["gate_w"])     # (B, 28, N)
    return jnp.transpose(out, (0, 2, 1)).reshape(B, H, W, C)


def stanet_head(p, x_main, st_in, aup_feat, switch, mult, x_mid, x_low, in_hw):
    """Batched (3B) head: attention / refineST / audio-gate branches, fusion, refine+predict."""
    B3, H4, W4, C = x_main.shape
    N = H4 * W4
    # branch 1: self-attention
    b1 = jax.nn.relu(x_main + self_attention(p, x_main))
    # branch 2: spatio-temporal refine (Conv3d 28->1 over the torch cat+view layout)
    st = pallas_matmul(st_in.reshape(B3 * N, 84), p["st_w"], p["st_b"], act="sigmoid")
    b2 = jax.nn.relu(x_main + st.reshape(B3, H4, W4, 1))
    # branch 3: audio gating (extra_convs folded to a single 2048->1 conv + sigmoid)
    aud = conv1x1_nhwc(switch * aup_feat, p["ec_w"], p["ec_b"], act="sigmoid")
    b3 = jax.nn.relu(x_main + aud * mult)   # frame1 multiplies by x1, frames 2/3 by 1
    fused = conv1x1_nhwc(jnp.concatenate([b1, b2, b3], axis=-1),
                         p["fusion_w"], p["fusion_b"])
    r4 = conv3x3_nhwc(jnp.concatenate([fused, x_main], axis=-1),
                      p["refine4_w"], p["refine4_b"])
    r4 = bilinear_upsample_nhwc(r4, x_mid.shape[1], x_mid.shape[2])
    r3 = conv3x3_nhwc(jnp.concatenate([r4, x_mid], axis=-1),
                      p["refine3_w"], p["refine3_b"])
    r3 = bilinear_upsample_nhwc(r3, x_low.shape[1], x_low.shape[2])
    r2 = conv3x3_nhwc(jnp.concatenate([r3, x_low], axis=-1),
                      p["refine2_w"], p["refine2_b"])
    p4 = conv1x1_nhwc(r4, p["predict4_w"], p["predict4_b"])
    p3 = conv1x1_nhwc(r3, p["predict3_w"], p["predict3_b"])
    p2 = conv1x1_nhwc(r2, p["predict2_w"], p["predict2_b"])
    # single-channel maps: NHWC (B,h,w,1) has the same memory layout as NCHW (B,1,h,w)
    p4 = bilinear_upsample_nchw(p4.reshape(B3, 1, p4.shape[1], p4.shape[2]), *in_hw)
    p32 = jnp.concatenate([p3, p2], axis=0)          # share one resize-matmul pair
    p32 = bilinear_upsample_nchw(p32.reshape(2 * B3, 1, p3.shape[1], p3.shape[2]), *in_hw)
    return p4, p32[:B3], p32[B3:]


def stanet_forward(p, input1, input2, input3, audio1, audio2, audio3,
                   switch1, switch2, switch3):
    B = input1.shape[0]
    in_hw = input1.shape[2:]
    # batch the three frames / clips so shared weights stream from HBM once
    video = jnp.transpose(jnp.concatenate([input1, input2, input3], axis=0),
                          (0, 2, 3, 1))                                  # (3B,H,W,3)
    audio = jnp.concatenate([audio1, audio2, audio3], axis=0)            # (3B,8192)
    switch = jnp.concatenate([switch1, switch2, switch3], axis=0)        # (3B,1,1,1)
    # audio branch
    a = pallas_matmul(audio_model(p, audio), p["audio_d_w"], p["audio_d_b"])  # (3B,2048)
    aup_feat = aup(p, a)                                                 # (3B,12,12,2048)
    # video backbone (stand-in) + channel reduction to 28
    x0 = features0(p, video)                                             # (3B,48,48,512)
    x1 = features1(p, x0)                                                # (3B,24,24,1024)
    x2 = features2(p, x1)                                                # (3B,12,12,2048)
    x_low = conv1x1_nhwc(x0, p["d0_w"], p["d0_b"])                       # (3B,48,48,28)
    x_mid = conv1x1_nhwc(x1, p["d1_w"], p["d1_b"])                       # (3B,24,24,28)
    x_main = conv1x1_nhwc(x2, p["d2_w"], p["d2_b"])                      # (3B,12,12,28)
    # per-frame views for the temporal stack (torch cat+view layout) and frame-1 gate
    f1, f2, f3 = x_main[:B], x_main[B:2 * B], x_main[2 * B:]

    def flat(z):
        return z.reshape(B, 144, 28)

    st_in = jnp.concatenate([
        jnp.concatenate([flat(f2), flat(f1), flat(f3)], axis=-1),   # incat1: (x2,x1,x3)
        jnp.concatenate([flat(f1), flat(f2), flat(f3)], axis=-1),   # incat2: (x1,x2,x3)
        jnp.concatenate([flat(f1), flat(f3), flat(f2)], axis=-1),   # incat3: (x1,x3,x2)
    ], axis=0)                                                      # (3B,144,84)
    mult = jnp.concatenate([f1, jnp.ones_like(f2), jnp.ones_like(f3)], axis=0)

    p4, p3, p2 = stanet_head(p, x_main, st_in, aup_feat, switch, mult,
                             x_mid, x_low, in_hw)
    return (p4[:B], p3[:B], p2[:B],
            p4[B:2 * B], p3[B:2 * B], p2[B:2 * B],
            p4[2 * B:], p3[2 * B:], p2[2 * B:])


# ----------------------------------------------------------------------------
if __name__ == "__main__":
    key = jax.random.PRNGKey(0)
    pkey, dkey = jax.random.split(key)
    params = init_params(pkey)

    B, H, W = 2, 384, 384     # 384/32 = 12 -> matches the hard-coded (28,3,12,12) view
    ks = jax.random.split(dkey, 9)
    input1 = jax.random.normal(ks[0], (B, 3, H, W), jnp.float32)
    input2 = jax.random.normal(ks[1], (B, 3, H, W), jnp.float32)
    input3 = jax.random.normal(ks[2], (B, 3, H, W), jnp.float32)
    audio1 = jax.random.normal(ks[3], (B, 8192), jnp.float32)
    audio2 = jax.random.normal(ks[4], (B, 8192), jnp.float32)
    audio3 = jax.random.normal(ks[5], (B, 8192), jnp.float32)
    switch1 = jax.random.uniform(ks[6], (B, 1, 1, 1), jnp.float32)
    switch2 = jax.random.uniform(ks[7], (B, 1, 1, 1), jnp.float32)
    switch3 = jax.random.uniform(ks[8], (B, 1, 1, 1), jnp.float32)

    fwd = jax.jit(stanet_forward)
    outs = fwd(params, input1, input2, input3,
               audio1, audio2, audio3, switch1, switch2, switch3)
    outs = jax.block_until_ready(outs)

    assert len(outs) == 9
    assert all(o.shape == (B, 1, H, W) for o in outs), [o.shape for o in outs]
    assert all(bool(jnp.all(jnp.isfinite(o))) for o in outs)
    print("KERNEL_OK")
</pallas_src>

<mosaic_0001>
module attributes {stable_mosaic.version = 11 : i64} {
  func.func @_matmul_kernel(%arg0: i32, %arg1: i32, %arg2: i32, %arg3: memref<16x2048xbf16, #tpu.memory_space<vmem>>, %arg4: memref<2048x512xbf16, #tpu.memory_space<vmem>>, %arg5: memref<1x512xf32, #tpu.memory_space<vmem>>, %arg6: memref<16x512xf32, #tpu.memory_space<vmem>>, %arg7: memref<16x512xf32, #tpu.memory_space<vmem>>) attributes {dimension_semantics = [#tpu.dimension_semantics<parallel>, #tpu.dimension_semantics<parallel>, #tpu.dimension_semantics<arbitrary>], iteration_bounds = array<i64: 1, 4, 4>, scalar_prefetch = 0 : i64, scratch_operands = 1 : i64, tpu.core_type = #tpu.core_type<tc>, window_params = [{transform_indices = @transform_0, window_bounds = array<i64: 16, 2048>}, {transform_indices = @transform_1, window_bounds = array<i64: 2048, 512>}, {transform_indices = @transform_2, window_bounds = array<i64: 1, 512>}, {transform_indices = @transform_3, window_bounds = array<i64: 16, 512>}]} {
    %c0_i32 = arith.constant 0 : i32
    %0 = arith.cmpi eq, %arg2, %c0_i32 : i32
    %1 = arith.extui %0 : i1 to i32
    %c0_i32_0 = arith.constant 0 : i32
    %2 = arith.cmpi ne, %1, %c0_i32_0 : i32
    scf.if %2 {
      %cst_9 = arith.constant 0.000000e+00 : f32
      %12 = vector.broadcast %cst_9 : f32 to vector<16x512xf32>
      %c0_10 = arith.constant 0 : index
      %c0_11 = arith.constant 0 : index
      %13 = vector.load %arg7[%c0_10, %c0_11] : memref<16x512xf32, #tpu.memory_space<vmem>>, vector<16x512xf32>
      tpu.vector_store %arg7[%c0_10, %c0_11], %12 {strides = array<i32>} : memref<16x512xf32, #tpu.memory_space<vmem>>, vector<16x512xf32>,
    } else {
    }
    %c0 = arith.constant 0 : index
    %c0_1 = arith.constant 0 : index
    %3 = vector.load %arg7[%c0, %c0_1] : memref<16x512xf32, #tpu.memory_space<vmem>>, vector<16x512xf32>
    %c0_2 = arith.constant 0 : index
    %c0_3 = arith.constant 0 : index
    %4 = vector.load %arg3[%c0_2, %c0_3] : memref<16x2048xbf16, #tpu.memory_space<vmem>>, vector<16x2048xbf16>
    %c0_4 = arith.constant 0 : index
    %c0_5 = arith.constant 0 : index
    %5 = vector.load %arg4[%c0_4, %c0_5] : memref<2048x512xbf16, #tpu.memory_space<vmem>>, vector<2048x512xbf16>
    %cst = arith.constant dense<0.000000e+00> : vector<16x512xf32>
    %6 = tpu.matmul %4, %5, %cst {dimension_numbers = #tpu.dot_dimension_numbers<[1], [0], [0], [1], [0, 0, 1, 1], [], []>} : vector<16x2048xbf16>, vector<2048x512xbf16>, vector<16x512xf32> -> vector<16x512xf32>
    %7 = arith.addf %3, %6 : vector<16x512xf32>
    %c0_6 = arith.constant 0 : index
    %c0_7 = arith.constant 0 : index
    %8 = vector.load %arg7[%c0_6, %c0_7] : memref<16x512xf32, #tpu.memory_space<vmem>>, vector<16x512xf32>
    tpu.vector_store %arg7[%c0_6, %c0_7], %7 {strides = array<i32>} : memref<16x512xf32, #tpu.memory_space<vmem>>, vector<16x512xf32>,
    %c3_i32 = arith.constant 3 : i32
    %9 = arith.cmpi eq, %arg2, %c3_i32 : i32
    %10 = arith.extui %9 : i1 to i32
    %c0_i32_8 = arith.constant 0 : i32
    %11 = arith.cmpi ne, %10, %c0_i32_8 : i32
    scf.if %11 {
      %c0_9 = arith.constant 0 : index
      %c0_10 = arith.constant 0 : index
      %12 = vector.load %arg7[%c0_9, %c0_10] : memref<16x512xf32, #tpu.memory_space<vmem>>, vector<16x512xf32>
      %c0_11 = arith.constant 0 : index
      %c0_12 = arith.constant 0 : index
      %13 = vector.load %arg5[%c0_11, %c0_12] : memref<1x512xf32, #tpu.memory_space<vmem>>, vector<1x512xf32>
      %14 = vector.broadcast %13 : vector<1x512xf32> to vector<16x512xf32>
      %15 = arith.addf %12, %14 : vector<16x512xf32>
      %c0_13 = arith.constant 0 : index
      %c0_14 = arith.constant 0 : index
      %16 = vector.load %arg6[%c0_13, %c0_14] : memref<16x512xf32, #tpu.memory_space<vmem>>, vector<16x512xf32>
      tpu.vector_store %arg6[%c0_13, %c0_14], %15 {strides = array<i32>} : memref<16x512xf32, #tpu.memory_space<vmem>>, vector<16x512xf32>,
    } else {
    }
    return
  }
  func.func @transform_0(%arg0: i32, %arg1: i32, %arg2: i32) -> (i32, i32) {
    %c0_i32 = arith.constant 0 : i32
    return %arg0, %arg2 : i32, i32
  }
  func.func @transform_1(%arg0: i32, %arg1: i32, %arg2: i32) -> (i32, i32) {
    %c0_i32 = arith.constant 0 : i32
    return %arg2, %arg1 : i32, i32
  }
  func.func @transform_2(%arg0: i32, %arg1: i32, %arg2: i32) -> (i32, i32) {
    %c0_i32 = arith.constant 0 : i32
    %c0_i32_0 = arith.constant 0 : i32
    return %c0_i32, %arg1 : i32, i32
  }
  func.func @transform_3(%arg0: i32, %arg1: i32, %arg2: i32) -> (i32, i32) {
    %c0_i32 = arith.constant 0 : i32
    return %arg0, %arg1 : i32, i32
  }
}

</mosaic_0001>

<llo_original>
// kernel: _mm_call.1
$region0: #{_mm_call.1}
  #allocation0 [shape = 'u32[]', space=smem, size = 0x4, offset = 0x4, fixed_abs, tag = 'smem constant byte address 0x4 - core index']
  #allocation1 [shape = 'u32[144,128]{1,0:T(1,128)}', space=vmem, size = 0x12000, scoped, tag = 'internal scratch']
  #allocation2 [shape = 'f32[16,512]{1,0:T(8,128)}', space=vmem, size = 0x8000, scoped, tag = 'scratch operand']
  %s0 = inlined_call_operand.hbm [shape: bf16[16,8192], index: 0, kind: input, shape index: {}]
  %s1 = inlined_call_operand.hbm [shape: bf16[8192,2048], index: 1, kind: input, shape index: {}]
  %s2 = inlined_call_operand.hbm [shape: f32[1,2048], index: 2, kind: input, shape index: {}]
  %s3 = inlined_call_operand.hbm [shape: f32[16,2048], index: 3, kind: output, shape index: {}]
  %s4 = sld [smem:[#allocation0]]
  $region65: #{_mm_call.1} parent=0
    _
  %s6 = ssub.s32 1, %s4
  %s7 = scalar_select 0, %s6, %s4
  $region1: #{_mm_call.1} parent=0
    #allocation3 [shape = 'u8[131072]{0}', space=vmem, size = 0x20000, scoped, tag = 'input window, operand 0']
    #allocation4 [shape = 's32[2]{0}', space=sflag, size = 0x8, scoped, tag = 'scoped memory for _mm_call.1']
    #allocation5 [shape = 's32[2]{0}', space=sflag, size = 0x8, scoped, tag = 'scoped memory for _mm_call.1']
    #allocation6 [shape = 'u8[4194304]{0}', space=vmem, size = 0x400000, scoped, tag = 'input window, operand 1']
    #allocation7 [shape = 's32[2]{0}', space=sflag, size = 0x8, scoped, tag = 'scoped memory for _mm_call.1']
    #allocation8 [shape = 'u8[4096]{0}', space=vmem, size = 0x1000, scoped, tag = 'input window, operand 2']
    #allocation9 [shape = 'u8[65536]{0}', space=vmem, size = 0x10000, scoped, tag = 'output window, operand 0']
    %8 = vsyncpa [#allocation4], 0
    %s9 = scalar_lea.sflag [#allocation4], 1
    %10 = vsyncpa %s9, 0
    %11 = vsyncpa [#allocation7], 0
    %s12 = scalar_lea.sflag [#allocation7], 1
    %13 = vsyncpa %s12, 0
    %14 = vsyncpa [#allocation5], 0
    %s15 = scalar_lea.sflag [#allocation5], 1
    %16 = vsyncpa %s15, 0
    loop: start=0, step=1, limit=18
    $region2: #{_mm_call.1} parent=1 // loop_pre_header
      _
    $region3: #{_mm_call.1} parent=1 // loop_header
      %s18 = sphi 0, %s22
      %p19 = scmp.ge.s32.totalorder %s18, 18
      %s25 = sphi 0, %s44
      %s26 = sphi 0, %s40
      %s27 = sphi 0, %s36
      %s28 = sphi 0, %s25
      %s29 = sphi 0, %s26
      %s30 = sphi 0, %s27
      %s31 = sphi 0, %s28
      %s32 = sphi 0, %s29
      %s33 = sphi 0, %s30
      %s49 = sphi 0, %s51
      %s52 = sphi 0, %s49
      %s53 = sphi 0, %s52
      %s69 = sphi 0, %s53
      %s77 = sphi 0, %s79
      %s80 = sphi 0, %s77
      %s81 = sphi 0, %s80
      %s97 = sphi 0, %s81
      %s103 = sphi 0, %s105
      %s106 = sphi 0, %s103
      %s107 = sphi 0, %s106
      %s123 = sphi 0, %s107
      %s131 = sphi 0, %s133
      %s134 = sphi 0, %s131
      %s135 = sphi 0, %s134
      %s151 = sphi 0, %s135
    $region4: #{_mm_call.1} parent=1 // loop_header_branch
      %21 = sbr.rel (%p19) target = $region8
    $region5: #{_mm_call.1} parent=1 // loop_body
      %s23 = ssub.s32 %s18, 1
      %s24 = ssub.s32 %s18, 2
      %s34 = sadd.s32 1, %s27
      %p35 = scmp.ge.s32.totalorder %s34, 4
      %s36 = scalar_select %p35, 0, %s34
      %s37 = sadd.s32 1, %s26
      %s38 = scalar_select %p35, %s37, %s26
      %p39 = scmp.ge.s32.totalorder %s38, 4
      %s40 = scalar_select %p39, 0, %s38
      %s41 = sadd.s32 1, %s25
      %s42 = scalar_select %p39, %s41, %s25
      %p43 = scmp.ge.s32.totalorder %s42, 1
      %s44 = scalar_select %p43, 0, %s42
      %s45 = ssub.s32 %s25, %s44
      %s46 = ssub.s32 %s27, %s36
      %s47 = sor.u32 %s45, %s46
      %p48 = scmp.eq.s32.totalorder %s47, 0
      %s50 = sadd.s32 %s49, 1
      %s51 = scalar_select %p48, %s49, %s50
      %p54 = pneg %p48
      %p55 = scmp.eq.s32.totalorder %s18, 15
      %p56 = por %p54, %p55
      %p57 = scmp.ne.s32.totalorder %s49, %s52
      %p58 = scmp.eq.s32.totalorder %s18, 0
      %p59 = por %p57, %p58
      %p60 = scmp.ne.s32.totalorder %s49, %s52
      %p61 = scmp.eq.s32.totalorder %s23, 15
      %p62 = por %p60, %p61
      %p63 = scmp.ne.s32.totalorder %s52, %s53
      %p64 = scmp.eq.s32.totalorder %s23, 0
      %p65 = por %p63, %p64
      %p66 = scmp.ne.s32.totalorder %s52, %s53
      %p67 = scmp.eq.s32.totalorder %s24, 15
      %p68 = por %p66, %p67
      %p70 = scmp.ne.s32.totalorder %s53, %s69
      %p71 = scmp.eq.s32.totalorder %s24, 0
      %p72 = por %p70, %p71
      %s73 = ssub.s32 %s27, %s36
      %s74 = ssub.s32 %s26, %s40
      %s75 = sor.u32 %s73, %s74
      %p76 = scmp.eq.s32.totalorder %s75, 0
      %s78 = sadd.s32 %s77, 1
      %s79 = scalar_select %p76, %s77, %s78
      %p82 = pneg %p76
      %p83 = scmp.eq.s32.totalorder %s18, 15
      %p84 = por %p82, %p83
      %p85 = scmp.ne.s32.totalorder %s77, %s80
      %p86 = scmp.eq.s32.totalorder %s18, 0
      %p87 = por %p85, %p86
      %p88 = scmp.ne.s32.totalorder %s77, %s80
      %p89 = scmp.eq.s32.totalorder %s23, 15
      %p90 = por %p88, %p89
      %p91 = scmp.ne.s32.totalorder %s80, %s81
      %p92 = scmp.eq.s32.totalorder %s23, 0
      %p93 = por %p91, %p92
      %p94 = scmp.ne.s32.totalorder %s80, %s81
      %p95 = scmp.eq.s32.totalorder %s24, 15
      %p96 = por %p94, %p95
      %p98 = scmp.ne.s32.totalorder %s81, %s97
      %p99 = scmp.eq.s32.totalorder %s24, 0
      %p100 = por %p98, %p99
      %s101 = ssub.s32 %s26, %s40
      %p102 = scmp.eq.s32.totalorder %s101, 0
      %s104 = sadd.s32 %s103, 1
      %s105 = scalar_select %p102, %s103, %s104
      %p108 = pneg %p102
      %p109 = scmp.eq.s32.totalorder %s18, 15
      %p110 = por %p108, %p109
      %p111 = scmp.ne.s32.totalorder %s103, %s106
      %p112 = scmp.eq.s32.totalorder %s18, 0
      %p113 = por %p111, %p112
      %p114 = scmp.ne.s32.totalorder %s103, %s106
      %p115 = scmp.eq.s32.totalorder %s23, 15
      %p116 = por %p114, %p115
      %p117 = scmp.ne.s32.totalorder %s106, %s107
      %p118 = scmp.eq.s32.totalorder %s23, 0
      %p119 = por %p117, %p118
      %p120 = scmp.ne.s32.totalorder %s106, %s107
      %p121 = scmp.eq.s32.totalorder %s24, 15
      %p122 = por %p120, %p121
      %p124 = scmp.ne.s32.totalorder %s107, %s123
      %p125 = scmp.eq.s32.totalorder %s24, 0
      %p126 = por %p124, %p125
      %s127 = ssub.s32 %s25, %s44
      %s128 = ssub.s32 %s26, %s40
      %s129 = sor.u32 %s127, %s128
      %p130 = scmp.eq.s32.totalorder %s129, 0
      %s132 = sadd.s32 %s131, 1
      %s133 = scalar_select %p130, %s131, %s132
      %p136 = pneg %p130
      %p137 = scmp.eq.s32.totalorder %s18, 15
      %p138 = por %p136, %p137
      %p139 = scmp.ne.s32.totalorder %s131, %s134
      %p140 = scmp.eq.s32.totalorder %s18, 0
      %p141 = por %p139, %p140
      %p142 = scmp.ne.s32.totalorder %s131, %s134
      %p143 = scmp.eq.s32.totalorder %s23, 15
      %p144 = por %p142, %p143
      %p145 = scmp.ne.s32.totalorder %s134, %s135
      %p146 = scmp.eq.s32.totalorder %s23, 0
      %p147 = por %p145, %p146
      %p148 = scmp.ne.s32.totalorder %s134, %s135
      %p149 = scmp.eq.s32.totalorder %s24, 15
      %p150 = por %p148, %p149
      %p152 = scmp.ne.s32.totalorder %s135, %s151
      %p153 = scmp.eq.s32.totalorder %s24, 0
      %p154 = por %p152, %p153
      %p155 = scmp.le.s32.totalorder 1, %s18
      %p156 = scmp.lt.s32.totalorder %s18, 17
      %p157 = pnand %p155, %p156
      %p158 = pneg %p157
      // Predicated region
      $region9: #{_mm_call.1} parent=5 // pred_check
        _
      $region10: #{_mm_call.1} parent=5 // pred_check_branch
        %160 = sbr.rel (%p157) target = $region12
      $region11: #{_mm_call.1} parent=5 // pred_region
        %s161 = ssub.s32 %s18, 1
      $region12: #{_mm_call.1} parent=5 // pred_fallthru
        _
      %p162 = scmp.lt.s32.totalorder %s18, 16
      // Predicated region
      $region13: #{_mm_call.1} parent=5 // pred_check
        %p163 = pneg %p162
      $region14: #{_mm_call.1} parent=5 // pred_check_branch
        %165 = sbr.rel (%p163) target = $region16
      $region15: #{_mm_call.1} parent=5 // pred_region
        // Predicated region
        $region17: #{_mm_call.1} parent=15 // pred_check
          %p166 = pneg %p59
        $region18: #{_mm_call.1} parent=15 // pred_check_branch
          %168 = sbr.rel (%p166) target = $region20
        $region19: #{_mm_call.1} parent=15 // pred_region
          %s169 = sand.u32 %s49, 1
          %s170 = scalar_lea.sflag [#allocation4], %s169
          %s171 = sand.u32 %s49, 1
          %s172 = smul.addr %s171, 128
          %s173 = scalar_lea.vmem [#allocation3], %s172
          %s174 = smul.u32 2, %s25
          %s175 = smul.u32 16, %s27
          %s177 = ssub.s32 2048, 2048
          %178 = vsyncadd %s170, %s177
          %s179 = smul.addr %s174, 64
          %s180 = sadd.s32 %s175, %s179
          %s181 = smul.addr %s180, 64
          %s182 = scalar_lea.hbm %s0, %s181
          %s183 = sshll.u32 %s173, 4
          %s184 = int_to_ptr.vmem [resolvable:$true] %s183
          %189 = dma.hbm_to_vmem [thread:$0]  %s182, 2048, %s184, %s170, 4096, 1024, 64
        $region20: #{_mm_call.1} parent=15 // pred_fallthru
          _
        // Predicated region
        $region21: #{_mm_call.1} parent=15 // pred_check
          %p190 = pneg %p87
        $region22: #{_mm_call.1} parent=15 // pred_check_branch
          %192 = sbr.rel (%p190) target = $region24
        $region23: #{_mm_call.1} parent=15 // pred_region
          %s193 = sand.u32 %s18, 1
          %s194 = scalar_lea.sflag [#allocation7], %s193
          %s195 = sand.u32 %s77, 1
          %s196 = smul.addr %s195, 4096
          %s197 = scalar_lea.vmem [#allocation6], %s196
          %s198 = smul.u32 256, %s27
          %s199 = smul.u32 4, %s26
          %s201 = ssub.s32 65536, 65536
          %202 = vsyncadd %s194, %s201
          %s203 = smul.addr %s198, 16
          %s204 = sadd.s32 %s199, %s203
          %s205 = smul.addr %s204, 64
          %s206 = scalar_lea.hbm %s1, %s205
          %s207 = sshll.u32 %s197, 4
          %s208 = int_to_ptr.vmem [resolvable:$true] %s207
          %213 = dma.hbm_to_vmem [thread:$0]  %s206, 65536, %s208, %s194, 1024, 256, 16
        $region24: #{_mm_call.1} parent=15 // pred_fallthru
          _
        // Predicated region
        $region25: #{_mm_call.1} parent=15 // pred_check
          %p214 = pneg %p113
        $region26: #{_mm_call.1} parent=15 // pred_check_branch
          %216 = sbr.rel (%p214) target = $region28
        $region27: #{_mm_call.1} parent=15 // pred_region
          %s217 = sand.u32 %s18, 1
          %s218 = scalar_lea.sflag [#allocation7], %s217
          %s219 = sand.u32 %s103, 1
          %s220 = smul.addr %s219, 4
          %s221 = scalar_lea.vmem [#allocation8], %s220
          %s222 = smul.u32 4, %s26
          %s224 = ssub.s32 64, 64
          %225 = vsyncadd %s218, %s224
          %s226 = smul.addr %s222, 16
          %s227 = scalar_lea.hbm %s2, %s226
          %s229 = sshll.u32 %s221, 4
          %s230 = int_to_ptr.vmem [resolvable:$true] %s229
          %232 = dma.hbm_to_vmem [thread:$0]  %s227, 64, %s230, %s218
        $region28: #{_mm_call.1} parent=15 // pred_fallthru
          _
      $region16: #{_mm_call.1} parent=5 // pred_fallthru
        _
      %p233 = scmp.le.s32.totalorder 1, %s18
      %p234 = scmp.lt.s32.totalorder %s18, 17
      %p235 = pnand %p233, %p234
      %p236 = pneg %p235
      // Predicated region
      $region29: #{_mm_call.1} parent=5 // pred_check
        _
      $region30: #{_mm_call.1} parent=5 // pred_check_branch
        %238 = sbr.rel (%p235) target = $region32
      $region31: #{_mm_call.1} parent=5 // pred_region
        %s239 = ssub.s32 %s18, 1
        %s240 = sand.u32 %s52, 1
        %s241 = scalar_lea.sflag [#allocation4], %s240
        %s242 = sand.u32 %s52, 1
        %s243 = smul.addr %s242, 128
        %s244 = scalar_lea.vmem [#allocation3], %s243
        // Predicated region
        $region33: #{_mm_call.1} parent=31 // pred_check
          %p245 = pneg %p65
        $region34: #{_mm_call.1} parent=31 // pred_check_branch
          %247 = sbr.rel (%p245) target = $region36
        $region35: #{_mm_call.1} parent=31 // pred_region
          %248 = dma.done %s241, 2048
        $region36: #{_mm_call.1} parent=31 // pred_fallthru
          _
        %s249 = sand.u32 %s23, 1
        %s250 = scalar_lea.sflag [#allocation7], %s249
        %s251 = sand.u32 %s80, 1
        %s252 = smul.addr %s251, 4096
        %s253 = scalar_lea.vmem [#allocation6], %s252
        // Predicated region
        $region37: #{_mm_call.1} parent=31 // pred_check
          %p254 = pneg %p93
        $region38: #{_mm_call.1} parent=31 // pred_check_branch
          %256 = sbr.rel (%p254) target = $region40
        $region39: #{_mm_call.1} parent=31 // pred_region
          %257 = dma.done %s250, 65536
        $region40: #{_mm_call.1} parent=31 // pred_fallthru
          _
        %s258 = sand.u32 %s23, 1
        %s259 = scalar_lea.sflag [#allocation7], %s258
        %s260 = sand.u32 %s106, 1
        %s261 = smul.addr %s260, 4
        %s262 = scalar_lea.vmem [#allocation8], %s261
        // Predicated region
        $region41: #{_mm_call.1} parent=31 // pred_check
          %p263 = pneg %p119
        $region42: #{_mm_call.1} parent=31 // pred_check_branch
          %265 = sbr.rel (%p263) target = $region44
        $region43: #{_mm_call.1} parent=31 // pred_region
          %266 = dma.done %s259, 64
        $region44: #{_mm_call.1} parent=31 // pred_fallthru
          _
        %s267 = sand.u32 %s52, 1
        %s268 = scalar_lea.sflag [#allocation4], %s267
        %s269 = sand.u32 %s52, 1
        %s270 = smul.addr %s269, 128
        %s271 = scalar_lea.vmem [#allocation3], %s270
        %p272 = pneg %p65
        %p273 = pneg %p62
        %s274 = sand.u32 %s23, 1
        %s275 = scalar_lea.sflag [#allocation7], %s274
        %s276 = sand.u32 %s80, 1
        %s277 = smul.addr %s276, 4096
        %s278 = scalar_lea.vmem [#allocation6], %s277
        %p279 = pneg %p93
        %p280 = pneg %p90
        %s281 = sand.u32 %s23, 1
        %s282 = scalar_lea.sflag [#allocation7], %s281
        %s283 = sand.u32 %s106, 1
        %s284 = smul.addr %s283, 4
        %s285 = scalar_lea.vmem [#allocation8], %s284
        %p286 = pneg %p119
        %p287 = pneg %p116
        %p288 = pneg %p147
        %p289 = pneg %p144
        %s290 = sand.u32 %s134, 1
        %s291 = scalar_lea.sflag [#allocation5], %s290
        %s292 = sand.u32 %s134, 1
        %s293 = smul.addr %s292, 64
        %s294 = scalar_lea.vmem [#allocation9], %s293
        %s295 = smul.u32 2, %s28
        %s296 = smul.u32 16, %s30
        %s297 = smul.u32 256, %s30
        %s298 = smul.u32 4, %s29
        %s299 = smul.u32 4, %s29
        %s300 = smul.u32 2, %s28
        %s301 = smul.u32 4, %s29
        %p302 = scmp.eq.s32.totalorder %s30, 0
        // Predicated region
        $region45: #{_mm_call.1} parent=31 // pred_check
          %p303 = pneg %p302
        $region46: #{_mm_call.1} parent=31 // pred_check_branch
          %305 = sbr.rel (%p303) target = $region48
        $region47: #{_mm_call.1} parent=31 // pred_region
          %306 = vst [vmem:[#allocation2] sm:$0xff] 0.0
          %307 = vst [vmem:[#allocation2 + $0x8] sm:$0xff] 0.0
          %308 = vst [vmem:[#allocation2 + $0x10] sm:$0xff] 0.0
          %309 = vst [vmem:[#allocation2 + $0x18] sm:$0xff] 0.0
          %310 = vst [vmem:[#allocation2 + $0x20] sm:$0xff] 0.0
          %311 = vst [vmem:[#allocation2 + $0x28] sm:$0xff] 0.0
          %312 = vst [vmem:[#allocation2 + $0x30] sm:$0xff] 0.0
          %313 = vst [vmem:[#allocation2 + $0x38] sm:$0xff] 0.0
        $region48: #{_mm_call.1} parent=31 // pred_fallthru
          _
        %v314 = vld [vmem:[#allocation2] sm:$0xff]
        %v315 = vld [vmem:[#allocation2 + $0x8] sm:$0xff]
        %v316 = vld [vmem:[#allocation2 + $0x10] sm:$0xff]
        %v317 = vld [vmem:[#allocation2 + $0x18] sm:$0xff]
        %v318 = vld [vmem:[#allocation2 + $0x20] sm:$0xff]
        %v319 = vld [vmem:[#allocation2 + $0x28] sm:$0xff]
        %v320 = vld [vmem:[#allocation2 + $0x30] sm:$0xff]
        %v321 = vld [vmem:[#allocation2 + $0x38] sm:$0xff]
        %v322 = vld [vmem:[%s244] sm:$0xff]
        %v323 = vld [vmem:[%s244 + $0x8] sm:$0xff]
        %v324 = vld [vmem:[%s244 + $0x10] sm:$0xff]
        %v325 = vld [vmem:[%s244 + $0x18] sm:$0xff]
        %v326 = vld [vmem:[%s244 + $0x20] sm:$0xff]
        %v327 = vld [vmem:[%s244 + $0x28] sm:$0xff]
        %v328 = vld [vmem:[%s244 + $0x30] sm:$0xff]
        %v329 = vld [vmem:[%s244 + $0x38] sm:$0xff]
        %v330 = vld [vmem:[%s244 + $0x40] sm:$0xff]
        %v331 = vld [vmem:[%s244 + $0x48] sm:$0xff]
        %v332 = vld [vmem:[%s244 + $0x50] sm:$0xff]
        %v333 = vld [vmem:[%s244 + $0x58] sm:$0xff]
        %v334 = vld [vmem:[%s244 + $0x60] sm:$0xff]
        %v335 = vld [vmem:[%s244 + $0x68] sm:$0xff]
        %v336 = vld [vmem:[%s244 + $0x70] sm:$0xff]
        %v337 = vld [vmem:[%s244 + $0x78] sm:$0xff]
        %v338 = vld [vmem:[%s253] sm:$0xff]
        %v339 = vld [vmem:[%s253 + $0x8] sm:$0xff]
        %v340 = vld [vmem:[%s253 + $0x10] sm:$0xff]
        %v341 = vld [vmem:[%s253 + $0x18] sm:$0xff]
        %v342 = vld [vmem:[%s253 + $0x20] sm:$0xff]
        %v343 = vld [vmem:[%s253 + $0x28] sm:$0xff]
        %v344 = vld [vmem:[%s253 + $0x30] sm:$0xff]
        %v345 = vld [vmem:[%s253 + $0x38] sm:$0xff]
        %v346 = vld [vmem:[%s253 + $0x40] sm:$0xff]
        %v347 = vld [vmem:[%s253 + $0x48] sm:$0xff]
        %v348 = vld [vmem:[%s253 + $0x50] sm:$0xff]
        %v349 = vld [vmem:[%s253 + $0x58] sm:$0xff]
        %v350 = vld [vmem:[%s253 + $0x60] sm:$0xff]
        %v351 = vld [vmem:[%s253 + $0x68] sm:$0xff]
        %v352 = vld [vmem:[%s253 + $0x70] sm:$0xff]
        %v353 = vld [vmem:[%s253 + $0x78] sm:$0xff]
        %v354 = vld [vmem:[%s253 + $0x80] sm:$0xff]
        %v355 = vld [vmem:[%s253 + $0x88] sm:$0xff]
        %v356 = vld [vmem:[%s253 + $0x90] sm:$0xff]
        %v357 = vld [vmem:[%s253 + $0x98] sm:$0xff]
        %v358 = vld [vmem:[%s253 + $0xa0] sm:$0xff]
        %v359 = vld [vmem:[%s253 + $0xa8] sm:$0xff]
        %v360 = vld [vmem:[%s253 + $0xb0] sm:$0xff]
        %v361 = vld [vmem:[%s253 + $0xb8] sm:$0xff]
        %v362 = vld [vmem:[%s253 + $0xc0] sm:$0xff]
        %v363 = vld [vmem:[%s253 + $0xc8] sm:$0xff]
        %v364 = vld [vmem:[%s253 + $0xd0] sm:$0xff]
        %v365 = vld [vmem:[%s253 + $0xd8] sm:$0xff]
        %v366 = vld [vmem:[%s253 + $0xe0] sm:$0xff]
        %v367 = vld [vmem:[%s253 + $0xe8] sm:$0xff]
        %v368 = vld [vmem:[%s253 + $0xf0] sm:$0xff]
        %v369 = vld [vmem:[%s253 + $0xf8] sm:$0xff]
        %v370 = vld [vmem:[%s253 + $0x100] sm:$0xff]
        %v371 = vld [vmem:[%s253 + $0x108] sm:$0xff]
        %v372 = vld [vmem:[%s253 + $0x110] sm:$0xff]
        %v373 = vld [vmem:[%s253 + $0x118] sm:$0xff]
        %v374 = vld [vmem:[%s253 + $0x120] sm:$0xff]
        %v375 = vld [vmem:[%s253 + $0x128] sm:$0xff]
        %v376 = vld [vmem:[%s253 + $0x130] sm:$0xff]
        %v377 = vld [vmem:[%s253 + $0x138] sm:$0xff]
        %v378 = vld [vmem:[%s253 + $0x140] sm:$0xff]
        %v379 = vld [vmem:[%s253 + $0x148] sm:$0xff]
        %v380 = vld [vmem:[%s253 + $0x150] sm:$0xff]
        %v381 = vld [vmem:[%s253 + $0x158] sm:$0xff]
        %v382 = vld [vmem:[%s253 + $0x160] sm:$0xff]
        %v383 = vld [vmem:[%s253 + $0x168] sm:$0xff]
        %v384 = vld [vmem:[%s253 + $0x170] sm:$0xff]
        %v385 = vld [vmem:[%s253 + $0x178] sm:$0xff]
        %v386 = vld [vmem:[%s253 + $0x180] sm:$0xff]
        %v387 = vld [vmem:[%s253 + $0x188] sm:$0xff]
        %v388 = vld [vmem:[%s253 + $0x190] sm:$0xff]
        %v389 = vld [vmem:[%s253 + $0x198] sm:$0xff]
        %v390 = vld [vmem:[%s253 + $0x1a0] sm:$0xff]
        %v391 = vld [vmem:[%s253 + $0x1a8] sm:$0xff]
        %v392 = vld [vmem:[%s253 + $0x1b0] sm:$0xff]
        %v393 = vld [vmem:[%s253 + $0x1b8] sm:$0xff]
        %v394 = vld [vmem:[%s253 + $0x1c0] sm:$0xff]
        %v395 = vld [vmem:[%s253 + $0x1c8] sm:$0xff]
        %v396 = vld [vmem:[%s253 + $0x1d0] sm:$0xff]
        %v397 = vld [vmem:[%s253 + $0x1d8] sm:$0xff]
        %v398 = vld [vmem:[%s253 + $0x1e0] sm:$0xff]
        %v399 = vld [vmem:[%s253 + $0x1e8] sm:$0xff]
        %v400 = vld [vmem:[%s253 + $0x1f0] sm:$0xff]
        %v401 = vld [vmem:[%s253 + $0x1f8] sm:$0xff]
        %v402 = vld [vmem:[%s253 + $0x200] sm:$0xff]
        %v403 = vld [vmem:[%s253 + $0x208] sm:$0xff]
        %v404 = vld [vmem:[%s253 + $0x210] sm:$0xff]
        %v405 = vld [vmem:[%s253 + $0x218] sm:$0xff]
        %v406 = vld [vmem:[%s253 + $0x220] sm:$0xff]
        %v407 = vld [vmem:[%s253 + $0x228] sm:$0xff]
        %v408 = vld [vmem:[%s253 + $0x230] sm:$0xff]
        %v409 = vld [vmem:[%s253 + $0x238] sm:$0xff]
        %v410 = vld [vmem:[%s253 + $0x240] sm:$0xff]
        %v411 = vld [vmem:[%s253 + $0x248] sm:$0xff]
        %v412 = vld [vmem:[%s253 + $0x250] sm:$0xff]
        %v413 = vld [vmem:[%s253 + $0x258] sm:$0xff]
        %v414 = vld [vmem:[%s253 + $0x260] sm:$0xff]
        %v415 = vld [vmem:[%s253 + $0x268] sm:$0xff]
        %v416 = vld [vmem:[%s253 + $0x270] sm:$0xff]
        %v417 = vld [vmem:[%s253 + $0x278] sm:$0xff]
        %v418 = vld [vmem:[%s253 + $0x280] sm:$0xff]
        %v419 = vld [vmem:[%s253 + $0x288] sm:$0xff]
        %v420 = vld [vmem:[%s253 + $0x290] sm:$0xff]
        %v421 = vld [vmem:[%s253 + $0x298] sm:$0xff]
        %v422 = vld [vmem:[%s253 + $0x2a0] sm:$0xff]
        %v423 = vld [vmem:[%s253 + $0x2a8] sm:$0xff]
        %v424 = vld [vmem:[%s253 + $0x2b0] sm:$0xff]
        %v425 = vld [vmem:[%s253 + $0x2b8] sm:$0xff]
        %v426 = vld [vmem:[%s253 + $0x2c0] sm:$0xff]
        %v427 = vld [vmem:[%s253 + $0x2c8] sm:$0xff]
        %v428 = vld [vmem:[%s253 + $0x2d0] sm:$0xff]
        %v429 = vld [vmem:[%s253 + $0x2d8] sm:$0xff]
        %v430 = vld [vmem:[%s253 + $0x2e0] sm:$0xff]
        %v431 = vld [vmem:[%s253 + $0x2e8] sm:$0xff]
        %v432 = vld [vmem:[%s253 + $0x2f0] sm:$0xff]
        %v433 = vld [vmem:[%s253 + $0x2f8] sm:$0xff]
        %v434 = vld [vmem:[%s253 + $0x300] sm:$0xff]
        %v435 = vld [vmem:[%s253 + $0x308] sm:$0xff]
        %v436 = vld [vmem:[%s253 + $0x310] sm:$0xff]
        %v437 = vld [vmem:[%s253 + $0x318] sm:$0xff]
        %v438 = vld [vmem:[%s253 + $0x320] sm:$0xff]
        %v439 = vld [vmem:[%s253 + $0x328] sm:$0xff]
        %v440 = vld [vmem:[%s253 + $0x330] sm:$0xff]
        %v441 = vld [vmem:[%s253 + $0x338] sm:$0xff]
        %v442 = vld [vmem:[%s253 + $0x340] sm:$0xff]
        %v443 = vld [vmem:[%s253 + $0x348] sm:$0xff]
        %v444 = vld [vmem:[%s253 + $0x350] sm:$0xff]
        %v445 = vld [vmem:[%s253 + $0x358] sm:$0xff]
        %v446 = vld [vmem:[%s253 + $0x360] sm:$0xff]
        %v447 = vld [vmem:[%s253 + $0x368] sm:$0xff]
        %v448 = vld [vmem:[%s253 + $0x370] sm:$0xff]
        %v449 = vld [vmem:[%s253 + $0x378] sm:$0xff]
        %v450 = vld [vmem:[%s253 + $0x380] sm:$0xff]
        %v451 = vld [vmem:[%s253 + $0x388] sm:$0xff]
        %v452 = vld [vmem:[%s253 + $0x390] sm:$0xff]
        %v453 = vld [vmem:[%s253 + $0x398] sm:$0xff]
        %v454 = vld [vmem:[%s253 + $0x3a0] sm:$0xff]
        %v455 = vld [vmem:[%s253 + $0x3a8] sm:$0xff]
        %v456 = vld [vmem:[%s253 + $0x3b0] sm:$0xff]
        %v457 = vld [vmem:[%s253 + $0x3b8] sm:$0xff]
        %v458 = vld [vmem:[%s253 + $0x3c0] sm:$0xff]
        %v459 = vld [vmem:[%s253 + $0x3c8] sm:$0xff]
        %v460 = vld [vmem:[%s253 + $0x3d0] sm:$0xff]
        %v461 = vld [vmem:[%s253 + $0x3d8] sm:$0xff]
        %v462 = vld [vmem:[%s253 + $0x3e0] sm:$0xff]
        %v463 = vld [vmem:[%s253 + $0x3e8] sm:$0xff]
        %v464 = vld [vmem:[%s253 + $0x3f0] sm:$0xff]
        %v465 = vld [vmem:[%s253 + $0x3f8] sm:$0xff]
        %v466 = vld [vmem:[%s253 + $0x400] sm:$0xff]
        %v467 = vld [vmem:[%s253 + $0x408] sm:$0xff]
        %v468 = vld [vmem:[%s253 + $0x410] sm:$0xff]
        %v469 = vld [vmem:[%s253 + $0x418] sm:$0xff]
        %v470 = vld [vmem:[%s253 + $0x420] sm:$0xff]
        %v471 = vld [vmem:[%s253 + $0x428] sm:$0xff]
        %v472 = vld [vmem:[%s253 + $0x430] sm:$0xff]
        %v473 = vld [vmem:[%s253 + $0x438] sm:$0xff]
        %v474 = vld [vmem:[%s253 + $0x440] sm:$0xff]
        %v475 = vld [vmem:[%s253 + $0x448] sm:$0xff]
        %v476 = vld [vmem:[%s253 + $0x450] sm:$0xff]
        %v477 = vld [vmem:[%s253 + $0x458] sm:$0xff]
        %v478 = vld [vmem:[%s253 + $0x460] sm:$0xff]
        %v479 = vld [vmem:[%s253 + $0x468] sm:$0xff]
        %v480 = vld [vmem:[%s253 + $0x470] sm:$0xff]
        %v481 = vld [vmem:[%s253 + $0x478] sm:$0xff]
        %v482 = vld [vmem:[%s253 + $0x480] sm:$0xff]
        %v483 = vld [vmem:[%s253 + $0x488] sm:$0xff]
        %v484 = vld [vmem:[%s253 + $0x490] sm:$0xff]
        %v485 = vld [vmem:[%s253 + $0x498] sm:$0xff]
        %v486 = vld [vmem:[%s253 + $0x4a0] sm:$0xff]
        %v487 = vld [vmem:[%s253 + $0x4a8] sm:$0xff]
        %v488 = vld [vmem:[%s253 + $0x4b0] sm:$0xff]
        %v489 = vld [vmem:[%s253 + $0x4b8] sm:$0xff]
        %v490 = vld [vmem:[%s253 + $0x4c0] sm:$0xff]
        %v491 = vld [vmem:[%s253 + $0x4c8] sm:$0xff]
        %v492 = vld [vmem:[%s253 + $0x4d0] sm:$0xff]
        %v493 = vld [vmem:[%s253 + $0x4d8] sm:$0xff]
        %v494 = vld [vmem:[%s253 + $0x4e0] sm:$0xff]
        %v495 = vld [vmem:[%s253 + $0x4e8] sm:$0xff]
        %v496 = vld [vmem:[%s253 + $0x4f0] sm:$0xff]
        %v497 = vld [vmem:[%s253 + $0x4f8] sm:$0xff]
        %v498 = vld [vmem:[%s253 + $0x500] sm:$0xff]
        %v499 = vld [vmem:[%s253 + $0x508] sm:$0xff]
        %v500 = vld [vmem:[%s253 + $0x510] sm:$0xff]
        %v501 = vld [vmem:[%s253 + $0x518] sm:$0xff]
        %v502 = vld [vmem:[%s253 + $0x520] sm:$0xff]
        %v503 = vld [vmem:[%s253 + $0x528] sm:$0xff]
        %v504 = vld [vmem:[%s253 + $0x530] sm:$0xff]
        %v505 = vld [vmem:[%s253 + $0x538] sm:$0xff]
        %v506 = vld [vmem:[%s253 + $0x540] sm:$0xff]
        %v507 = vld [vmem:[%s253 + $0x548] sm:$0xff]
        %v508 = vld [vmem:[%s253 + $0x550] sm:$0xff]
        %v509 = vld [vmem:[%s253 + $0x558] sm:$0xff]
        %v510 = vld [vmem:[%s253 + $0x560] sm:$0xff]
        %v511 = vld [vmem:[%s253 + $0x568] sm:$0xff]
        %v512 = vld [vmem:[%s253 + $0x570] sm:$0xff]
        %v513 = vld [vmem:[%s253 + $0x578] sm:$0xff]
        %v514 = vld [vmem:[%s253 + $0x580] sm:$0xff]
        %v515 = vld [vmem:[%s253 + $0x588] sm:$0xff]
        %v516 = vld [vmem:[%s253 + $0x590] sm:$0xff]
        %v517 = vld [vmem:[%s253 + $0x598] sm:$0xff]
        %v518 = vld [vmem:[%s253 + $0x5a0] sm:$0xff]
        %v519 = vld [vmem:[%s253 + $0x5a8] sm:$0xff]
        %v520 = vld [vmem:[%s253 + $0x5b0] sm:$0xff]
        %v521 = vld [vmem:[%s253 + $0x5b8] sm:$0xff]
        %v522 = vld [vmem:[%s253 + $0x5c0] sm:$0xff]
        %v523 = vld [vmem:[%s253 + $0x5c8] sm:$0xff]
        %v524 = vld [vmem:[%s253 + $0x5d0] sm:$0xff]
        %v525 = vld [vmem:[%s253 + $0x5d8] sm:$0xff]
        %v526 = vld [vmem:[%s253 + $0x5e0] sm:$0xff]
        %v527 = vld [vmem:[%s253 + $0x5e8] sm:$0xff]
        %v528 = vld [vmem:[%s253 + $0x5f0] sm:$0xff]
        %v529 = vld [vmem:[%s253 + $0x5f8] sm:$0xff]
        %v530 = vld [vmem:[%s253 + $0x600] sm:$0xff]
        %v531 = vld [vmem:[%s253 + $0x608] sm:$0xff]
        %v532 = vld [vmem:[%s253 + $0x610] sm:$0xff]
        %v533 = vld [vmem:[%s253 + $0x618] sm:$0xff]
        %v534 = vld [vmem:[%s253 + $0x620] sm:$0xff]
        %v535 = vld [vmem:[%s253 + $0x628] sm:$0xff]
        %v536 = vld [vmem:[%s253 + $0x630] sm:$0xff]
        %v537 = vld [vmem:[%s253 + $0x638] sm:$0xff]
        %v538 = vld [vmem:[%s253 + $0x640] sm:$0xff]
        %v539 = vld [vmem:[%s253 + $0x648] sm:$0xff]
        %v540 = vld [vmem:[%s253 + $0x650] sm:$0xff]
        %v541 = vld [vmem:[%s253 + $0x658] sm:$0xff]
        %v542 = vld [vmem:[%s253 + $0x660] sm:$0xff]
        %v543 = vld [vmem:[%s253 + $0x668] sm:$0xff]
        %v544 = vld [vmem:[%s253 + $0x670] sm:$0xff]
        %v545 = vld [vmem:[%s253 + $0x678] sm:$0xff]
        %v546 = vld [vmem:[%s253 + $0x680] sm:$0xff]
        %v547 = vld [vmem:[%s253 + $0x688] sm:$0xff]
        %v548 = vld [vmem:[%s253 + $0x690] sm:$0xff]
        %v549 = vld [vmem:[%s253 + $0x698] sm:$0xff]
        %v550 = vld [vmem:[%s253 + $0x6a0] sm:$0xff]
        %v551 = vld [vmem:[%s253 + $0x6a8] sm:$0xff]
        %v552 = vld [vmem:[%s253 + $0x6b0] sm:$0xff]
        %v553 = vld [vmem:[%s253 + $0x6b8] sm:$0xff]
        %v554 = vld [vmem:[%s253 + $0x6c0] sm:$0xff]
        %v555 = vld [vmem:[%s253 + $0x6c8] sm:$0xff]
        %v556 = vld [vmem:[%s253 + $0x6d0] sm:$0xff]
        %v557 = vld [vmem:[%s253 + $0x6d8] sm:$0xff]
        %v558 = vld [vmem:[%s253 + $0x6e0] sm:$0xff]
        %v559 = vld [vmem:[%s253 + $0x6e8] sm:$0xff]
        %v560 = vld [vmem:[%s253 + $0x6f0] sm:$0xff]
        %v561 = vld [vmem:[%s253 + $0x6f8] sm:$0xff]
        %v562 = vld [vmem:[%s253 + $0x700] sm:$0xff]
        %v563 = vld [vmem:[%s253 + $0x708] sm:$0xff]
        %v564 = vld [vmem:[%s253 + $0x710] sm:$0xff]
        %v565 = vld [vmem:[%s253 + $0x718] sm:$0xff]
        %v566 = vld [vmem:[%s253 + $0x720] sm:$0xff]
        %v567 = vld [vmem:[%s253 + $0x728] sm:$0xff]
        %v568 = vld [vmem:[%s253 + $0x730] sm:$0xff]
        %v569 = vld [vmem:[%s253 + $0x738] sm:$0xff]
        %v570 = vld [vmem:[%s253 + $0x740] sm:$0xff]
        %v571 = vld [vmem:[%s253 + $0x748] sm:$0xff]
        %v572 = vld [vmem:[%s253 + $0x750] sm:$0xff]
        %v573 = vld [vmem:[%s253 + $0x758] sm:$0xff]
        %v574 = vld [vmem:[%s253 + $0x760] sm:$0xff]
        %v575 = vld [vmem:[%s253 + $0x768] sm:$0xff]
        %v576 = vld [vmem:[%s253 + $0x770] sm:$0xff]
        %v577 = vld [vmem:[%s253 + $0x778] sm:$0xff]
        %v578 = vld [vmem:[%s253 + $0x780] sm:$0xff]
        %v579 = vld [vmem:[%s253 + $0x788] sm:$0xff]
        %v580 = vld [vmem:[%s253 + $0x790] sm:$0xff]
        %v581 = vld [vmem:[%s253 + $0x798] sm:$0xff]
        %v582 = vld [vmem:[%s253 + $0x7a0] sm:$0xff]
        %v583 = vld [vmem:[%s253 + $0x7a8] sm:$0xff]
        %v584 = vld [vmem:[%s253 + $0x7b0] sm:$0xff]
        %v585 = vld [vmem:[%s253 + $0x7b8] sm:$0xff]
        %v586 = vld [vmem:[%s253 + $0x7c0] sm:$0xff]
        %v587 = vld [vmem:[%s253 + $0x7c8] sm:$0xff]
        %v588 = vld [vmem:[%s253 + $0x7d0] sm:$0xff]
        %v589 = vld [vmem:[%s253 + $0x7d8] sm:$0xff]
        %v590 = vld [vmem:[%s253 + $0x7e0] sm:$0xff]
        %v591 = vld [vmem:[%s253 + $0x7e8] sm:$0xff]
        %v592 = vld [vmem:[%s253 + $0x7f0] sm:$0xff]
        %v593 = vld [vmem:[%s253 + $0x7f8] sm:$0xff]
        %v594 = vld [vmem:[%s253 + $0x800] sm:$0xff]
        %v595 = vld [vmem:[%s253 + $0x808] sm:$0xff]
        %v596 = vld [vmem:[%s253 + $0x810] sm:$0xff]
        %v597 = vld [vmem:[%s253 + $0x818] sm:$0xff]
        %v598 = vld [vmem:[%s253 + $0x820] sm:$0xff]
        %v599 = vld [vmem:[%s253 + $0x828] sm:$0xff]
        %v600 = vld [vmem:[%s253 + $0x830] sm:$0xff]
        %v601 = vld [vmem:[%s253 + $0x838] sm:$0xff]
        %v602 = vld [vmem:[%s253 + $0x840] sm:$0xff]
        %v603 = vld [vmem:[%s253 + $0x848] sm:$0xff]
        %v604 = vld [vmem:[%s253 + $0x850] sm:$0xff]
        %v605 = vld [vmem:[%s253 + $0x858] sm:$0xff]
        %v606 = vld [vmem:[%s253 + $0x860] sm:$0xff]
        %v607 = vld [vmem:[%s253 + $0x868] sm:$0xff]
        %v608 = vld [vmem:[%s253 + $0x870] sm:$0xff]
        %v609 = vld [vmem:[%s253 + $0x878] sm:$0xff]
        %v610 = vld [vmem:[%s253 + $0x880] sm:$0xff]
        %v611 = vld [vmem:[%s253 + $0x888] sm:$0xff]
        %v612 = vld [vmem:[%s253 + $0x890] sm:$0xff]
        %v613 = vld [vmem:[%s253 + $0x898] sm:$0xff]
        %v614 = vld [vmem:[%s253 + $0x8a0] sm:$0xff]
        %v615 = vld [vmem:[%s253 + $0x8a8] sm:$0xff]
        %v616 = vld [vmem:[%s253 + $0x8b0] sm:$0xff]
        %v617 = vld [vmem:[%s253 + $0x8b8] sm:$0xff]
        %v618 = vld [vmem:[%s253 + $0x8c0] sm:$0xff]
        %v619 = vld [vmem:[%s253 + $0x8c8] sm:$0xff]
        %v620 = vld [vmem:[%s253 + $0x8d0] sm:$0xff]
        %v621 = vld [vmem:[%s253 + $0x8d8] sm:$0xff]
        %v622 = vld [vmem:[%s253 + $0x8e0] sm:$0xff]
        %v623 = vld [vmem:[%s253 + $0x8e8] sm:$0xff]
        %v624 = vld [vmem:[%s253 + $0x8f0] sm:$0xff]
        %v625 = vld [vmem:[%s253 + $0x8f8] sm:$0xff]
        %v626 = vld [vmem:[%s253 + $0x900] sm:$0xff]
        %v627 = vld [vmem:[%s253 + $0x908] sm:$0xff]
        %v628 = vld [vmem:[%s253 + $0x910] sm:$0xff]
        %v629 = vld [vmem:[%s253 + $0x918] sm:$0xff]
        %v630 = vld [vmem:[%s253 + $0x920] sm:$0xff]
        %v631 = vld [vmem:[%s253 + $0x928] sm:$0xff]
        %v632 = vld [vmem:[%s253 + $0x930] sm:$0xff]
        %v633 = vld [vmem:[%s253 + $0x938] sm:$0xff]
        %v634 = vld [vmem:[%s253 + $0x940] sm:$0xff]
        %v635 = vld [vmem:[%s253 + $0x948] sm:$0xff]
        %v636 = vld [vmem:[%s253 + $0x950] sm:$0xff]
        %v637 = vld [vmem:[%s253 + $0x958] sm:$0xff]
        %v638 = vld [vmem:[%s253 + $0x960] sm:$0xff]
        %v639 = vld [vmem:[%s253 + $0x968] sm:$0xff]
        %v640 = vld [vmem:[%s253 + $0x970] sm:$0xff]
        %v641 = vld [vmem:[%s253 + $0x978] sm:$0xff]
        %v642 = vld [vmem:[%s253 + $0x980] sm:$0xff]
        %v643 = vld [vmem:[%s253 + $0x988] sm:$0xff]
        %v644 = vld [vmem:[%s253 + $0x990] sm:$0xff]
        %v645 = vld [vmem:[%s253 + $0x998] sm:$0xff]
        %v646 = vld [vmem:[%s253 + $0x9a0] sm:$0xff]
        %v647 = vld [vmem:[%s253 + $0x9a8] sm:$0xff]
        %v648 = vld [vmem:[%s253 + $0x9b0] sm:$0xff]
        %v649 = vld [vmem:[%s253 + $0x9b8] sm:$0xff]
        %v650 = vld [vmem:[%s253 + $0x9c0] sm:$0xff]
        %v651 = vld [vmem:[%s253 + $0x9c8] sm:$0xff]
        %v652 = vld [vmem:[%s253 + $0x9d0] sm:$0xff]
        %v653 = vld [vmem:[%s253 + $0x9d8] sm:$0xff]
        %v654 = vld [vmem:[%s253 + $0x9e0] sm:$0xff]
        %v655 = vld [vmem:[%s253 + $0x9e8] sm:$0xff]
        %v656 = vld [vmem:[%s253 + $0x9f0] sm:$0xff]
        %v657 = vld [vmem:[%s253 + $0x9f8] sm:$0xff]
        %v658 = vld [vmem:[%s253 + $0xa00] sm:$0xff]
        %v659 = vld [vmem:[%s253 + $0xa08] sm:$0xff]
        %v660 = vld [vmem:[%s253 + $0xa10] sm:$0xff]
        %v661 = vld [vmem:[%s253 + $0xa18] sm:$0xff]
        %v662 = vld [vmem:[%s253 + $0xa20] sm:$0xff]
        %v663 = vld [vmem:[%s253 + $0xa28] sm:$0xff]
        %v664 = vld [vmem:[%s253 + $0xa30] sm:$0xff]
        %v665 = vld [vmem:[%s253 + $0xa38] sm:$0xff]
        %v666 = vld [vmem:[%s253 + $0xa40] sm:$0xff]
        %v667 = vld [vmem:[%s253 + $0xa48] sm:$0xff]
        %v668 = vld [vmem:[%s253 + $0xa50] sm:$0xff]
        %v669 = vld [vmem:[%s253 + $0xa58] sm:$0xff]
        %v670 = vld [vmem:[%s253 + $0xa60] sm:$0xff]
        %v671 = vld [vmem:[%s253 + $0xa68] sm:$0xff]
        %v672 = vld [vmem:[%s253 + $0xa70] sm:$0xff]
        %v673 = vld [vmem:[%s253 + $0xa78] sm:$0xff]
        %v674 = vld [vmem:[%s253 + $0xa80] sm:$0xff]
        %v675 = vld [vmem:[%s253 + $0xa88] sm:$0xff]
        %v676 = vld [vmem:[%s253 + $0xa90] sm:$0xff]
        %v677 = vld [vmem:[%s253 + $0xa98] sm:$0xff]
        %v678 = vld [vmem:[%s253 + $0xaa0] sm:$0xff]
        %v679 = vld [vmem:[%s253 + $0xaa8] sm:$0xff]
        %v680 = vld [vmem:[%s253 + $0xab0] sm:$0xff]
        %v681 = vld [vmem:[%s253 + $0xab8] sm:$0xff]
        %v682 = vld [vmem:[%s253 + $0xac0] sm:$0xff]
        %v683 = vld [vmem:[%s253 + $0xac8] sm:$0xff]
        %v684 = vld [vmem:[%s253 + $0xad0] sm:$0xff]
        %v685 = vld [vmem:[%s253 + $0xad8] sm:$0xff]
        %v686 = vld [vmem:[%s253 + $0xae0] sm:$0xff]
        %v687 = vld [vmem:[%s253 + $0xae8] sm:$0xff]
        %v688 = vld [vmem:[%s253 + $0xaf0] sm:$0xff]
        %v689 = vld [vmem:[%s253 + $0xaf8] sm:$0xff]
        %v690 = vld [vmem:[%s253 + $0xb00] sm:$0xff]
        %v691 = vld [vmem:[%s253 + $0xb08] sm:$0xff]
        %v692 = vld [vmem:[%s253 + $0xb10] sm:$0xff]
        %v693 = vld [vmem:[%s253 + $0xb18] sm:$0xff]
        %v694 = vld [vmem:[%s253 + $0xb20] sm:$0xff]
        %v695 = vld [vmem:[%s253 + $0xb28] sm:$0xff]
        %v696 = vld [vmem:[%s253 + $0xb30] sm:$0xff]
        %v697 = vld [vmem:[%s253 + $0xb38] sm:$0xff]
        %v698 = vld [vmem:[%s253 + $0xb40] sm:$0xff]
        %v699 = vld [vmem:[%s253 + $0xb48] sm:$0xff]
        %v700 = vld [vmem:[%s253 + $0xb50] sm:$0xff]
        %v701 = vld [vmem:[%s253 + $0xb58] sm:$0xff]
        %v702 = vld [vmem:[%s253 + $0xb60] sm:$0xff]
        %v703 = vld [vmem:[%s253 + $0xb68] sm:$0xff]
        %v704 = vld [vmem:[%s253 + $0xb70] sm:$0xff]
        %v705 = vld [vmem:[%s253 + $0xb78] sm:$0xff]
        %v706 = vld [vmem:[%s253 + $0xb80] sm:$0xff]
        %v707 = vld [vmem:[%s253 + $0xb88] sm:$0xff]
        %v708 = vld [vmem:[%s253 + $0xb90] sm:$0xff]
        %v709 = vld [vmem:[%s253 + $0xb98] sm:$0xff]
        %v710 = vld [vmem:[%s253 + $0xba0] sm:$0xff]
        %v711 = vld [vmem:[%s253 + $0xba8] sm:$0xff]
        %v712 = vld [vmem:[%s253 + $0xbb0] sm:$0xff]
        %v713 = vld [vmem:[%s253 + $0xbb8] sm:$0xff]
        %v714 = vld [vmem:[%s253 + $0xbc0] sm:$0xff]
        %v715 = vld [vmem:[%s253 + $0xbc8] sm:$0xff]
        %v716 = vld [vmem:[%s253 + $0xbd0] sm:$0xff]
        %v717 = vld [vmem:[%s253 + $0xbd8] sm:$0xff]
        %v718 = vld [vmem:[%s253 + $0xbe0] sm:$0xff]
        %v719 = vld [vmem:[%s253 + $0xbe8] sm:$0xff]
        %v720 = vld [vmem:[%s253 + $0xbf0] sm:$0xff]
        %v721 = vld [vmem:[%s253 + $0xbf8] sm:$0xff]
        %v722 = vld [vmem:[%s253 + $0xc00] sm:$0xff]
        %v723 = vld [vmem:[%s253 + $0xc08] sm:$0xff]
        %v724 = vld [vmem:[%s253 + $0xc10] sm:$0xff]
        %v725 = vld [vmem:[%s253 + $0xc18] sm:$0xff]
        %v726 = vld [vmem:[%s253 + $0xc20] sm:$0xff]
        %v727 = vld [vmem:[%s253 + $0xc28] sm:$0xff]
        %v728 = vld [vmem:[%s253 + $0xc30] sm:$0xff]
        %v729 = vld [vmem:[%s253 + $0xc38] sm:$0xff]
        %v730 = vld [vmem:[%s253 + $0xc40] sm:$0xff]
        %v731 = vld [vmem:[%s253 + $0xc48] sm:$0xff]
        %v732 = vld [vmem:[%s253 + $0xc50] sm:$0xff]
        %v733 = vld [vmem:[%s253 + $0xc58] sm:$0xff]
        %v734 = vld [vmem:[%s253 + $0xc60] sm:$0xff]
        %v735 = vld [vmem:[%s253 + $0xc68] sm:$0xff]
        %v736 = vld [vmem:[%s253 + $0xc70] sm:$0xff]
        %v737 = vld [vmem:[%s253 + $0xc78] sm:$0xff]
        %v738 = vld [vmem:[%s253 + $0xc80] sm:$0xff]
        %v739 = vld [vmem:[%s253 + $0xc88] sm:$0xff]
        %v740 = vld [vmem:[%s253 + $0xc90] sm:$0xff]
        %v741 = vld [vmem:[%s253 + $0xc98] sm:$0xff]
        %v742 = vld [vmem:[%s253 + $0xca0] sm:$0xff]
        %v743 = vld [vmem:[%s253 + $0xca8] sm:$0xff]
        %v744 = vld [vmem:[%s253 + $0xcb0] sm:$0xff]
        %v745 = vld [vmem:[%s253 + $0xcb8] sm:$0xff]
        %v746 = vld [vmem:[%s253 + $0xcc0] sm:$0xff]
        %v747 = vld [vmem:[%s253 + $0xcc8] sm:$0xff]
        %v748 = vld [vmem:[%s253 + $0xcd0] sm:$0xff]
        %v749 = vld [vmem:[%s253 + $0xcd8] sm:$0xff]
        %v750 = vld [vmem:[%s253 + $0xce0] sm:$0xff]
        %v751 = vld [vmem:[%s253 + $0xce8] sm:$0xff]
        %v752 = vld [vmem:[%s253 + $0xcf0] sm:$0xff]
        %v753 = vld [vmem:[%s253 + $0xcf8] sm:$0xff]
        %v754 = vld [vmem:[%s253 + $0xd00] sm:$0xff]
        %v755 = vld [vmem:[%s253 + $0xd08] sm:$0xff]
        %v756 = vld [vmem:[%s253 + $0xd10] sm:$0xff]
        %v757 = vld [vmem:[%s253 + $0xd18] sm:$0xff]
        %v758 = vld [vmem:[%s253 + $0xd20] sm:$0xff]
        %v759 = vld [vmem:[%s253 + $0xd28] sm:$0xff]
        %v760 = vld [vmem:[%s253 + $0xd30] sm:$0xff]
        %v761 = vld [vmem:[%s253 + $0xd38] sm:$0xff]
        %v762 = vld [vmem:[%s253 + $0xd40] sm:$0xff]
        %v763 = vld [vmem:[%s253 + $0xd48] sm:$0xff]
        %v764 = vld [vmem:[%s253 + $0xd50] sm:$0xff]
        %v765 = vld [vmem:[%s253 + $0xd58] sm:$0xff]
        %v766 = vld [vmem:[%s253 + $0xd60] sm:$0xff]
        %v767 = vld [vmem:[%s253 + $0xd68] sm:$0xff]
        %v768 = vld [vmem:[%s253 + $0xd70] sm:$0xff]
        %v769 = vld [vmem:[%s253 + $0xd78] sm:$0xff]
        %v770 = vld [vmem:[%s253 + $0xd80] sm:$0xff]
        %v771 = vld [vmem:[%s253 + $0xd88] sm:$0xff]
        %v772 = vld [vmem:[%s253 + $0xd90] sm:$0xff]
        %v773 = vld [vmem:[%s253 + $0xd98] sm:$0xff]
        %v774 = vld [vmem:[%s253 + $0xda0] sm:$0xff]
        %v775 = vld [vmem:[%s253 + $0xda8] sm:$0xff]
        %v776 = vld [vmem:[%s253 + $0xdb0] sm:$0xff]
        %v777 = vld [vmem:[%s253 + $0xdb8] sm:$0xff]
        %v778 = vld [vmem:[%s253 + $0xdc0] sm:$0xff]
        %v779 = vld [vmem:[%s253 + $0xdc8] sm:$0xff]
        %v780 = vld [vmem:[%s253 + $0xdd0] sm:$0xff]
        %v781 = vld [vmem:[%s253 + $0xdd8] sm:$0xff]
        %v782 = vld [vmem:[%s253 + $0xde0] sm:$0xff]
        %v783 = vld [vmem:[%s253 + $0xde8] sm:$0xff]
        %v784 = vld [vmem:[%s253 + $0xdf0] sm:$0xff]
        %v785 = vld [vmem:[%s253 + $0xdf8] sm:$0xff]
        %v786 = vld [vmem:[%s253 + $0xe00] sm:$0xff]
        %v787 = vld [vmem:[%s253 + $0xe08] sm:$0xff]
        %v788 = vld [vmem:[%s253 + $0xe10] sm:$0xff]
        %v789 = vld [vmem:[%s253 + $0xe18] sm:$0xff]
        %v790 = vld [vmem:[%s253 + $0xe20] sm:$0xff]
        %v791 = vld [vmem:[%s253 + $0xe28] sm:$0xff]
        %v792 = vld [vmem:[%s253 + $0xe30] sm:$0xff]
        %v793 = vld [vmem:[%s253 + $0xe38] sm:$0xff]
        %v794 = vld [vmem:[%s253 + $0xe40] sm:$0xff]
        %v795 = vld [vmem:[%s253 + $0xe48] sm:$0xff]
        %v796 = vld [vmem:[%s253 + $0xe50] sm:$0xff]
        %v797 = vld [vmem:[%s253 + $0xe58] sm:$0xff]
        %v798 = vld [vmem:[%s253 + $0xe60] sm:$0xff]
        %v799 = vld [vmem:[%s253 + $0xe68] sm:$0xff]
        %v800 = vld [vmem:[%s253 + $0xe70] sm:$0xff]
        %v801 = vld [vmem:[%s253 + $0xe78] sm:$0xff]
        %v802 = vld [vmem:[%s253 + $0xe80] sm:$0xff]
        %v803 = vld [vmem:[%s253 + $0xe88] sm:$0xff]
        %v804 = vld [vmem:[%s253 + $0xe90] sm:$0xff]
        %v805 = vld [vmem:[%s253 + $0xe98] sm:$0xff]
        %v806 = vld [vmem:[%s253 + $0xea0] sm:$0xff]
        %v807 = vld [vmem:[%s253 + $0xea8] sm:$0xff]
        %v808 = vld [vmem:[%s253 + $0xeb0] sm:$0xff]
        %v809 = vld [vmem:[%s253 + $0xeb8] sm:$0xff]
        %v810 = vld [vmem:[%s253 + $0xec0] sm:$0xff]
        %v811 = vld [vmem:[%s253 + $0xec8] sm:$0xff]
        %v812 = vld [vmem:[%s253 + $0xed0] sm:$0xff]
        %v813 = vld [vmem:[%s253 + $0xed8] sm:$0xff]
        %v814 = vld [vmem:[%s253 + $0xee0] sm:$0xff]
        %v815 = vld [vmem:[%s253 + $0xee8] sm:$0xff]
        %v816 = vld [vmem:[%s253 + $0xef0] sm:$0xff]
        %v817 = vld [vmem:[%s253 + $0xef8] sm:$0xff]
        %v818 = vld [vmem:[%s253 + $0xf00] sm:$0xff]
        %v819 = vld [vmem:[%s253 + $0xf08] sm:$0xff]
        %v820 = vld [vmem:[%s253 + $0xf10] sm:$0xff]
        %v821 = vld [vmem:[%s253 + $0xf18] sm:$0xff]
        %v822 = vld [vmem:[%s253 + $0xf20] sm:$0xff]
        %v823 = vld [vmem:[%s253 + $0xf28] sm:$0xff]
        %v824 = vld [vmem:[%s253 + $0xf30] sm:$0xff]
        %v825 = vld [vmem:[%s253 + $0xf38] sm:$0xff]
        %v826 = vld [vmem:[%s253 + $0xf40] sm:$0xff]
        %v827 = vld [vmem:[%s253 + $0xf48] sm:$0xff]
        %v828 = vld [vmem:[%s253 + $0xf50] sm:$0xff]
        %v829 = vld [vmem:[%s253 + $0xf58] sm:$0xff]
        %v830 = vld [vmem:[%s253 + $0xf60] sm:$0xff]
        %v831 = vld [vmem:[%s253 + $0xf68] sm:$0xff]
        %v832 = vld [vmem:[%s253 + $0xf70] sm:$0xff]
        %v833 = vld [vmem:[%s253 + $0xf78] sm:$0xff]
        %v834 = vld [vmem:[%s253 + $0xf80] sm:$0xff]
        %v835 = vld [vmem:[%s253 + $0xf88] sm:$0xff]
        %v836 = vld [vmem:[%s253 + $0xf90] sm:$0xff]
        %v837 = vld [vmem:[%s253 + $0xf98] sm:$0xff]
        %v838 = vld [vmem:[%s253 + $0xfa0] sm:$0xff]
        %v839 = vld [vmem:[%s253 + $0xfa8] sm:$0xff]
        %v840 = vld [vmem:[%s253 + $0xfb0] sm:$0xff]
        %v841 = vld [vmem:[%s253 + $0xfb8] sm:$0xff]
        %v842 = vld [vmem:[%s253 + $0xfc0] sm:$0xff]
        %v843 = vld [vmem:[%s253 + $0xfc8] sm:$0xff]
        %v844 = vld [vmem:[%s253 + $0xfd0] sm:$0xff]
        %v845 = vld [vmem:[%s253 + $0xfd8] sm:$0xff]
        %v846 = vld [vmem:[%s253 + $0xfe0] sm:$0xff]
        %v847 = vld [vmem:[%s253 + $0xfe8] sm:$0xff]
        %v848 = vld [vmem:[%s253 + $0xff0] sm:$0xff]
        %v849 = vld [vmem:[%s253 + $0xff8] sm:$0xff]
        %v866 = vunpack.c.l.b16 %v322
        %v867 = vunpack.c.h.b16 %v322
        %v868 = vunpack.c.l.b16 %v323
        %v869 = vunpack.c.h.b16 %v323
        %v870 = vunpack.c.l.b16 %v324
        %v871 = vunpack.c.h.b16 %v324
        %v872 = vunpack.c.l.b16 %v325
        %v873 = vunpack.c.h.b16 %v325
        %v874 = vunpack.c.l.b16 %v326
        %v875 = vunpack.c.h.b16 %v326
        %v876 = vunpack.c.l.b16 %v327
        %v877 = vunpack.c.h.b16 %v327
        %v878 = vunpack.c.l.b16 %v328
        %v879 = vunpack.c.h.b16 %v328
        %v880 = vunpack.c.l.b16 %v329
        %v881 = vunpack.c.h.b16 %v329
        %v882 = vunpack.c.l.b16 %v330
        %v883 = vunpack.c.h.b16 %v330
        %v884 = vunpack.c.l.b16 %v331
        %v885 = vunpack.c.h.b16 %v331
        %v886 = vunpack.c.l.b16 %v332
        %v887 = vunpack.c.h.b16 %v332
        %v888 = vunpack.c.l.b16 %v333
        %v889 = vunpack.c.h.b16 %v333
        %v890 = vunpack.c.l.b16 %v334
        %v891 = vunpack.c.h.b16 %v334
        %v892 = vunpack.c.l.b16 %v335
        %v893 = vunpack.c.h.b16 %v335
        %v894 = vunpack.c.l.b16 %v336
        %v895 = vunpack.c.h.b16 %v336
        %v896 = vunpack.c.l.b16 %v337
        %v897 = vunpack.c.h.b16 %v337
        %v898 = vpack.c.b16 %v882, %v866
        %v899 = vpack.c.b16 %v883, %v867
        %v900 = vpack.c.b16 %v884, %v868
        %v901 = vpack.c.b16 %v885, %v869
        %v902 = vpack.c.b16 %v886, %v870
        %v903 = vpack.c.b16 %v887, %v871
        %v904 = vpack.c.b16 %v888, %v872
        %v905 = vpack.c.b16 %v889, %v873
        %v906 = vpack.c.b16 %v890, %v874
        %v907 = vpack.c.b16 %v891, %v875
        %v908 = vpack.c.b16 %v892, %v876
        %v909 = vpack.c.b16 %v893, %v877
        %v910 = vpack.c.b16 %v894, %v878
        %v911 = vpack.c.b16 %v895, %v879
        %v912 = vpack.c.b16 %v896, %v880
        %v913 = vpack.c.b16 %v897, %v881
        %v1442 = vunpack.c.l.b16 %v338
        %v1443 = vunpack.c.h.b16 %v338
        %v1444 = vunpack.c.l.b16 %v339
        %v1445 = vunpack.c.h.b16 %v339
        %v1446 = vunpack.c.l.b16 %v340
        %v1447 = vunpack.c.h.b16 %v340
        %v1448 = vunpack.c.l.b16 %v341
        %v1449 = vunpack.c.h.b16 %v341
        %v1450 = vunpack.c.l.b16 %v342
        %v1451 = vunpack.c.h.b16 %v342
        %v1452 = vunpack.c.l.b16 %v343
        %v1453 = vunpack.c.h.b16 %v343
        %v1454 = vunpack.c.l.b16 %v344
        %v1455 = vunpack.c.h.b16 %v344
        %v1456 = vunpack.c.l.b16 %v345
        %v1457 = vunpack.c.h.b16 %v345
        %v1458 = vunpack.c.l.b16 %v346
        %v1459 = vunpack.c.h.b16 %v346
        %v1460 = vunpack.c.l.b16 %v347
        %v1461 = vunpack.c.h.b16 %v347
        %v1462 = vunpack.c.l.b16 %v348
        %v1463 = vunpack.c.h.b16 %v348
        %v1464 = vunpack.c.l.b16 %v349
        %v1465 = vunpack.c.h.b16 %v349
        %v1466 = vunpack.c.l.b16 %v350
        %v1467 = vunpack.c.h.b16 %v350
        %v1468 = vunpack.c.l.b16 %v351
        %v1469 = vunpack.c.h.b16 %v351
        %v1470 = vunpack.c.l.b16 %v352
        %v1471 = vunpack.c.h.b16 %v352
        %v1472 = vunpack.c.l.b16 %v353
        %v1473 = vunpack.c.h.b16 %v353
        %v1474 = vunpack.c.l.b16 %v354
        %v1475 = vunpack.c.h.b16 %v354
        %v1476 = vunpack.c.l.b16 %v355
        %v1477 = vunpack.c.h.b16 %v355
        %v1478 = vunpack.c.l.b16 %v356
        %v1479 = vunpack.c.h.b16 %v356
        %v1480 = vunpack.c.l.b16 %v357
        %v1481 = vunpack.c.h.b16 %v357
        %v1482 = vunpack.c.l.b16 %v358
        %v1483 = vunpack.c.h.b16 %v358
        %v1484 = vunpack.c.l.b16 %v359
        %v1485 = vunpack.c.h.b16 %v359
        %v1486 = vunpack.c.l.b16 %v360
        %v1487 = vunpack.c.h.b16 %v360
        %v1488 = vunpack.c.l.b16 %v361
        %v1489 = vunpack.c.h.b16 %v361
        %v1490 = vunpack.c.l.b16 %v362
        %v1491 = vunpack.c.h.b16 %v362
        %v1492 = vunpack.c.l.b16 %v363
        %v1493 = vunpack.c.h.b16 %v363
        %v1494 = vunpack.c.l.b16 %v364
        %v1495 = vunpack.c.h.b16 %v364
        %v1496 = vunpack.c.l.b16 %v365
        %v1497 = vunpack.c.h.b16 %v365
        %v1498 = vunpack.c.l.b16 %v366
        %v1499 = vunpack.c.h.b16 %v366
        %v1500 = vunpack.c.l.b16 %v367
        %v1501 = vunpack.c.h.b16 %v367
        %v1502 = vunpack.c.l.b16 %v368
        %v1503 = vunpack.c.h.b16 %v368
        %v1504 = vunpack.c.l.b16 %v369
        %v1505 = vunpack.c.h.b16 %v369
        %v1506 = vunpack.c.l.b16 %v370
        %v1507 = vunpack.c.h.b16 %v370
        %v1508 = vunpack.c.l.b16 %v371
        %v1509 = vunpack.c.h.b16 %v371
        %v1510 = vunpack.c.l.b16 %v372
        %v1511 = vunpack.c.h.b16 %v372
        %v1512 = vunpack.c.l.b16 %v373
        %v1513 = vunpack.c.h.b16 %v373
        %v1514 = vunpack.c.l.b16 %v374
        %v1515 = vunpack.c.h.b16 %v374
        %v1516 = vunpack.c.l.b16 %v375
        %v1517 = vunpack.c.h.b16 %v375
        %v1518 = vunpack.c.l.b16 %v376
        %v1519 = vunpack.c.h.b16 %v376
        %v1520 = vunpack.c.l.b16 %v377
        %v1521 = vunpack.c.h.b16 %v377
        %v1522 = vunpack.c.l.b16 %v378
        %v1523 = vunpack.c.h.b16 %v378
        %v1524 = vunpack.c.l.b16 %v379
        %v1525 = vunpack.c.h.b16 %v379
        %v1526 = vunpack.c.l.b16 %v380
        %v1527 = vunpack.c.h.b16 %v380
        %v1528 = vunpack.c.l.b16 %v381
        %v1529 = vunpack.c.h.b16 %v381
        %v1530 = vunpack.c.l.b16 %v382
        %v1531 = vunpack.c.h.b16 %v382
        %v1532 = vunpack.c.l.b16 %v383
        %v1533 = vunpack.c.h.b16 %v383
        %v1534 = vunpack.c.l.b16 %v384
        %v1535 = vunpack.c.h.b16 %v384
        %v1536 = vunpack.c.l.b16 %v385
        %v1537 = vunpack.c.h.b16 %v385
        %v1538 = vunpack.c.l.b16 %v386
        %v1539 = vunpack.c.h.b16 %v386
        %v1540 = vunpack.c.l.b16 %v387
        %v1541 = vunpack.c.h.b16 %v387
        %v1542 = vunpack.c.l.b16 %v388
        %v1543 = vunpack.c.h.b16 %v388
        %v1544 = vunpack.c.l.b16 %v389
        %v1545 = vunpack.c.h.b16 %v389
        %v1546 = vunpack.c.l.b16 %v390
        %v1547 = vunpack.c.h.b16 %v390
        %v1548 = vunpack.c.l.b16 %v391
        %v1549 = vunpack.c.h.b16 %v391
        %v1550 = vunpack.c.l.b16 %v392
        %v1551 = vunpack.c.h.b16 %v392
        %v1552 = vunpack.c.l.b16 %v393
        %v1553 = vunpack.c.h.b16 %v393
        %v1554 = vunpack.c.l.b16 %v394
        %v1555 = vunpack.c.h.b16 %v394
        %v1556 = vunpack.c.l.b16 %v395
        %v1557 = vunpack.c.h.b16 %v395
        %v1558 = vunpack.c.l.b16 %v396
        %v1559 = vunpack.c.h.b16 %v396
        %v1560 = vunpack.c.l.b16 %v397
        %v1561 = vunpack.c.h.b16 %v397
        %v1562 = vunpack.c.l.b16 %v398
        %v1563 = vunpack.c.h.b16 %v398
        %v1564 = vunpack.c.l.b16 %v399
        %v1565 = vunpack.c.h.b16 %v399
        %v1566 = vunpack.c.l.b16 %v400
        %v1567 = vunpack.c.h.b16 %v400
        %v1568 = vunpack.c.l.b16 %v401
        %v1569 = vunpack.c.h.b16 %v401
        %v1570 = vunpack.c.l.b16 %v402
        %v1571 = vunpack.c.h.b16 %v402
        %v1572 = vunpack.c.l.b16 %v403
        %v1573 = vunpack.c.h.b16 %v403
        %v1574 = vunpack.c.l.b16 %v404
        %v1575 = vunpack.c.h.b16 %v404
        %v1576 = vunpack.c.l.b16 %v405
        %v1577 = vunpack.c.h.b16 %v405
        %v1578 = vunpack.c.l.b16 %v406
        %v1579 = vunpack.c.h.b16 %v406
        %v1580 = vunpack.c.l.b16 %v407
        %v1581 = vunpack.c.h.b16 %v407
        %v1582 = vunpack.c.l.b16 %v408
        %v1583 = vunpack.c.h.b16 %v408
        %v1584 = vunpack.c.l.b16 %v409
        %v1585 = vunpack.c.h.b16 %v409
        %v1586 = vunpack.c.l.b16 %v410
        %v1587 = vunpack.c.h.b16 %v410
        %v1588 = vunpack.c.l.b16 %v411
        %v1589 = vunpack.c.h.b16 %v411
        %v1590 = vunpack.c.l.b16 %v412
        %v1591 = vunpack.c.h.b16 %v412
        %v1592 = vunpack.c.l.b16 %v413
        %v1593 = vunpack.c.h.b16 %v413
        %v1594 = vunpack.c.l.b16 %v414
        %v1595 = vunpack.c.h.b16 %v414
        %v1596 = vunpack.c.l.b16 %v415
        %v1597 = vunpack.c.h.b16 %v415
        %v1598 = vunpack.c.l.b16 %v416
        %v1599 = vunpack.c.h.b16 %v416
        %v1600 = vunpack.c.l.b16 %v417
        %v1601 = vunpack.c.h.b16 %v417
        %v1602 = vunpack.c.l.b16 %v418
        %v1603 = vunpack.c.h.b16 %v418
        %v1604 = vunpack.c.l.b16 %v419
        %v1605 = vunpack.c.h.b16 %v419
        %v1606 = vunpack.c.l.b16 %v420
        %v1607 = vunpack.c.h.b16 %v420
        %v1608 = vunpack.c.l.b16 %v421
        %v1609 = vunpack.c.h.b16 %v421
        %v1610 = vunpack.c.l.b16 %v422
        %v1611 = vunpack.c.h.b16 %v422
        %v1612 = vunpack.c.l.b16 %v423
        %v1613 = vunpack.c.h.b16 %v423
        %v1614 = vunpack.c.l.b16 %v424
        %v1615 = vunpack.c.h.b16 %v424
        %v1616 = vunpack.c.l.b16 %v425
        %v1617 = vunpack.c.h.b16 %v425
        %v1618 = vunpack.c.l.b16 %v426
        %v1619 = vunpack.c.h.b16 %v426
        %v1620 = vunpack.c.l.b16 %v427
        %v1621 = vunpack.c.h.b16 %v427
        %v1622 = vunpack.c.l.b16 %v428
        %v1623 = vunpack.c.h.b16 %v428
        %v1624 = vunpack.c.l.b16 %v429
        %v1625 = vunpack.c.h.b16 %v429
        %v1626 = vunpack.c.l.b16 %v430
        %v1627 = vunpack.c.h.b16 %v430
        %v1628 = vunpack.c.l.b16 %v431
        %v1629 = vunpack.c.h.b16 %v431
        %v1630 = vunpack.c.l.b16 %v432
        %v1631 = vunpack.c.h.b16 %v432
        %v1632 = vunpack.c.l.b16 %v433
        %v1633 = vunpack.c.h.b16 %v433
        %v1634 = vunpack.c.l.b16 %v434
        %v1635 = vunpack.c.h.b16 %v434
        %v1636 = vunpack.c.l.b16 %v435
        %v1637 = vunpack.c.h.b16 %v435
        %v1638 = vunpack.c.l.b16 %v436
        %v1639 = vunpack.c.h.b16 %v436
        %v1640 = vunpack.c.l.b16 %v437
        %v1641 = vunpack.c.h.b16 %v437
        %v1642 = vunpack.c.l.b16 %v438
        %v1643 = vunpack.c.h.b16 %v438
        %v1644 = vunpack.c.l.b16 %v439
        %v1645 = vunpack.c.h.b16 %v439
        %v1646 = vunpack.c.l.b16 %v440
        %v1647 = vunpack.c.h.b16 %v440
        %v1648 = vunpack.c.l.b16 %v441
        %v1649 = vunpack.c.h.b16 %v441
        %v1650 = vunpack.c.l.b16 %v442
        %v1651 = vunpack.c.h.b16 %v442
        %v1652 = vunpack.c.l.b16 %v443
        %v1653 = vunpack.c.h.b16 %v443
        %v1654 = vunpack.c.l.b16 %v444
        %v1655 = vunpack.c.h.b16 %v444
        %v1656 = vunpack.c.l.b16 %v445
        %v1657 = vunpack.c.h.b16 %v445
        %v1658 = vunpack.c.l.b16 %v446
        %v1659 = vunpack.c.h.b16 %v446
        %v1660 = vunpack.c.l.b16 %v447
        %v1661 = vunpack.c.h.b16 %v447
        %v1662 = vunpack.c.l.b16 %v448
        %v1663 = vunpack.c.h.b16 %v448
        %v1664 = vunpack.c.l.b16 %v449
        %v1665 = vunpack.c.h.b16 %v449
        %v1666 = vunpack.c.l.b16 %v450
        %v1667 = vunpack.c.h.b16 %v450
        %v1668 = vunpack.c.l.b16 %v451
        %v1669 = vunpack.c.h.b16 %v451
        %v1670 = vunpack.c.l.b16 %v452
        %v1671 = vunpack.c.h.b16 %v452
        %v1672 = vunpack.c.l.b16 %v453
        %v1673 = vunpack.c.h.b16 %v453
        %v1674 = vunpack.c.l.b16 %v454
        %v1675 = vunpack.c.h.b16 %v454
        %v1676 = vunpack.c.l.b16 %v455
        %v1677 = vunpack.c.h.b16 %v455
        %v1678 = vunpack.c.l.b16 %v456
        %v1679 = vunpack.c.h.b16 %v456
        %v1680 = vunpack.c.l.b16 %v457
        %v1681 = vunpack.c.h.b16 %v457
        %v1682 = vunpack.c.l.b16 %v458
        %v1683 = vunpack.c.h.b16 %v458
        %v1684 = vunpack.c.l.b16 %v459
        %v1685 = vunpack.c.h.b16 %v459
        %v1686 = vunpack.c.l.b16 %v460
        %v1687 = vunpack.c.h.b16 %v460
        %v1688 = vunpack.c.l.b16 %v461
        %v1689 = vunpack.c.h.b16 %v461
        %v1690 = vunpack.c.l.b16 %v462
        %v1691 = vunpack.c.h.b16 %v462
        %v1692 = vunpack.c.l.b16 %v463
        %v1693 = vunpack.c.h.b16 %v463
        %v1694 = vunpack.c.l.b16 %v464
        %v1695 = vunpack.c.h.b16 %v464
        %v1696 = vunpack.c.l.b16 %v465
        %v1697 = vunpack.c.h.b16 %v465
        %v1698 = vunpack.c.l.b16 %v466
        %v1699 = vunpack.c.h.b16 %v466
        %v1700 = vunpack.c.l.b16 %v467
        %v1701 = vunpack.c.h.b16 %v467
        %v1702 = vunpack.c.l.b16 %v468
        %v1703 = vunpack.c.h.b16 %v468
        %v1704 = vunpack.c.l.b16 %v469
        %v1705 = vunpack.c.h.b16 %v469
        %v1706 = vunpack.c.l.b16 %v470
        %v1707 = vunpack.c.h.b16 %v470
        %v1708 = vunpack.c.l.b16 %v471
        %v1709 = vunpack.c.h.b16 %v471
        %v1710 = vunpack.c.l.b16 %v472
        %v1711 = vunpack.c.h.b16 %v472
        %v1712 = vunpack.c.l.b16 %v473
        %v1713 = vunpack.c.h.b16 %v473
        %v1714 = vunpack.c.l.b16 %v474
        %v1715 = vunpack.c.h.b16 %v474
        %v1716 = vunpack.c.l.b16 %v475
        %v1717 = vunpack.c.h.b16 %v475
        %v1718 = vunpack.c.l.b16 %v476
        %v1719 = vunpack.c.h.b16 %v476
        %v1720 = vunpack.c.l.b16 %v477
        %v1721 = vunpack.c.h.b16 %v477
        %v1722 = vunpack.c.l.b16 %v478
        %v1723 = vunpack.c.h.b16 %v478
        %v1724 = vunpack.c.l.b16 %v479
        %v1725 = vunpack.c.h.b16 %v479
        %v1726 = vunpack.c.l.b16 %v480
        %v1727 = vunpack.c.h.b16 %v480
        %v1728 = vunpack.c.l.b16 %v481
        %v1729 = vunpack.c.h.b16 %v481
        %v1730 = vunpack.c.l.b16 %v482
        %v1731 = vunpack.c.h.b16 %v482
        %v1732 = vunpack.c.l.b16 %v483
        %v1733 = vunpack.c.h.b16 %v483
        %v1734 = vunpack.c.l.b16 %v484
        %v1735 = vunpack.c.h.b16 %v484
        %v1736 = vunpack.c.l.b16 %v485
        %v1737 = vunpack.c.h.b16 %v485
        %v1738 = vunpack.c.l.b16 %v486
        %v1739 = vunpack.c.h.b16 %v486
        %v1740 = vunpack.c.l.b16 %v487
        %v1741 = vunpack.c.h.b16 %v487
        %v1742 = vunpack.c.l.b16 %v488
        %v1743 = vunpack.c.h.b16 %v488
        %v1744 = vunpack.c.l.b16 %v489
        %v1745 = vunpack.c.h.b16 %v489
        %v1746 = vunpack.c.l.b16 %v490
        %v1747 = vunpack.c.h.b16 %v490
        %v1748 = vunpack.c.l.b16 %v491
        %v1749 = vunpack.c.h.b16 %v491
        %v1750 = vunpack.c.l.b16 %v492
        %v1751 = vunpack.c.h.b16 %v492
        %v1752 = vunpack.c.l.b16 %v493
        %v1753 = vunpack.c.h.b16 %v493
        %v1754 = vunpack.c.l.b16 %v494
        %v1755 = vunpack.c.h.b16 %v494
        %v1756 = vunpack.c.l.b16 %v495
        %v1757 = vunpack.c.h.b16 %v495
        %v1758 = vunpack.c.l.b16 %v496
        %v1759 = vunpack.c.h.b16 %v496
        %v1760 = vunpack.c.l.b16 %v497
        %v1761 = vunpack.c.h.b16 %v497
        %v1762 = vunpack.c.l.b16 %v498
        %v1763 = vunpack.c.h.b16 %v498
        %v1764 = vunpack.c.l.b16 %v499
        %v1765 = vunpack.c.h.b16 %v499
        %v1766 = vunpack.c.l.b16 %v500
        %v1767 = vunpack.c.h.b16 %v500
        %v1768 = vunpack.c.l.b16 %v501
        %v1769 = vunpack.c.h.b16 %v501
        %v1770 = vunpack.c.l.b16 %v502
        %v1771 = vunpack.c.h.b16 %v502
        %v1772 = vunpack.c.l.b16 %v503
        %v1773 = vunpack.c.h.b16 %v503
        %v1774 = vunpack.c.l.b16 %v504
        %v1775 = vunpack.c.h.b16 %v504
        %v1776 = vunpack.c.l.b16 %v505
        %v1777 = vunpack.c.h.b16 %v505
        %v1778 = vunpack.c.l.b16 %v506
        %v1779 = vunpack.c.h.b16 %v506
        %v1780 = vunpack.c.l.b16 %v507
        %v1781 = vunpack.c.h.b16 %v507
        %v1782 = vunpack.c.l.b16 %v508
        %v1783 = vunpack.c.h.b16 %v508
        %v1784 = vunpack.c.l.b16 %v509
        %v1785 = vunpack.c.h.b16 %v509
        %v1786 = vunpack.c.l.b16 %v510
        %v1787 = vunpack.c.h.b16 %v510
        %v1788 = vunpack.c.l.b16 %v511
        %v1789 = vunpack.c.h.b16 %v511
        %v1790 = vunpack.c.l.b16 %v512
        %v1791 = vunpack.c.h.b16 %v512
        %v1792 = vunpack.c.l.b16 %v513
        %v1793 = vunpack.c.h.b16 %v513
        %v1794 = vunpack.c.l.b16 %v514
        %v1795 = vunpack.c.h.b16 %v514
        %v1796 = vunpack.c.l.b16 %v515
        %v1797 = vunpack.c.h.b16 %v515
        %v1798 = vunpack.c.l.b16 %v516
        %v1799 = vunpack.c.h.b16 %v516
        %v1800 = vunpack.c.l.b16 %v517
        %v1801 = vunpack.c.h.b16 %v517
        %v1802 = vunpack.c.l.b16 %v518
        %v1803 = vunpack.c.h.b16 %v518
        %v1804 = vunpack.c.l.b16 %v519
        %v1805 = vunpack.c.h.b16 %v519
        %v1806 = vunpack.c.l.b16 %v520
        %v1807 = vunpack.c.h.b16 %v520
        %v1808 = vunpack.c.l.b16 %v521
        %v1809 = vunpack.c.h.b16 %v521
        %v1810 = vunpack.c.l.b16 %v522
        %v1811 = vunpack.c.h.b16 %v522
        %v1812 = vunpack.c.l.b16 %v523
        %v1813 = vunpack.c.h.b16 %v523
        %v1814 = vunpack.c.l.b16 %v524
        %v1815 = vunpack.c.h.b16 %v524
        %v1816 = vunpack.c.l.b16 %v525
        %v1817 = vunpack.c.h.b16 %v525
        %v1818 = vunpack.c.l.b16 %v526
        %v1819 = vunpack.c.h.b16 %v526
        %v1820 = vunpack.c.l.b16 %v527
        %v1821 = vunpack.c.h.b16 %v527
        %v1822 = vunpack.c.l.b16 %v528
        %v1823 = vunpack.c.h.b16 %v528
        %v1824 = vunpack.c.l.b16 %v529
        %v1825 = vunpack.c.h.b16 %v529
        %v1826 = vunpack.c.l.b16 %v530
        %v1827 = vunpack.c.h.b16 %v530
        %v1828 = vunpack.c.l.b16 %v531
        %v1829 = vunpack.c.h.b16 %v531
        %v1830 = vunpack.c.l.b16 %v532
        %v1831 = vunpack.c.h.b16 %v532
        %v1832 = vunpack.c.l.b16 %v533
        %v1833 = vunpack.c.h.b16 %v533
        %v1834 = vunpack.c.l.b16 %v534
        %v1835 = vunpack.c.h.b16 %v534
        %v1836 = vunpack.c.l.b16 %v535
        %v1837 = vunpack.c.h.b16 %v535
        %v1838 = vunpack.c.l.b16 %v536
        %v1839 = vunpack.c.h.b16 %v536
        %v1840 = vunpack.c.l.b16 %v537
        %v1841 = vunpack.c.h.b16 %v537
        %v1842 = vunpack.c.l.b16 %v538
        %v1843 = vunpack.c.h.b16 %v538
        %v1844 = vunpack.c.l.b16 %v539
        %v1845 = vunpack.c.h.b16 %v539
        %v1846 = vunpack.c.l.b16 %v540
        %v1847 = vunpack.c.h.b16 %v540
        %v1848 = vunpack.c.l.b16 %v541
        %v1849 = vunpack.c.h.b16 %v541
        %v1850 = vunpack.c.l.b16 %v542
        %v1851 = vunpack.c.h.b16 %v542
        %v1852 = vunpack.c.l.b16 %v543
        %v1853 = vunpack.c.h.b16 %v543
        %v1854 = vunpack.c.l.b16 %v544
        %v1855 = vunpack.c.h.b16 %v544
        %v1856 = vunpack.c.l.b16 %v545
        %v1857 = vunpack.c.h.b16 %v545
        %v1858 = vunpack.c.l.b16 %v546
        %v1859 = vunpack.c.h.b16 %v546
        %v1860 = vunpack.c.l.b16 %v547
        %v1861 = vunpack.c.h.b16 %v547
        %v1862 = vunpack.c.l.b16 %v548
        %v1863 = vunpack.c.h.b16 %v548
        %v1864 = vunpack.c.l.b16 %v549
        %v1865 = vunpack.c.h.b16 %v549
        %v1866 = vunpack.c.l.b16 %v550
        %v1867 = vunpack.c.h.b16 %v550
        %v1868 = vunpack.c.l.b16 %v551
        %v1869 = vunpack.c.h.b16 %v551
        %v1870 = vunpack.c.l.b16 %v552
        %v1871 = vunpack.c.h.b16 %v552
        %v1872 = vunpack.c.l.b16 %v553
        %v1873 = vunpack.c.h.b16 %v553
        %v1874 = vunpack.c.l.b16 %v554
        %v1875 = vunpack.c.h.b16 %v554
        %v1876 = vunpack.c.l.b16 %v555
        %v1877 = vunpack.c.h.b16 %v555
        %v1878 = vunpack.c.l.b16 %v556
        %v1879 = vunpack.c.h.b16 %v556
        %v1880 = vunpack.c.l.b16 %v557
        %v1881 = vunpack.c.h.b16 %v557
        %v1882 = vunpack.c.l.b16 %v558
        %v1883 = vunpack.c.h.b16 %v558
        %v1884 = vunpack.c.l.b16 %v559
        %v1885 = vunpack.c.h.b16 %v559
        %v1886 = vunpack.c.l.b16 %v560
        %v1887 = vunpack.c.h.b16 %v560
        %v1888 = vunpack.c.l.b16 %v561
        %v1889 = vunpack.c.h.b16 %v561
        %v1890 = vunpack.c.l.b16 %v562
        %v1891 = vunpack.c.h.b16 %v562
        %v1892 = vunpack.c.l.b16 %v563
        %v1893 = vunpack.c.h.b16 %v563
        %v1894 = vunpack.c.l.b16 %v564
        %v1895 = vunpack.c.h.b16 %v564
        %v1896 = vunpack.c.l.b16 %v565
        %v1897 = vunpack.c.h.b16 %v565
        %v1898 = vunpack.c.l.b16 %v566
        %v1899 = vunpack.c.h.b16 %v566
        %v1900 = vunpack.c.l.b16 %v567
        %v1901 = vunpack.c.h.b16 %v567
        %v1902 = vunpack.c.l.b16 %v568
        %v1903 = vunpack.c.h.b16 %v568
        %v1904 = vunpack.c.l.b16 %v569
        %v1905 = vunpack.c.h.b16 %v569
        %v1906 = vunpack.c.l.b16 %v570
        %v1907 = vunpack.c.h.b16 %v570
        %v1908 = vunpack.c.l.b16 %v571
        %v1909 = vunpack.c.h.b16 %v571
        %v1910 = vunpack.c.l.b16 %v572
        %v1911 = vunpack.c.h.b16 %v572
        %v1912 = vunpack.c.l.b16 %v573
        %v1913 = vunpack.c.h.b16 %v573
        %v1914 = vunpack.c.l.b16 %v574
        %v1915 = vunpack.c.h.b16 %v574
        %v1916 = vunpack.c.l.b16 %v575
        %v1917 = vunpack.c.h.b16 %v575
        %v1918 = vunpack.c.l.b16 %v576
        %v1919 = vunpack.c.h.b16 %v576
        %v1920 = vunpack.c.l.b16 %v577
        %v1921 = vunpack.c.h.b16 %v577
        %v1922 = vunpack.c.l.b16 %v578
        %v1923 = vunpack.c.h.b16 %v578
        %v1924 = vunpack.c.l.b16 %v579
        %v1925 = vunpack.c.h.b16 %v579
        %v1926 = vunpack.c.l.b16 %v580
        %v1927 = vunpack.c.h.b16 %v580
        %v1928 = vunpack.c.l.b16 %v581
        %v1929 = vunpack.c.h.b16 %v581
        %v1930 = vunpack.c.l.b16 %v582
        %v1931 = vunpack.c.h.b16 %v582
        %v1932 = vunpack.c.l.b16 %v583
        %v1933 = vunpack.c.h.b16 %v583
        %v1934 = vunpack.c.l.b16 %v584
        %v1935 = vunpack.c.h.b16 %v584
        %v1936 = vunpack.c.l.b16 %v585
        %v1937 = vunpack.c.h.b16 %v585
        %v1938 = vunpack.c.l.b16 %v586
        %v1939 = vunpack.c.h.b16 %v586
        %v1940 = vunpack.c.l.b16 %v587
        %v1941 = vunpack.c.h.b16 %v587
        %v1942 = vunpack.c.l.b16 %v588
        %v1943 = vunpack.c.h.b16 %v588
        %v1944 = vunpack.c.l.b16 %v589
        %v1945 = vunpack.c.h.b16 %v589
        %v1946 = vunpack.c.l.b16 %v590
        %v1947 = vunpack.c.h.b16 %v590
        %v1948 = vunpack.c.l.b16 %v591
        %v1949 = vunpack.c.h.b16 %v591
        %v1950 = vunpack.c.l.b16 %v592
        %v1951 = vunpack.c.h.b16 %v592
        %v1952 = vunpack.c.l.b16 %v593
        %v1953 = vunpack.c.h.b16 %v593
        %v1954 = vunpack.c.l.b16 %v594
        %v1955 = vunpack.c.h.b16 %v594
        %v1956 = vunpack.c.l.b16 %v595
        %v1957 = vunpack.c.h.b16 %v595
        %v1958 = vunpack.c.l.b16 %v596
        %v1959 = vunpack.c.h.b16 %v596
        %v1960 = vunpack.c.l.b16 %v597
        %v1961 = vunpack.c.h.b16 %v597
        %v1962 = vunpack.c.l.b16 %v598
        %v1963 = vunpack.c.h.b16 %v598
        %v1964 = vunpack.c.l.b16 %v599
        %v1965 = vunpack.c.h.b16 %v599
        %v1966 = vunpack.c.l.b16 %v600
        %v1967 = vunpack.c.h.b16 %v600
        %v1968 = vunpack.c.l.b16 %v601
        %v1969 = vunpack.c.h.b16 %v601
        %v1970 = vunpack.c.l.b16 %v602
        %v1971 = vunpack.c.h.b16 %v602
        %v1972 = vunpack.c.l.b16 %v603
        %v1973 = vunpack.c.h.b16 %v603
        %v1974 = vunpack.c.l.b16 %v604
        %v1975 = vunpack.c.h.b16 %v604
        %v1976 = vunpack.c.l.b16 %v605
        %v1977 = vunpack.c.h.b16 %v605
        %v1978 = vunpack.c.l.b16 %v606
        %v1979 = vunpack.c.h.b16 %v606
        %v1980 = vunpack.c.l.b16 %v607
        %v1981 = vunpack.c.h.b16 %v607
        %v1982 = vunpack.c.l.b16 %v608
        %v1983 = vunpack.c.h.b16 %v608
        %v1984 = vunpack.c.l.b16 %v609
        %v1985 = vunpack.c.h.b16 %v609
        %v1986 = vunpack.c.l.b16 %v610
        %v1987 = vunpack.c.h.b16 %v610
        %v1988 = vunpack.c.l.b16 %v611
        %v1989 = vunpack.c.h.b16 %v611
        %v1990 = vunpack.c.l.b16 %v612
        %v1991 = vunpack.c.h.b16 %v612
        %v1992 = vunpack.c.l.b16 %v613
        %v1993 = vunpack.c.h.b16 %v613
        %v1994 = vunpack.c.l.b16 %v614
        %v1995 = vunpack.c.h.b16 %v614
        %v1996 = vunpack.c.l.b16 %v615
        %v1997 = vunpack.c.h.b16 %v615
        %v1998 = vunpack.c.l.b16 %v616
        %v1999 = vunpack.c.h.b16 %v616
        %v2000 = vunpack.c.l.b16 %v617
        %v2001 = vunpack.c.h.b16 %v617
        %v2002 = vunpack.c.l.b16 %v618
        %v2003 = vunpack.c.h.b16 %v618
        %v2004 = vunpack.c.l.b16 %v619
        %v2005 = vunpack.c.h.b16 %v619
        %v2006 = vunpack.c.l.b16 %v620
        %v2007 = vunpack.c.h.b16 %v620
        %v2008 = vunpack.c.l.b16 %v621
        %v2009 = vunpack.c.h.b16 %v621
        %v2010 = vunpack.c.l.b16 %v622
        %v2011 = vunpack.c.h.b16 %v622
        %v2012 = vunpack.c.l.b16 %v623
        %v2013 = vunpack.c.h.b16 %v623
        %v2014 = vunpack.c.l.b16 %v624
        %v2015 = vunpack.c.h.b16 %v624
        %v2016 = vunpack.c.l.b16 %v625
        %v2017 = vunpack.c.h.b16 %v625
        %v2018 = vunpack.c.l.b16 %v626
        %v2019 = vunpack.c.h.b16 %v626
        %v2020 = vunpack.c.l.b16 %v627
        %v2021 = vunpack.c.h.b16 %v627
        %v2022 = vunpack.c.l.b16 %v628
        %v2023 = vunpack.c.h.b16 %v628
        %v2024 = vunpack.c.l.b16 %v629
        %v2025 = vunpack.c.h.b16 %v629
        %v2026 = vunpack.c.l.b16 %v630
        %v2027 = vunpack.c.h.b16 %v630
        %v2028 = vunpack.c.l.b16 %v631
        %v2029 = vunpack.c.h.b16 %v631
        %v2030 = vunpack.c.l.b16 %v632
        %v2031 = vunpack.c.h.b16 %v632
        %v2032 = vunpack.c.l.b16 %v633
        %v2033 = vunpack.c.h.b16 %v633
        %v2034 = vunpack.c.l.b16 %v634
        %v2035 = vunpack.c.h.b16 %v634
        %v2036 = vunpack.c.l.b16 %v635
        %v2037 = vunpack.c.h.b16 %v635
        %v2038 = vunpack.c.l.b16 %v636
        %v2039 = vunpack.c.h.b16 %v636
        %v2040 = vunpack.c.l.b16 %v637
        %v2041 = vunpack.c.h.b16 %v637
        %v2042 = vunpack.c.l.b16 %v638
        %v2043 = vunpack.c.h.b16 %v638
        %v2044 = vunpack.c.l.b16 %v639
        %v2045 = vunpack.c.h.b16 %v639
        %v2046 = vunpack.c.l.b16 %v640
        %v2047 = vunpack.c.h.b16 %v640
        %v2048 = vunpack.c.l.b16 %v641
        %v2049 = vunpack.c.h.b16 %v641
        %v2050 = vunpack.c.l.b16 %v642
        %v2051 = vunpack.c.h.b16 %v642
        %v2052 = vunpack.c.l.b16 %v643
        %v2053 = vunpack.c.h.b16 %v643
        %v2054 = vunpack.c.l.b16 %v644
        %v2055 = vunpack.c.h.b16 %v644
        %v2056 = vunpack.c.l.b16 %v645
        %v2057 = vunpack.c.h.b16 %v645
        %v2058 = vunpack.c.l.b16 %v646
        %v2059 = vunpack.c.h.b16 %v646
        %v2060 = vunpack.c.l.b16 %v647
        %v2061 = vunpack.c.h.b16 %v647
        %v2062 = vunpack.c.l.b16 %v648
        %v2063 = vunpack.c.h.b16 %v648
        %v2064 = vunpack.c.l.b16 %v649
        %v2065 = vunpack.c.h.b16 %v649
        %v2066 = vunpack.c.l.b16 %v650
        %v2067 = vunpack.c.h.b16 %v650
        %v2068 = vunpack.c.l.b16 %v651
        %v2069 = vunpack.c.h.b16 %v651
        %v2070 = vunpack.c.l.b16 %v652
        %v2071 = vunpack.c.h.b16 %v652
        %v2072 = vunpack.c.l.b16 %v653
        %v2073 = vunpack.c.h.b16 %v653
        %v2074 = vunpack.c.l.b16 %v654
        %v2075 = vunpack.c.h.b16 %v654
        %v2076 = vunpack.c.l.b16 %v655
        %v2077 = vunpack.c.h.b16 %v655
        %v2078 = vunpack.c.l.b16 %v656
        %v2079 = vunpack.c.h.b16 %v656
        %v2080 = vunpack.c.l.b16 %v657
        %v2081 = vunpack.c.h.b16 %v657
        %v2082 = vunpack.c.l.b16 %v658
        %v2083 = vunpack.c.h.b16 %v658
        %v2084 = vunpack.c.l.b16 %v659
        %v2085 = vunpack.c.h.b16 %v659
        %v2086 = vunpack.c.l.b16 %v660
        %v2087 = vunpack.c.h.b16 %v660
        %v2088 = vunpack.c.l.b16 %v661
        %v2089 = vunpack.c.h.b16 %v661
        %v2090 = vunpack.c.l.b16 %v662
        %v2091 = vunpack.c.h.b16 %v662
        %v2092 = vunpack.c.l.b16 %v663
        %v2093 = vunpack.c.h.b16 %v663
        %v2094 = vunpack.c.l.b16 %v664
        %v2095 = vunpack.c.h.b16 %v664
        %v2096 = vunpack.c.l.b16 %v665
        %v2097 = vunpack.c.h.b16 %v665
        %v2098 = vunpack.c.l.b16 %v666
        %v2099 = vunpack.c.h.b16 %v666
        %v2100 = vunpack.c.l.b16 %v667
        %v2101 = vunpack.c.h.b16 %v667
        %v2102 = vunpack.c.l.b16 %v668
        %v2103 = vunpack.c.h.b16 %v668
        %v2104 = vunpack.c.l.b16 %v669
        %v2105 = vunpack.c.h.b16 %v669
        %v2106 = vunpack.c.l.b16 %v670
        %v2107 = vunpack.c.h.b16 %v670
        %v2108 = vunpack.c.l.b16 %v671
        %v2109 = vunpack.c.h.b16 %v671
        %v2110 = vunpack.c.l.b16 %v672
        %v2111 = vunpack.c.h.b16 %v672
        %v2112 = vunpack.c.l.b16 %v673
        %v2113 = vunpack.c.h.b16 %v673
        %v2114 = vunpack.c.l.b16 %v674
        %v2115 = vunpack.c.h.b16 %v674
        %v2116 = vunpack.c.l.b16 %v675
        %v2117 = vunpack.c.h.b16 %v675
        %v2118 = vunpack.c.l.b16 %v676
        %v2119 = vunpack.c.h.b16 %v676
        %v2120 = vunpack.c.l.b16 %v677
        %v2121 = vunpack.c.h.b16 %v677
        %v2122 = vunpack.c.l.b16 %v678
        %v2123 = vunpack.c.h.b16 %v678
        %v2124 = vunpack.c.l.b16 %v679
        %v2125 = vunpack.c.h.b16 %v679
        %v2126 = vunpack.c.l.b16 %v680
        %v2127 = vunpack.c.h.b16 %v680
        %v2128 = vunpack.c.l.b16 %v681
        %v2129 = vunpack.c.h.b16 %v681
        %v2130 = vunpack.c.l.b16 %v682
        %v2131 = vunpack.c.h.b16 %v682
        %v2132 = vunpack.c.l.b16 %v683
        %v2133 = vunpack.c.h.b16 %v683
        %v2134 = vunpack.c.l.b16 %v684
        %v2135 = vunpack.c.h.b16 %v684
        %v2136 = vunpack.c.l.b16 %v685
        %v2137 = vunpack.c.h.b16 %v685
        %v2138 = vunpack.c.l.b16 %v686
        %v2139 = vunpack.c.h.b16 %v686
        %v2140 = vunpack.c.l.b16 %v687
        %v2141 = vunpack.c.h.b16 %v687
        %v2142 = vunpack.c.l.b16 %v688
        %v2143 = vunpack.c.h.b16 %v688
        %v2144 = vunpack.c.l.b16 %v689
        %v2145 = vunpack.c.h.b16 %v689
        %v2146 = vunpack.c.l.b16 %v690
        %v2147 = vunpack.c.h.b16 %v690
        %v2148 = vunpack.c.l.b16 %v691
        %v2149 = vunpack.c.h.b16 %v691
        %v2150 = vunpack.c.l.b16 %v692
        %v2151 = vunpack.c.h.b16 %v692
        %v2152 = vunpack.c.l.b16 %v693
        %v2153 = vunpack.c.h.b16 %v693
        %v2154 = vunpack.c.l.b16 %v694
        %v2155 = vunpack.c.h.b16 %v694
        %v2156 = vunpack.c.l.b16 %v695
        %v2157 = vunpack.c.h.b16 %v695
        %v2158 = vunpack.c.l.b16 %v696
        %v2159 = vunpack.c.h.b16 %v696
        %v2160 = vunpack.c.l.b16 %v697
        %v2161 = vunpack.c.h.b16 %v697
        %v2162 = vunpack.c.l.b16 %v698
        %v2163 = vunpack.c.h.b16 %v698
        %v2164 = vunpack.c.l.b16 %v699
        %v2165 = vunpack.c.h.b16 %v699
        %v2166 = vunpack.c.l.b16 %v700
        %v2167 = vunpack.c.h.b16 %v700
        %v2168 = vunpack.c.l.b16 %v701
        %v2169 = vunpack.c.h.b16 %v701
        %v2170 = vunpack.c.l.b16 %v702
        %v2171 = vunpack.c.h.b16 %v702
        %v2172 = vunpack.c.l.b16 %v703
        %v2173 = vunpack.c.h.b16 %v703
        %v2174 = vunpack.c.l.b16 %v704
        %v2175 = vunpack.c.h.b16 %v704
        %v2176 = vunpack.c.l.b16 %v705
        %v2177 = vunpack.c.h.b16 %v705
        %v2178 = vunpack.c.l.b16 %v706
        %v2179 = vunpack.c.h.b16 %v706
        %v2180 = vunpack.c.l.b16 %v707
        %v2181 = vunpack.c.h.b16 %v707
        %v2182 = vunpack.c.l.b16 %v708
        %v2183 = vunpack.c.h.b16 %v708
        %v2184 = vunpack.c.l.b16 %v709
        %v2185 = vunpack.c.h.b16 %v709
        %v2186 = vunpack.c.l.b16 %v710
        %v2187 = vunpack.c.h.b16 %v710
        %v2188 = vunpack.c.l.b16 %v711
        %v2189 = vunpack.c.h.b16 %v711
        %v2190 = vunpack.c.l.b16 %v712
        %v2191 = vunpack.c.h.b16 %v712
        %v2192 = vunpack.c.l.b16 %v713
        %v2193 = vunpack.c.h.b16 %v713
        %v2194 = vunpack.c.l.b16 %v714
        %v2195 = vunpack.c.h.b16 %v714
        %v2196 = vunpack.c.l.b16 %v715
        %v2197 = vunpack.c.h.b16 %v715
        %v2198 = vunpack.c.l.b16 %v716
        %v2199 = vunpack.c.h.b16 %v716
        %v2200 = vunpack.c.l.b16 %v717
        %v2201 = vunpack.c.h.b16 %v717
        %v2202 = vunpack.c.l.b16 %v718
        %v2203 = vunpack.c.h.b16 %v718
        %v2204 = vunpack.c.l.b16 %v719
        %v2205 = vunpack.c.h.b16 %v719
        %v2206 = vunpack.c.l.b16 %v720
        %v2207 = vunpack.c.h.b16 %v720
        %v2208 = vunpack.c.l.b16 %v721
        %v2209 = vunpack.c.h.b16 %v721
        %v2210 = vunpack.c.l.b16 %v722
        %v2211 = vunpack.c.h.b16 %v722
        %v2212 = vunpack.c.l.b16 %v723
        %v2213 = vunpack.c.h.b16 %v723
        %v2214 = vunpack.c.l.b16 %v724
        %v2215 = vunpack.c.h.b16 %v724
        %v2216 = vunpack.c.l.b16 %v725
        %v2217 = vunpack.c.h.b16 %v725
        %v2218 = vunpack.c.l.b16 %v726
        %v2219 = vunpack.c.h.b16 %v726
        %v2220 = vunpack.c.l.b16 %v727
        %v2221 = vunpack.c.h.b16 %v727
        %v2222 = vunpack.c.l.b16 %v728
        %v2223 = vunpack.c.h.b16 %v728
        %v2224 = vunpack.c.l.b16 %v729
        %v2225 = vunpack.c.h.b16 %v729
        %v2226 = vunpack.c.l.b16 %v730
        %v2227 = vunpack.c.h.b16 %v730
        %v2228 = vunpack.c.l.b16 %v731
        %v2229 = vunpack.c.h.b16 %v731
        %v2230 = vunpack.c.l.b16 %v732
        %v2231 = vunpack.c.h.b16 %v732
        %v2232 = vunpack.c.l.b16 %v733
        %v2233 = vunpack.c.h.b16 %v733
        %v2234 = vunpack.c.l.b16 %v734
        %v2235 = vunpack.c.h.b16 %v734
        %v2236 = vunpack.c.l.b16 %v735
        %v2237 = vunpack.c.h.b16 %v735
        %v2238 = vunpack.c.l.b16 %v736
        %v2239 = vunpack.c.h.b16 %v736
        %v2240 = vunpack.c.l.b16 %v737
        %v2241 = vunpack.c.h.b16 %v737
        %v2242 = vunpack.c.l.b16 %v738
        %v2243 = vunpack.c.h.b16 %v738
        %v2244 = vunpack.c.l.b16 %v739
        %v2245 = vunpack.c.h.b16 %v739
        %v2246 = vunpack.c.l.b16 %v740
        %v2247 = vunpack.c.h.b16 %v740
        %v2248 = vunpack.c.l.b16 %v741
        %v2249 = vunpack.c.h.b16 %v741
        %v2250 = vunpack.c.l.b16 %v742
        %v2251 = vunpack.c.h.b16 %v742
        %v2252 = vunpack.c.l.b16 %v743
        %v2253 = vunpack.c.h.b16 %v743
        %v2254 = vunpack.c.l.b16 %v744
        %v2255 = vunpack.c.h.b16 %v744
        %v2256 = vunpack.c.l.b16 %v745
        %v2257 = vunpack.c.h.b16 %v745
        %v2258 = vunpack.c.l.b16 %v746
        %v2259 = vunpack.c.h.b16 %v746
        %v2260 = vunpack.c.l.b16 %v747
        %v2261 = vunpack.c.h.b16 %v747
        %v2262 = vunpack.c.l.b16 %v748
        %v2263 = vunpack.c.h.b16 %v748
        %v2264 = vunpack.c.l.b16 %v749
        %v2265 = vunpack.c.h.b16 %v749
        %v2266 = vunpack.c.l.b16 %v750
        %v2267 = vunpack.c.h.b16 %v750
        %v2268 = vunpack.c.l.b16 %v751
        %v2269 = vunpack.c.h.b16 %v751
        %v2270 = vunpack.c.l.b16 %v752
        %v2271 = vunpack.c.h.b16 %v752
        %v2272 = vunpack.c.l.b16 %v753
        %v2273 = vunpack.c.h.b16 %v753
        %v2274 = vunpack.c.l.b16 %v754
        %v2275 = vunpack.c.h.b16 %v754
        %v2276 = vunpack.c.l.b16 %v755
        %v2277 = vunpack.c.h.b16 %v755
        %v2278 = vunpack.c.l.b16 %v756
        %v2279 = vunpack.c.h.b16 %v756
        %v2280 = vunpack.c.l.b16 %v757
        %v2281 = vunpack.c.h.b16 %v757
        %v2282 = vunpack.c.l.b16 %v758
        %v2283 = vunpack.c.h.b16 %v758
        %v2284 = vunpack.c.l.b16 %v759
        %v2285 = vunpack.c.h.b16 %v759
        %v2286 = vunpack.c.l.b16 %v760
        %v2287 = vunpack.c.h.b16 %v760
        %v2288 = vunpack.c.l.b16 %v761
        %v2289 = vunpack.c.h.b16 %v761
        %v2290 = vunpack.c.l.b16 %v762
        %v2291 = vunpack.c.h.b16 %v762
        %v2292 = vunpack.c.l.b16 %v763
        %v2293 = vunpack.c.h.b16 %v763
        %v2294 = vunpack.c.l.b16 %v764
        %v2295 = vunpack.c.h.b16 %v764
        %v2296 = vunpack.c.l.b16 %v765
        %v2297 = vunpack.c.h.b16 %v765
        %v2298 = vunpack.c.l.b16 %v766
        %v2299 = vunpack.c.h.b16 %v766
        %v2300 = vunpack.c.l.b16 %v767
        %v2301 = vunpack.c.h.b16 %v767
        %v2302 = vunpack.c.l.b16 %v768
        %v2303 = vunpack.c.h.b16 %v768
        %v2304 = vunpack.c.l.b16 %v769
        %v2305 = vunpack.c.h.b16 %v769
        %v2306 = vunpack.c.l.b16 %v770
        %v2307 = vunpack.c.h.b16 %v770
        %v2308 = vunpack.c.l.b16 %v771
        %v2309 = vunpack.c.h.b16 %v771
        %v2310 = vunpack.c.l.b16 %v772
        %v2311 = vunpack.c.h.b16 %v772
        %v2312 = vunpack.c.l.b16 %v773
        %v2313 = vunpack.c.h.b16 %v773
        %v2314 = vunpack.c.l.b16 %v774
        %v2315 = vunpack.c.h.b16 %v774
        %v2316 = vunpack.c.l.b16 %v775
        %v2317 = vunpack.c.h.b16 %v775
        %v2318 = vunpack.c.l.b16 %v776
        %v2319 = vunpack.c.h.b16 %v776
        %v2320 = vunpack.c.l.b16 %v777
        %v2321 = vunpack.c.h.b16 %v777
        %v2322 = vunpack.c.l.b16 %v778
        %v2323 = vunpack.c.h.b16 %v778
        %v2324 = vunpack.c.l.b16 %v779
        %v2325 = vunpack.c.h.b16 %v779
        %v2326 = vunpack.c.l.b16 %v780
        %v2327 = vunpack.c.h.b16 %v780
        %v2328 = vunpack.c.l.b16 %v781
        %v2329 = vunpack.c.h.b16 %v781
        %v2330 = vunpack.c.l.b16 %v782
        %v2331 = vunpack.c.h.b16 %v782
        %v2332 = vunpack.c.l.b16 %v783
        %v2333 = vunpack.c.h.b16 %v783
        %v2334 = vunpack.c.l.b16 %v784
        %v2335 = vunpack.c.h.b16 %v784
        %v2336 = vunpack.c.l.b16 %v785
        %v2337 = vunpack.c.h.b16 %v785
        %v2338 = vunpack.c.l.b16 %v786
        %v2339 = vunpack.c.h.b16 %v786
        %v2340 = vunpack.c.l.b16 %v787
        %v2341 = vunpack.c.h.b16 %v787
        %v2342 = vunpack.c.l.b16 %v788
        %v2343 = vunpack.c.h.b16 %v788
        %v2344 = vunpack.c.l.b16 %v789
        %v2345 = vunpack.c.h.b16 %v789
        %v2346 = vunpack.c.l.b16 %v790
        %v2347 = vunpack.c.h.b16 %v790
        %v2348 = vunpack.c.l.b16 %v791
        %v2349 = vunpack.c.h.b16 %v791
        %v2350 = vunpack.c.l.b16 %v792
        %v2351 = vunpack.c.h.b16 %v792
        %v2352 = vunpack.c.l.b16 %v793
        %v2353 = vunpack.c.h.b16 %v793
        %v2354 = vunpack.c.l.b16 %v794
        %v2355 = vunpack.c.h.b16 %v794
        %v2356 = vunpack.c.l.b16 %v795
        %v2357 = vunpack.c.h.b16 %v795
        %v2358 = vunpack.c.l.b16 %v796
        %v2359 = vunpack.c.h.b16 %v796
        %v2360 = vunpack.c.l.b16 %v797
        %v2361 = vunpack.c.h.b16 %v797
        %v2362 = vunpack.c.l.b16 %v798
        %v2363 = vunpack.c.h.b16 %v798
        %v2364 = vunpack.c.l.b16 %v799
        %v2365 = vunpack.c.h.b16 %v799
        %v2366 = vunpack.c.l.b16 %v800
        %v2367 = vunpack.c.h.b16 %v800
        %v2368 = vunpack.c.l.b16 %v801
        %v2369 = vunpack.c.h.b16 %v801
        %v2370 = vunpack.c.l.b16 %v802
        %v2371 = vunpack.c.h.b16 %v802
        %v2372 = vunpack.c.l.b16 %v803
        %v2373 = vunpack.c.h.b16 %v803
        %v2374 = vunpack.c.l.b16 %v804
        %v2375 = vunpack.c.h.b16 %v804
        %v2376 = vunpack.c.l.b16 %v805
        %v2377 = vunpack.c.h.b16 %v805
        %v2378 = vunpack.c.l.b16 %v806
        %v2379 = vunpack.c.h.b16 %v806
        %v2380 = vunpack.c.l.b16 %v807
        %v2381 = vunpack.c.h.b16 %v807
        %v2382 = vunpack.c.l.b16 %v808
        %v2383 = vunpack.c.h.b16 %v808
        %v2384 = vunpack.c.l.b16 %v809
        %v2385 = vunpack.c.h.b16 %v809
        %v2386 = vunpack.c.l.b16 %v810
        %v2387 = vunpack.c.h.b16 %v810
        %v2388 = vunpack.c.l.b16 %v811
        %v2389 = vunpack.c.h.b16 %v811
        %v2390 = vunpack.c.l.b16 %v812
        %v2391 = vunpack.c.h.b16 %v812
        %v2392 = vunpack.c.l.b16 %v813
        %v2393 = vunpack.c.h.b16 %v813
        %v2394 = vunpack.c.l.b16 %v814
        %v2395 = vunpack.c.h.b16 %v814
        %v2396 = vunpack.c.l.b16 %v815
        %v2397 = vunpack.c.h.b16 %v815
        %v2398 = vunpack.c.l.b16 %v816
        %v2399 = vunpack.c.h.b16 %v816
        %v2400 = vunpack.c.l.b16 %v817
        %v2401 = vunpack.c.h.b16 %v817
        %v2402 = vunpack.c.l.b16 %v818
        %v2403 = vunpack.c.h.b16 %v818
        %v2404 = vunpack.c.l.b16 %v819
        %v2405 = vunpack.c.h.b16 %v819
        %v2406 = vunpack.c.l.b16 %v820
        %v2407 = vunpack.c.h.b16 %v820
        %v2408 = vunpack.c.l.b16 %v821
        %v2409 = vunpack.c.h.b16 %v821
        %v2410 = vunpack.c.l.b16 %v822
        %v2411 = vunpack.c.h.b16 %v822
        %v2412 = vunpack.c.l.b16 %v823
        %v2413 = vunpack.c.h.b16 %v823
        %v2414 = vunpack.c.l.b16 %v824
        %v2415 = vunpack.c.h.b16 %v824
        %v2416 = vunpack.c.l.b16 %v825
        %v2417 = vunpack.c.h.b16 %v825
        %v2418 = vunpack.c.l.b16 %v826
        %v2419 = vunpack.c.h.b16 %v826
        %v2420 = vunpack.c.l.b16 %v827
        %v2421 = vunpack.c.h.b16 %v827
        %v2422 = vunpack.c.l.b16 %v828
        %v2423 = vunpack.c.h.b16 %v828
        %v2424 = vunpack.c.l.b16 %v829
        %v2425 = vunpack.c.h.b16 %v829
        %v2426 = vunpack.c.l.b16 %v830
        %v2427 = vunpack.c.h.b16 %v830
        %v2428 = vunpack.c.l.b16 %v831
        %v2429 = vunpack.c.h.b16 %v831
        %v2430 = vunpack.c.l.b16 %v832
        %v2431 = vunpack.c.h.b16 %v832
        %v2432 = vunpack.c.l.b16 %v833
        %v2433 = vunpack.c.h.b16 %v833
        %v2434 = vunpack.c.l.b16 %v834
        %v2435 = vunpack.c.h.b16 %v834
        %v2436 = vunpack.c.l.b16 %v835
        %v2437 = vunpack.c.h.b16 %v835
        %v2438 = vunpack.c.l.b16 %v836
        %v2439 = vunpack.c.h.b16 %v836
        %v2440 = vunpack.c.l.b16 %v837
        %v2441 = vunpack.c.h.b16 %v837
        %v2442 = vunpack.c.l.b16 %v838
        %v2443 = vunpack.c.h.b16 %v838
        %v2444 = vunpack.c.l.b16 %v839
        %v2445 = vunpack.c.h.b16 %v839
        %v2446 = vunpack.c.l.b16 %v840
        %v2447 = vunpack.c.h.b16 %v840
        %v2448 = vunpack.c.l.b16 %v841
        %v2449 = vunpack.c.h.b16 %v841
        %v2450 = vunpack.c.l.b16 %v842
        %v2451 = vunpack.c.h.b16 %v842
        %v2452 = vunpack.c.l.b16 %v843
        %v2453 = vunpack.c.h.b16 %v843
        %v2454 = vunpack.c.l.b16 %v844
        %v2455 = vunpack.c.h.b16 %v844
        %v2456 = vunpack.c.l.b16 %v845
        %v2457 = vunpack.c.h.b16 %v845
        %v2458 = vunpack.c.l.b16 %v846
        %v2459 = vunpack.c.h.b16 %v846
        %v2460 = vunpack.c.l.b16 %v847
        %v2461 = vunpack.c.h.b16 %v847
        %v2462 = vunpack.c.l.b16 %v848
        %v2463 = vunpack.c.h.b16 %v848
        %v2464 = vunpack.c.l.b16 %v849
        %v2465 = vunpack.c.h.b16 %v849
        %v2466 = vpack.c.b16 %v1446, %v1442
        %v2467 = vpack.c.b16 %v1447, %v1443
        %v2468 = vpack.c.b16 %v1448, %v1444
        %v2469 = vpack.c.b16 %v1449, %v1445
        %v2470 = vpack.c.b16 %v1454, %v1450
        %v2471 = vpack.c.b16 %v1455, %v1451
        %v2472 = vpack.c.b16 %v1456, %v1452
        %v2473 = vpack.c.b16 %v1457, %v1453
        %v2474 = vpack.c.b16 %v1462, %v1458
        %v2475 = vpack.c.b16 %v1463, %v1459
        %v2476 = vpack.c.b16 %v1464, %v1460
        %v2477 = vpack.c.b16 %v1465, %v1461
        %v2478 = vpack.c.b16 %v1470, %v1466
        %v2479 = vpack.c.b16 %v1471, %v1467
        %v2480 = vpack.c.b16 %v1472, %v1468
        %v2481 = vpack.c.b16 %v1473, %v1469
        %v2482 = vpack.c.b16 %v1478, %v1474
        %v2483 = vpack.c.b16 %v1479, %v1475
        %v2484 = vpack.c.b16 %v1480, %v1476
        %v2485 = vpack.c.b16 %v1481, %v1477
        %v2486 = vpack.c.b16 %v1486, %v1482
        %v2487 = vpack.c.b16 %v1487, %v1483
        %v2488 = vpack.c.b16 %v1488, %v1484
        %v2489 = vpack.c.b16 %v1489, %v1485
        %v2490 = vpack.c.b16 %v1494, %v1490
        %v2491 = vpack.c.b16 %v1495, %v1491
        %v2492 = vpack.c.b16 %v1496, %v1492
        %v2493 = vpack.c.b16 %v1497, %v1493
        %v2494 = vpack.c.b16 %v1502, %v1498
        %v2495 = vpack.c.b16 %v1503, %v1499
        %v2496 = vpack.c.b16 %v1504, %v1500
        %v2497 = vpack.c.b16 %v1505, %v1501
        %v2498 = vpack.c.b16 %v1510, %v1506
        %v2499 = vpack.c.b16 %v1511, %v1507
        %v2500 = vpack.c.b16 %v1512, %v1508
        %v2501 = vpack.c.b16 %v1513, %v1509
        %v2502 = vpack.c.b16 %v1518, %v1514
        %v2503 = vpack.c.b16 %v1519, %v1515
        %v2504 = vpack.c.b16 %v1520, %v1516
        %v2505 = vpack.c.b16 %v1521, %v1517
        %v2506 = vpack.c.b16 %v1526, %v1522
        %v2507 = vpack.c.b16 %v1527, %v1523
        %v2508 = vpack.c.b16 %v1528, %v1524
        %v2509 = vpack.c.b16 %v1529, %v1525
        %v2510 = vpack.c.b16 %v1534, %v1530
        %v2511 = vpack.c.b16 %v1535, %v1531
        %v2512 = vpack.c.b16 %v1536, %v1532
        %v2513 = vpack.c.b16 %v1537, %v1533
        %v2514 = vpack.c.b16 %v1542, %v1538
        %v2515 = vpack.c.b16 %v1543, %v1539
        %v2516 = vpack.c.b16 %v1544, %v1540
        %v2517 = vpack.c.b16 %v1545, %v1541
        %v2518 = vpack.c.b16 %v1550, %v1546
        %v2519 = vpack.c.b16 %v1551, %v1547
        %v2520 = vpack.c.b16 %v1552, %v1548
        %v2521 = vpack.c.b16 %v1553, %v1549
        %v2522 = vpack.c.b16 %v1558, %v1554
        %v2523 = vpack.c.b16 %v1559, %v1555
        %v2524 = vpack.c.b16 %v1560, %v1556
        %v2525 = vpack.c.b16 %v1561, %v1557
        %v2526 = vpack.c.b16 %v1566, %v1562
        %v2527 = vpack.c.b16 %v1567, %v1563
        %v2528 = vpack.c.b16 %v1568, %v1564
        %v2529 = vpack.c.b16 %v1569, %v1565
        %v2530 = vpack.c.b16 %v1574, %v1570
        %v2531 = vpack.c.b16 %v1575, %v1571
        %v2532 = vpack.c.b16 %v1576, %v1572
        %v2533 = vpack.c.b16 %v1577, %v1573
        %v2534 = vpack.c.b16 %v1582, %v1578
        %v2535 = vpack.c.b16 %v1583, %v1579
        %v2536 = vpack.c.b16 %v1584, %v1580
        %v2537 = vpack.c.b16 %v1585, %v1581
        %v2538 = vpack.c.b16 %v1590, %v1586
        %v2539 = vpack.c.b16 %v1591, %v1587
        %v2540 = vpack.c.b16 %v1592, %v1588
        %v2541 = vpack.c.b16 %v1593, %v1589
        %v2542 = vpack.c.b16 %v1598, %v1594
        %v2543 = vpack.c.b16 %v1599, %v1595
        %v2544 = vpack.c.b16 %v1600, %v1596
        %v2545 = vpack.c.b16 %v1601, %v1597
        %v2546 = vpack.c.b16 %v1606, %v1602
        %v2547 = vpack.c.b16 %v1607, %v1603
        %v2548 = vpack.c.b16 %v1608, %v1604
        %v2549 = vpack.c.b16 %v1609, %v1605
        %v2550 = vpack.c.b16 %v1614, %v1610
        %v2551 = vpack.c.b16 %v1615, %v1611
        %v2552 = vpack.c.b16 %v1616, %v1612
        %v2553 = vpack.c.b16 %v1617, %v1613
        %v2554 = vpack.c.b16 %v1622, %v1618
        %v2555 = vpack.c.b16 %v1623, %v1619
        %v2556 = vpack.c.b16 %v1624, %v1620
        %v2557 = vpack.c.b16 %v1625, %v1621
        %v2558 = vpack.c.b16 %v1630, %v1626
        %v2559 = vpack.c.b16 %v1631, %v1627
        %v2560 = vpack.c.b16 %v1632, %v1628
        %v2561 = vpack.c.b16 %v1633, %v1629
        %v2562 = vpack.c.b16 %v1638, %v1634
        %v2563 = vpack.c.b16 %v1639, %v1635
        %v2564 = vpack.c.b16 %v1640, %v1636
        %v2565 = vpack.c.b16 %v1641, %v1637
        %v2566 = vpack.c.b16 %v1646, %v1642
        %v2567 = vpack.c.b16 %v1647, %v1643
        %v2568 = vpack.c.b16 %v1648, %v1644
        %v2569 = vpack.c.b16 %v1649, %v1645
        %v2570 = vpack.c.b16 %v1654, %v1650
        %v2571 = vpack.c.b16 %v1655, %v1651
        %v2572 = vpack.c.b16 %v1656, %v1652
        %v2573 = vpack.c.b16 %v1657, %v1653
        %v2574 = vpack.c.b16 %v1662, %v1658
        %v2575 = vpack.c.b16 %v1663, %v1659
        %v2576 = vpack.c.b16 %v1664, %v1660
        %v2577 = vpack.c.b16 %v1665, %v1661
        %v2578 = vpack.c.b16 %v1670, %v1666
        %v2579 = vpack.c.b16 %v1671, %v1667
        %v2580 = vpack.c.b16 %v1672, %v1668
        %v2581 = vpack.c.b16 %v1673, %v1669
        %v2582 = vpack.c.b16 %v1678, %v1674
        %v2583 = vpack.c.b16 %v1679, %v1675
        %v2584 = vpack.c.b16 %v1680, %v1676
        %v2585 = vpack.c.b16 %v1681, %v1677
        %v2586 = vpack.c.b16 %v1686, %v1682
        %v2587 = vpack.c.b16 %v1687, %v1683
        %v2588 = vpack.c.b16 %v1688, %v1684
        %v2589 = vpack.c.b16 %v1689, %v1685
        %v2590 = vpack.c.b16 %v1694, %v1690
        %v2591 = vpack.c.b16 %v1695, %v1691
        %v2592 = vpack.c.b16 %v1696, %v1692
        %v2593 = vpack.c.b16 %v1697, %v1693
        %v2594 = vpack.c.b16 %v1702, %v1698
        %v2595 = vpack.c.b16 %v1703, %v1699
        %v2596 = vpack.c.b16 %v1704, %v1700
        %v2597 = vpack.c.b16 %v1705, %v1701
        %v2598 = vpack.c.b16 %v1710, %v1706
        %v2599 = vpack.c.b16 %v1711, %v1707
        %v2600 = vpack.c.b16 %v1712, %v1708
        %v2601 = vpack.c.b16 %v1713, %v1709
        %v2602 = vpack.c.b16 %v1718, %v1714
        %v2603 = vpack.c.b16 %v1719, %v1715
        %v2604 = vpack.c.b16 %v1720, %v1716
        %v2605 = vpack.c.b16 %v1721, %v1717
        %v2606 = vpack.c.b16 %v1726, %v1722
        %v2607 = vpack.c.b16 %v1727, %v1723
        %v2608 = vpack.c.b16 %v1728, %v1724
        %v2609 = vpack.c.b16 %v1729, %v1725
        %v2610 = vpack.c.b16 %v1734, %v1730
        %v2611 = vpack.c.b16 %v1735, %v1731
        %v2612 = vpack.c.b16 %v1736, %v1732
        %v2613 = vpack.c.b16 %v1737, %v1733
        %v2614 = vpack.c.b16 %v1742, %v1738
        %v2615 = vpack.c.b16 %v1743, %v1739
        %v2616 = vpack.c.b16 %v1744, %v1740
        %v2617 = vpack.c.b16 %v1745, %v1741
        %v2618 = vpack.c.b16 %v1750, %v1746
        %v2619 = vpack.c.b16 %v1751, %v1747
        %v2620 = vpack.c.b16 %v1752, %v1748
        %v2621 = vpack.c.b16 %v1753, %v1749
        %v2622 = vpack.c.b16 %v1758, %v1754
        %v2623 = vpack.c.b16 %v1759, %v1755
        %v2624 = vpack.c.b16 %v1760, %v1756
        %v2625 = vpack.c.b16 %v1761, %v1757
        %v2626 = vpack.c.b16 %v1766, %v1762
        %v2627 = vpack.c.b16 %v1767, %v1763
        %v2628 = vpack.c.b16 %v1768, %v1764
        %v2629 = vpack.c.b16 %v1769, %v1765
        %v2630 = vpack.c.b16 %v1774, %v1770
        %v2631 = vpack.c.b16 %v1775, %v1771
        %v2632 = vpack.c.b16 %v1776, %v1772
        %v2633 = vpack.c.b16 %v1777, %v1773
        %v2634 = vpack.c.b16 %v1782, %v1778
        %v2635 = vpack.c.b16 %v1783, %v1779
        %v2636 = vpack.c.b16 %v1784, %v1780
        %v2637 = vpack.c.b16 %v1785, %v1781
        %v2638 = vpack.c.b16 %v1790, %v1786
        %v2639 = vpack.c.b16 %v1791, %v1787
        %v2640 = vpack.c.b16 %v1792, %v1788
        %v2641 = vpack.c.b16 %v1793, %v1789
        %v2642 = vpack.c.b16 %v1798, %v1794
        %v2643 = vpack.c.b16 %v1799, %v1795
        %v2644 = vpack.c.b16 %v1800, %v1796
        %v2645 = vpack.c.b16 %v1801, %v1797
        %v2646 = vpack.c.b16 %v1806, %v1802
        %v2647 = vpack.c.b16 %v1807, %v1803
        %v2648 = vpack.c.b16 %v1808, %v1804
        %v2649 = vpack.c.b16 %v1809, %v1805
        %v2650 = vpack.c.b16 %v1814, %v1810
        %v2651 = vpack.c.b16 %v1815, %v1811
        %v2652 = vpack.c.b16 %v1816, %v1812
        %v2653 = vpack.c.b16 %v1817, %v1813
        %v2654 = vpack.c.b16 %v1822, %v1818
        %v2655 = vpack.c.b16 %v1823, %v1819
        %v2656 = vpack.c.b16 %v1824, %v1820
        %v2657 = vpack.c.b16 %v1825, %v1821
        %v2658 = vpack.c.b16 %v1830, %v1826
        %v2659 = vpack.c.b16 %v1831, %v1827
        %v2660 = vpack.c.b16 %v1832, %v1828
        %v2661 = vpack.c.b16 %v1833, %v1829
        %v2662 = vpack.c.b16 %v1838, %v1834
        %v2663 = vpack.c.b16 %v1839, %v1835
        %v2664 = vpack.c.b16 %v1840, %v1836
        %v2665 = vpack.c.b16 %v1841, %v1837
        %v2666 = vpack.c.b16 %v1846, %v1842
        %v2667 = vpack.c.b16 %v1847, %v1843
        %v2668 = vpack.c.b16 %v1848, %v1844
        %v2669 = vpack.c.b16 %v1849, %v1845
        %v2670 = vpack.c.b16 %v1854, %v1850
        %v2671 = vpack.c.b16 %v1855, %v1851
        %v2672 = vpack.c.b16 %v1856, %v1852
        %v2673 = vpack.c.b16 %v1857, %v1853
        %v2674 = vpack.c.b16 %v1862, %v1858
        %v2675 = vpack.c.b16 %v1863, %v1859
        %v2676 = vpack.c.b16 %v1864, %v1860
        %v2677 = vpack.c.b16 %v1865, %v1861
        %v2678 = vpack.c.b16 %v1870, %v1866
        %v2679 = vpack.c.b16 %v1871, %v1867
        %v2680 = vpack.c.b16 %v1872, %v1868
        %v2681 = vpack.c.b16 %v1873, %v1869
        %v2682 = vpack.c.b16 %v1878, %v1874
        %v2683 = vpack.c.b16 %v1879, %v1875
        %v2684 = vpack.c.b16 %v1880, %v1876
        %v2685 = vpack.c.b16 %v1881, %v1877
        %v2686 = vpack.c.b16 %v1886, %v1882
        %v2687 = vpack.c.b16 %v1887, %v1883
        %v2688 = vpack.c.b16 %v1888, %v1884
        %v2689 = vpack.c.b16 %v1889, %v1885
        %v2690 = vpack.c.b16 %v1894, %v1890
        %v2691 = vpack.c.b16 %v1895, %v1891
        %v2692 = vpack.c.b16 %v1896, %v1892
        %v2693 = vpack.c.b16 %v1897, %v1893
        %v2694 = vpack.c.b16 %v1902, %v1898
        %v2695 = vpack.c.b16 %v1903, %v1899
        %v2696 = vpack.c.b16 %v1904, %v1900
        %v2697 = vpack.c.b16 %v1905, %v1901
        %v2698 = vpack.c.b16 %v1910, %v1906
        %v2699 = vpack.c.b16 %v1911, %v1907
        %v2700 = vpack.c.b16 %v1912, %v1908
        %v2701 = vpack.c.b16 %v1913, %v1909
        %v2702 = vpack.c.b16 %v1918, %v1914
        %v2703 = vpack.c.b16 %v1919, %v1915
        %v2704 = vpack.c.b16 %v1920, %v1916
        %v2705 = vpack.c.b16 %v1921, %v1917
        %v2706 = vpack.c.b16 %v1926, %v1922
        %v2707 = vpack.c.b16 %v1927, %v1923
        %v2708 = vpack.c.b16 %v1928, %v1924
        %v2709 = vpack.c.b16 %v1929, %v1925
        %v2710 = vpack.c.b16 %v1934, %v1930
        %v2711 = vpack.c.b16 %v1935, %v1931
        %v2712 = vpack.c.b16 %v1936, %v1932
        %v2713 = vpack.c.b16 %v1937, %v1933
        %v2714 = vpack.c.b16 %v1942, %v1938
        %v2715 = vpack.c.b16 %v1943, %v1939
        %v2716 = vpack.c.b16 %v1944, %v1940
        %v2717 = vpack.c.b16 %v1945, %v1941
        %v2718 = vpack.c.b16 %v1950, %v1946
        %v2719 = vpack.c.b16 %v1951, %v1947
        %v2720 = vpack.c.b16 %v1952, %v1948
        %v2721 = vpack.c.b16 %v1953, %v1949
        %v2722 = vpack.c.b16 %v1958, %v1954
        %v2723 = vpack.c.b16 %v1959, %v1955
        %v2724 = vpack.c.b16 %v1960, %v1956
        %v2725 = vpack.c.b16 %v1961, %v1957
        %v2726 = vpack.c.b16 %v1966, %v1962
        %v2727 = vpack.c.b16 %v1967, %v1963
        %v2728 = vpack.c.b16 %v1968, %v1964
        %v2729 = vpack.c.b16 %v1969, %v1965
        %v2730 = vpack.c.b16 %v1974, %v1970
        %v2731 = vpack.c.b16 %v1975, %v1971
        %v2732 = vpack.c.b16 %v1976, %v1972
        %v2733 = vpack.c.b16 %v1977, %v1973
        %v2734 = vpack.c.b16 %v1982, %v1978
        %v2735 = vpack.c.b16 %v1983, %v1979
        %v2736 = vpack.c.b16 %v1984, %v1980
        %v2737 = vpack.c.b16 %v1985, %v1981
        %v2738 = vpack.c.b16 %v1990, %v1986
        %v2739 = vpack.c.b16 %v1991, %v1987
        %v2740 = vpack.c.b16 %v1992, %v1988
        %v2741 = vpack.c.b16 %v1993, %v1989
        %v2742 = vpack.c.b16 %v1998, %v1994
        %v2743 = vpack.c.b16 %v1999, %v1995
        %v2744 = vpack.c.b16 %v2000, %v1996
        %v2745 = vpack.c.b16 %v2001, %v1997
        %v2746 = vpack.c.b16 %v2006, %v2002
        %v2747 = vpack.c.b16 %v2007, %v2003
        %v2748 = vpack.c.b16 %v2008, %v2004
        %v2749 = vpack.c.b16 %v2009, %v2005
        %v2750 = vpack.c.b16 %v2014, %v2010
        %v2751 = vpack.c.b16 %v2015, %v2011
        %v2752 = vpack.c.b16 %v2016, %v2012
        %v2753 = vpack.c.b16 %v2017, %v2013
        %v2754 = vpack.c.b16 %v2022, %v2018
        %v2755 = vpack.c.b16 %v2023, %v2019
        %v2756 = vpack.c.b16 %v2024, %v2020
        %v2757 = vpack.c.b16 %v2025, %v2021
        %v2758 = vpack.c.b16 %v2030, %v2026
        %v2759 = vpack.c.b16 %v2031, %v2027
        %v2760 = vpack.c.b16 %v2032, %v2028
        %v2761 = vpack.c.b16 %v2033, %v2029
        %v2762 = vpack.c.b16 %v2038, %v2034
        %v2763 = vpack.c.b16 %v2039, %v2035
        %v2764 = vpack.c.b16 %v2040, %v2036
        %v2765 = vpack.c.b16 %v2041, %v2037
        %v2766 = vpack.c.b16 %v2046, %v2042
        %v2767 = vpack.c.b16 %v2047, %v2043
        %v2768 = vpack.c.b16 %v2048, %v2044
        %v2769 = vpack.c.b16 %v2049, %v2045
        %v2770 = vpack.c.b16 %v2054, %v2050
        %v2771 = vpack.c.b16 %v2055, %v2051
        %v2772 = vpack.c.b16 %v2056, %v2052
        %v2773 = vpack.c.b16 %v2057, %v2053
        %v2774 = vpack.c.b16 %v2062, %v2058
        %v2775 = vpack.c.b16 %v2063, %v2059
        %v2776 = vpack.c.b16 %v2064, %v2060
        %v2777 = vpack.c.b16 %v2065, %v2061
        %v2778 = vpack.c.b16 %v2070, %v2066
        %v2779 = vpack.c.b16 %v2071, %v2067
        %v2780 = vpack.c.b16 %v2072, %v2068
        %v2781 = vpack.c.b16 %v2073, %v2069
        %v2782 = vpack.c.b16 %v2078, %v2074
        %v2783 = vpack.c.b16 %v2079, %v2075
        %v2784 = vpack.c.b16 %v2080, %v2076
        %v2785 = vpack.c.b16 %v2081, %v2077
        %v2786 = vpack.c.b16 %v2086, %v2082
        %v2787 = vpack.c.b16 %v2087, %v2083
        %v2788 = vpack.c.b16 %v2088, %v2084
        %v2789 = vpack.c.b16 %v2089, %v2085
        %v2790 = vpack.c.b16 %v2094, %v2090
        %v2791 = vpack.c.b16 %v2095, %v2091
        %v2792 = vpack.c.b16 %v2096, %v2092
        %v2793 = vpack.c.b16 %v2097, %v2093
        %v2794 = vpack.c.b16 %v2102, %v2098
        %v2795 = vpack.c.b16 %v2103, %v2099
        %v2796 = vpack.c.b16 %v2104, %v2100
        %v2797 = vpack.c.b16 %v2105, %v2101
        %v2798 = vpack.c.b16 %v2110, %v2106
        %v2799 = vpack.c.b16 %v2111, %v2107
        %v2800 = vpack.c.b16 %v2112, %v2108
        %v2801 = vpack.c.b16 %v2113, %v2109
        %v2802 = vpack.c.b16 %v2118, %v2114
        %v2803 = vpack.c.b16 %v2119, %v2115
        %v2804 = vpack.c.b16 %v2120, %v2116
        %v2805 = vpack.c.b16 %v2121, %v2117
        %v2806 = vpack.c.b16 %v2126, %v2122
        %v2807 = vpack.c.b16 %v2127, %v2123
        %v2808 = vpack.c.b16 %v2128, %v2124
        %v2809 = vpack.c.b16 %v2129, %v2125
        %v2810 = vpack.c.b16 %v2134, %v2130
        %v2811 = vpack.c.b16 %v2135, %v2131
        %v2812 = vpack.c.b16 %v2136, %v2132
        %v2813 = vpack.c.b16 %v2137, %v2133
        %v2814 = vpack.c.b16 %v2142, %v2138
        %v2815 = vpack.c.b16 %v2143, %v2139
        %v2816 = vpack.c.b16 %v2144, %v2140
        %v2817 = vpack.c.b16 %v2145, %v2141
        %v2818 = vpack.c.b16 %v2150, %v2146
        %v2819 = vpack.c.b16 %v2151, %v2147
        %v2820 = vpack.c.b16 %v2152, %v2148
        %v2821 = vpack.c.b16 %v2153, %v2149
        %v2822 = vpack.c.b16 %v2158, %v2154
        %v2823 = vpack.c.b16 %v2159, %v2155
        %v2824 = vpack.c.b16 %v2160, %v2156
        %v2825 = vpack.c.b16 %v2161, %v2157
        %v2826 = vpack.c.b16 %v2166, %v2162
        %v2827 = vpack.c.b16 %v2167, %v2163
        %v2828 = vpack.c.b16 %v2168, %v2164
        %v2829 = vpack.c.b16 %v2169, %v2165
        %v2830 = vpack.c.b16 %v2174, %v2170
        %v2831 = vpack.c.b16 %v2175, %v2171
        %v2832 = vpack.c.b16 %v2176, %v2172
        %v2833 = vpack.c.b16 %v2177, %v2173
        %v2834 = vpack.c.b16 %v2182, %v2178
        %v2835 = vpack.c.b16 %v2183, %v2179
        %v2836 = vpack.c.b16 %v2184, %v2180
        %v2837 = vpack.c.b16 %v2185, %v2181
        %v2838 = vpack.c.b16 %v2190, %v2186
        %v2839 = vpack.c.b16 %v2191, %v2187
        %v2840 = vpack.c.b16 %v2192, %v2188
        %v2841 = vpack.c.b16 %v2193, %v2189
        %v2842 = vpack.c.b16 %v2198, %v2194
        %v2843 = vpack.c.b16 %v2199, %v2195
        %v2844 = vpack.c.b16 %v2200, %v2196
        %v2845 = vpack.c.b16 %v2201, %v2197
        %v2846 = vpack.c.b16 %v2206, %v2202
        %v2847 = vpack.c.b16 %v2207, %v2203
        %v2848 = vpack.c.b16 %v2208, %v2204
        %v2849 = vpack.c.b16 %v2209, %v2205
        %v2850 = vpack.c.b16 %v2214, %v2210
        %v2851 = vpack.c.b16 %v2215, %v2211
        %v2852 = vpack.c.b16 %v2216, %v2212
        %v2853 = vpack.c.b16 %v2217, %v2213
        %v2854 = vpack.c.b16 %v2222, %v2218
        %v2855 = vpack.c.b16 %v2223, %v2219
        %v2856 = vpack.c.b16 %v2224, %v2220
        %v2857 = vpack.c.b16 %v2225, %v2221
        %v2858 = vpack.c.b16 %v2230, %v2226
        %v2859 = vpack.c.b16 %v2231, %v2227
        %v2860 = vpack.c.b16 %v2232, %v2228
        %v2861 = vpack.c.b16 %v2233, %v2229
        %v2862 = vpack.c.b16 %v2238, %v2234
        %v2863 = vpack.c.b16 %v2239, %v2235
        %v2864 = vpack.c.b16 %v2240, %v2236
        %v2865 = vpack.c.b16 %v2241, %v2237
        %v2866 = vpack.c.b16 %v2246, %v2242
        %v2867 = vpack.c.b16 %v2247, %v2243
        %v2868 = vpack.c.b16 %v2248, %v2244
        %v2869 = vpack.c.b16 %v2249, %v2245
        %v2870 = vpack.c.b16 %v2254, %v2250
        %v2871 = vpack.c.b16 %v2255, %v2251
        %v2872 = vpack.c.b16 %v2256, %v2252
        %v2873 = vpack.c.b16 %v2257, %v2253
        %v2874 = vpack.c.b16 %v2262, %v2258
        %v2875 = vpack.c.b16 %v2263, %v2259
        %v2876 = vpack.c.b16 %v2264, %v2260
        %v2877 = vpack.c.b16 %v2265, %v2261
        %v2878 = vpack.c.b16 %v2270, %v2266
        %v2879 = vpack.c.b16 %v2271, %v2267
        %v2880 = vpack.c.b16 %v2272, %v2268
        %v2881 = vpack.c.b16 %v2273, %v2269
        %v2882 = vpack.c.b16 %v2278, %v2274
        %v2883 = vpack.c.b16 %v2279, %v2275
        %v2884 = vpack.c.b16 %v2280, %v2276
        %v2885 = vpack.c.b16 %v2281, %v2277
        %v2886 = vpack.c.b16 %v2286, %v2282
        %v2887 = vpack.c.b16 %v2287, %v2283
        %v2888 = vpack.c.b16 %v2288, %v2284
        %v2889 = vpack.c.b16 %v2289, %v2285
        %v2890 = vpack.c.b16 %v2294, %v2290
        %v2891 = vpack.c.b16 %v2295, %v2291
        %v2892 = vpack.c.b16 %v2296, %v2292
        %v2893 = vpack.c.b16 %v2297, %v2293
        %v2894 = vpack.c.b16 %v2302, %v2298
        %v2895 = vpack.c.b16 %v2303, %v2299
        %v2896 = vpack.c.b16 %v2304, %v2300
        %v2897 = vpack.c.b16 %v2305, %v2301
        %v2898 = vpack.c.b16 %v2310, %v2306
        %v2899 = vpack.c.b16 %v2311, %v2307
        %v2900 = vpack.c.b16 %v2312, %v2308
        %v2901 = vpack.c.b16 %v2313, %v2309
        %v2902 = vpack.c.b16 %v2318, %v2314
        %v2903 = vpack.c.b16 %v2319, %v2315
        %v2904 = vpack.c.b16 %v2320, %v2316
        %v2905 = vpack.c.b16 %v2321, %v2317
        %v2906 = vpack.c.b16 %v2326, %v2322
        %v2907 = vpack.c.b16 %v2327, %v2323
        %v2908 = vpack.c.b16 %v2328, %v2324
        %v2909 = vpack.c.b16 %v2329, %v2325
        %v2910 = vpack.c.b16 %v2334, %v2330
        %v2911 = vpack.c.b16 %v2335, %v2331
        %v2912 = vpack.c.b16 %v2336, %v2332
        %v2913 = vpack.c.b16 %v2337, %v2333
        %v2914 = vpack.c.b16 %v2342, %v2338
        %v2915 = vpack.c.b16 %v2343, %v2339
        %v2916 = vpack.c.b16 %v2344, %v2340
        %v2917 = vpack.c.b16 %v2345, %v2341
        %v2918 = vpack.c.b16 %v2350, %v2346
        %v2919 = vpack.c.b16 %v2351, %v2347
        %v2920 = vpack.c.b16 %v2352, %v2348
        %v2921 = vpack.c.b16 %v2353, %v2349
        %v2922 = vpack.c.b16 %v2358, %v2354
        %v2923 = vpack.c.b16 %v2359, %v2355
        %v2924 = vpack.c.b16 %v2360, %v2356
        %v2925 = vpack.c.b16 %v2361, %v2357
        %v2926 = vpack.c.b16 %v2366, %v2362
        %v2927 = vpack.c.b16 %v2367, %v2363
        %v2928 = vpack.c.b16 %v2368, %v2364
        %v2929 = vpack.c.b16 %v2369, %v2365
        %v2930 = vpack.c.b16 %v2374, %v2370
        %v2931 = vpack.c.b16 %v2375, %v2371
        %v2932 = vpack.c.b16 %v2376, %v2372
        %v2933 = vpack.c.b16 %v2377, %v2373
        %v2934 = vpack.c.b16 %v2382, %v2378
        %v2935 = vpack.c.b16 %v2383, %v2379
        %v2936 = vpack.c.b16 %v2384, %v2380
        %v2937 = vpack.c.b16 %v2385, %v2381
        %v2938 = vpack.c.b16 %v2390, %v2386
        %v2939 = vpack.c.b16 %v2391, %v2387
        %v2940 = vpack.c.b16 %v2392, %v2388
        %v2941 = vpack.c.b16 %v2393, %v2389
        %v2942 = vpack.c.b16 %v2398, %v2394
        %v2943 = vpack.c.b16 %v2399, %v2395
        %v2944 = vpack.c.b16 %v2400, %v2396
        %v2945 = vpack.c.b16 %v2401, %v2397
        %v2946 = vpack.c.b16 %v2406, %v2402
        %v2947 = vpack.c.b16 %v2407, %v2403
        %v2948 = vpack.c.b16 %v2408, %v2404
        %v2949 = vpack.c.b16 %v2409, %v2405
        %v2950 = vpack.c.b16 %v2414, %v2410
        %v2951 = vpack.c.b16 %v2415, %v2411
        %v2952 = vpack.c.b16 %v2416, %v2412
        %v2953 = vpack.c.b16 %v2417, %v2413
        %v2954 = vpack.c.b16 %v2422, %v2418
        %v2955 = vpack.c.b16 %v2423, %v2419
        %v2956 = vpack.c.b16 %v2424, %v2420
        %v2957 = vpack.c.b16 %v2425, %v2421
        %v2958 = vpack.c.b16 %v2430, %v2426
        %v2959 = vpack.c.b16 %v2431, %v2427
        %v2960 = vpack.c.b16 %v2432, %v2428
        %v2961 = vpack.c.b16 %v2433, %v2429
        %v2962 = vpack.c.b16 %v2438, %v2434
        %v2963 = vpack.c.b16 %v2439, %v2435
        %v2964 = vpack.c.b16 %v2440, %v2436
        %v2965 = vpack.c.b16 %v2441, %v2437
        %v2966 = vpack.c.b16 %v2446, %v2442
        %v2967 = vpack.c.b16 %v2447, %v2443
        %v2968 = vpack.c.b16 %v2448, %v2444
        %v2969 = vpack.c.b16 %v2449, %v2445
        %v2970 = vpack.c.b16 %v2454, %v2450
        %v2971 = vpack.c.b16 %v2455, %v2451
        %v2972 = vpack.c.b16 %v2456, %v2452
        %v2973 = vpack.c.b16 %v2457, %v2453
        %v2974 = vpack.c.b16 %v2462, %v2458
        %v2975 = vpack.c.b16 %v2463, %v2459
        %v2976 = vpack.c.b16 %v2464, %v2460
        %v2977 = vpack.c.b16 %v2465, %v2461
        %3490 = vmatprep.subr.bf16.mxu0 %v2495
        %3491 = vmatpush1.bf16.msra.mxu0 %v2494
        %3492 = vmatprep.subr.bf16.mxu0 %v2491
        %3493 = vmatpush1.bf16.msra.mxu0 %v2490
        %3494 = vmatprep.subr.bf16.mxu0 %v2487
        %3495 = vmatpush1.bf16.msra.mxu0 %v2486
        %3496 = vmatprep.subr.bf16.mxu0 %v2483
        %3497 = vmatpush1.bf16.msra.mxu0 %v2482
        %3498 = vmatprep.subr.bf16.mxu0 %v2479
        %3499 = vmatpush1.bf16.msra.mxu0 %v2478
        %3500 = vmatprep.subr.bf16.mxu0 %v2475
        %3501 = vmatpush1.bf16.msra.mxu0 %v2474
        %3502 = vmatprep.subr.bf16.mxu0 %v2471
        %3503 = vmatpush1.bf16.msra.mxu0 %v2470
        %3504 = vmatprep.subr.bf16.mxu0 %v2467
        %3505 = vmatpush1.bf16.msra.mxu0 %v2466
        %3506 = vmatprep.subr.bf16.mxu0 %v2527
        %3507 = vmatpush2.bf16.msra.mxu0 %v2526
        %3508 = vmatprep.subr.bf16.mxu0 %v2523
        %3509 = vmatpush2.bf16.msra.mxu0 %v2522
        %3510 = vmatprep.subr.bf16.mxu0 %v2519
        %3511 = vmatpush2.bf16.msra.mxu0 %v2518
        %3512 = vmatprep.subr.bf16.mxu0 %v2515
        %3513 = vmatpush2.bf16.msra.mxu0 %v2514
        %3514 = vmatprep.subr.bf16.mxu0 %v2511
        %3515 = vmatpush2.bf16.msra.mxu0 %v2510
        %3516 = vmatprep.subr.bf16.mxu0 %v2507
        %3517 = vmatpush2.bf16.msra.mxu0 %v2506
        %3518 = vmatprep.subr.bf16.mxu0 %v2503
        %3519 = vmatpush2.bf16.msra.mxu0 %v2502
        %3520 = vmatprep.subr.bf16.mxu0 %v2499
        %3521 = vmatpush2.bf16.msra.mxu0 %v2498
        %3522 = vmatprep.mubr.bf16.mxu0 %v899
        %3523 = vmatmul.mubr.bf16.gmra.mxu0 %v898
        %v3524 = vpop.f32.mrf.mxu0
        %v3525 = vadd.f32 0.0, %v3524
        %v3526 = vpop.f32.mrf.mxu0
        %v3527 = vadd.f32 0.0, %v3526
        %v3528 = vpop.f32.mrf.mxu0
        %v3529 = vadd.f32 0.0, %v3528
        %v3530 = vpop.f32.mrf.mxu0
        %v3531 = vadd.f32 0.0, %v3530
        %3532 = vdwg.mxu0
        %3533 = vmatprep.subr.bf16.mxu0 %v2559
        %3534 = vmatpush1.bf16.msra.mxu0 %v2558
        %3535 = vmatprep.subr.bf16.mxu0 %v2555
        %3536 = vmatpush1.bf16.msra.mxu0 %v2554
        %3537 = vmatprep.subr.bf16.mxu0 %v2551
        %3538 = vmatpush1.bf16.msra.mxu0 %v2550
        %3539 = vmatprep.subr.bf16.mxu0 %v2547
        %3540 = vmatpush1.bf16.msra.mxu0 %v2546
        %3541 = vmatprep.subr.bf16.mxu0 %v2543
        %3542 = vmatpush1.bf16.msra.mxu0 %v2542
        %3543 = vmatprep.subr.bf16.mxu0 %v2539
        %3544 = vmatpush1.bf16.msra.mxu0 %v2538
        %3545 = vmatprep.subr.bf16.mxu0 %v2535
        %3546 = vmatpush1.bf16.msra.mxu0 %v2534
        %3547 = vmatprep.subr.bf16.mxu0 %v2531
        %3548 = vmatpush1.bf16.msra.mxu0 %v2530
        %3549 = vmatprep.subr.bf16.mxu0 %v2591
        %3550 = vmatpush2.bf16.msra.mxu0 %v2590
        %3551 = vmatprep.subr.bf16.mxu0 %v2587
        %3552 = vmatpush2.bf16.msra.mxu0 %v2586
        %3553 = vmatprep.subr.bf16.mxu0 %v2583
        %3554 = vmatpush2.bf16.msra.mxu0 %v2582
        %3555 = vmatprep.subr.bf16.mxu0 %v2579
        %3556 = vmatpush2.bf16.msra.mxu0 %v2578
        %3557 = vmatprep.subr.bf16.mxu0 %v2575
        %3558 = vmatpush2.bf16.msra.mxu0 %v2574
        %3559 = vmatprep.subr.bf16.mxu0 %v2571
        %3560 = vmatpush2.bf16.msra.mxu0 %v2570
        %3561 = vmatprep.subr.bf16.mxu0 %v2567
        %3562 = vmatpush2.bf16.msra.mxu0 %v2566
        %3563 = vmatprep.subr.bf16.mxu0 %v2563
        %3564 = vmatpush2.bf16.msra.mxu0 %v2562
        %3565 = vmatprep.mubr.bf16.mxu0 %v901
        %3566 = vmatmul.mubr.bf16.gmra.mxu0 %v900
        %v3567 = vpop.f32.mrf.mxu0
        %v3568 = vadd.f32 %v3525, %v3567
        %v3569 = vpop.f32.mrf.mxu0
        %v3570 = vadd.f32 %v3527, %v3569
        %v3571 = vpop.f32.mrf.mxu0
        %v3572 = vadd.f32 %v3529, %v3571
        %v3573 = vpop.f32.mrf.mxu0
        %v3574 = vadd.f32 %v3531, %v3573
        %3575 = vdwg.mxu0
        %3576 = vmatprep.subr.bf16.mxu0 %v2623
        %3577 = vmatpush1.bf16.msra.mxu0 %v2622
        %3578 = vmatprep.subr.bf16.mxu0 %v2619
        %3579 = vmatpush1.bf16.msra.mxu0 %v2618
        %3580 = vmatprep.subr.bf16.mxu0 %v2615
        %3581 = vmatpush1.bf16.msra.mxu0 %v2614
        %3582 = vmatprep.subr.bf16.mxu0 %v2611
        %3583 = vmatpush1.bf16.msra.mxu0 %v2610
        %3584 = vmatprep.subr.bf16.mxu0 %v2607
        %3585 = vmatpush1.bf16.msra.mxu0 %v2606
        %3586 = vmatprep.subr.bf16.mxu0 %v2603
        %3587 = vmatpush1.bf16.msra.mxu0 %v2602
        %3588 = vmatprep.subr.bf16.mxu0 %v2599
        %3589 = vmatpush1.bf16.msra.mxu0 %v2598
        %3590 = vmatprep.subr.bf16.mxu0 %v2595
        %3591 = vmatpush1.bf16.msra.mxu0 %v2594
        %3592 = vmatprep.subr.bf16.mxu0 %v2655
        %3593 = vmatpush2.bf16.msra.mxu0 %v2654
        %3594 = vmatprep.subr.bf16.mxu0 %v2651
        %3595 = vmatpush2.bf16.msra.mxu0 %v2650
        %3596 = vmatprep.subr.bf16.mxu0 %v2647
        %3597 = vmatpush2.bf16.msra.mxu0 %v2646
        %3598 = vmatprep.subr.bf16.mxu0 %v2643
        %3599 = vmatpush2.bf16.msra.mxu0 %v2642
        %3600 = vmatprep.subr.bf16.mxu0 %v2639
        %3601 = vmatpush2.bf16.msra.mxu0 %v2638
        %3602 = vmatprep.subr.bf16.mxu0 %v2635
        %3603 = vmatpush2.bf16.msra.mxu0 %v2634
        %3604 = vmatprep.subr.bf16.mxu0 %v2631
        %3605 = vmatpush2.bf16.msra.mxu0 %v2630
        %3606 = vmatprep.subr.bf16.mxu0 %v2627
        %3607 = vmatpush2.bf16.msra.mxu0 %v2626
        %3608 = vmatprep.mubr.bf16.mxu0 %v903
        %3609 = vmatmul.mubr.bf16.gmra.mxu0 %v902
        %v3610 = vpop.f32.mrf.mxu0
        %v3611 = vadd.f32 %v3568, %v3610
        %v3612 = vpop.f32.mrf.mxu0
        %v3613 = vadd.f32 %v3570, %v3612
        %v3614 = vpop.f32.mrf.mxu0
        %v3615 = vadd.f32 %v3572, %v3614
        %v3616 = vpop.f32.mrf.mxu0
        %v3617 = vadd.f32 %v3574, %v3616
        %3618 = vdwg.mxu0
        %3619 = vmatprep.subr.bf16.mxu0 %v2687
        %3620 = vmatpush1.bf16.msra.mxu0 %v2686
        %3621 = vmatprep.subr.bf16.mxu0 %v2683
        %3622 = vmatpush1.bf16.msra.mxu0 %v2682
        %3623 = vmatprep.subr.bf16.mxu0 %v2679
        %3624 = vmatpush1.bf16.msra.mxu0 %v2678
        %3625 = vmatprep.subr.bf16.mxu0 %v2675
        %3626 = vmatpush1.bf16.msra.mxu0 %v2674
        %3627 = vmatprep.subr.bf16.mxu0 %v2671
        %3628 = vmatpush1.bf16.msra.mxu0 %v2670
        %3629 = vmatprep.subr.bf16.mxu0 %v2667
        %3630 = vmatpush1.bf16.msra.mxu0 %v2666
        %3631 = vmatprep.subr.bf16.mxu0 %v2663
        %3632 = vmatpush1.bf16.msra.mxu0 %v2662
        %3633 = vmatprep.subr.bf16.mxu0 %v2659
        %3634 = vmatpush1.bf16.msra.mxu0 %v2658
        %3635 = vmatprep.subr.bf16.mxu0 %v2719
        %3636 = vmatpush2.bf16.msra.mxu0 %v2718
        %3637 = vmatprep.subr.bf16.mxu0 %v2715
        %3638 = vmatpush2.bf16.msra.mxu0 %v2714
        %3639 = vmatprep.subr.bf16.mxu0 %v2711
        %3640 = vmatpush2.bf16.msra.mxu0 %v2710
        %3641 = vmatprep.subr.bf16.mxu0 %v2707
        %3642 = vmatpush2.bf16.msra.mxu0 %v2706
        %3643 = vmatprep.subr.bf16.mxu0 %v2703
        %3644 = vmatpush2.bf16.msra.mxu0 %v2702
        %3645 = vmatprep.subr.bf16.mxu0 %v2699
        %3646 = vmatpush2.bf16.msra.mxu0 %v2698
        %3647 = vmatprep.subr.bf16.mxu0 %v2695
        %3648 = vmatpush2.bf16.msra.mxu0 %v2694
        %3649 = vmatprep.subr.bf16.mxu0 %v2691
        %3650 = vmatpush2.bf16.msra.mxu0 %v2690
        %3651 = vmatprep.mubr.bf16.mxu0 %v905
        %3652 = vmatmul.mubr.bf16.gmra.mxu0 %v904
        %v3653 = vpop.f32.mrf.mxu0
        %v3654 = vadd.f32 %v3611, %v3653
        %v3655 = vpop.f32.mrf.mxu0
        %v3656 = vadd.f32 %v3613, %v3655
        %v3657 = vpop.f32.mrf.mxu0
        %v3658 = vadd.f32 %v3615, %v3657
        %v3659 = vpop.f32.mrf.mxu0
        %v3660 = vadd.f32 %v3617, %v3659
        %3661 = vdwg.mxu0
        %3662 = vmatprep.subr.bf16.mxu0 %v2751
        %3663 = vmatpush1.bf16.msra.mxu0 %v2750
        %3664 = vmatprep.subr.bf16.mxu0 %v2747
        %3665 = vmatpush1.bf16.msra.mxu0 %v2746
        %3666 = vmatprep.subr.bf16.mxu0 %v2743
        %3667 = vmatpush1.bf16.msra.mxu0 %v2742
        %3668 = vmatprep.subr.bf16.mxu0 %v2739
        %3669 = vmatpush1.bf16.msra.mxu0 %v2738
        %3670 = vmatprep.subr.bf16.mxu0 %v2735
        %3671 = vmatpush1.bf16.msra.mxu0 %v2734
        %3672 = vmatprep.subr.bf16.mxu0 %v2731
        %3673 = vmatpush1.bf16.msra.mxu0 %v2730
        %3674 = vmatprep.subr.bf16.mxu0 %v2727
        %3675 = vmatpush1.bf16.msra.mxu0 %v2726
        %3676 = vmatprep.subr.bf16.mxu0 %v2723
        %3677 = vmatpush1.bf16.msra.mxu0 %v2722
        %3678 = vmatprep.subr.bf16.mxu0 %v2783
        %3679 = vmatpush2.bf16.msra.mxu0 %v2782
        %3680 = vmatprep.subr.bf16.mxu0 %v2779
        %3681 = vmatpush2.bf16.msra.mxu0 %v2778
        %3682 = vmatprep.subr.bf16.mxu0 %v2775
        %3683 = vmatpush2.bf16.msra.mxu0 %v2774
        %3684 = vmatprep.subr.bf16.mxu0 %v2771
        %3685 = vmatpush2.bf16.msra.mxu0 %v2770
        %3686 = vmatprep.subr.bf16.mxu0 %v2767
        %3687 = vmatpush2.bf16.msra.mxu0 %v2766
        %3688 = vmatprep.subr.bf16.mxu0 %v2763
        %3689 = vmatpush2.bf16.msra.mxu0 %v2762
        %3690 = vmatprep.subr.bf16.mxu0 %v2759
        %3691 = vmatpush2.bf16.msra.mxu0 %v2758
        %3692 = vmatprep.subr.bf16.mxu0 %v2755
        %3693 = vmatpush2.bf16.msra.mxu0 %v2754
        %3694 = vmatprep.mubr.bf16.mxu0 %v907
        %3695 = vmatmul.mubr.bf16.gmra.mxu0 %v906
        %v3696 = vpop.f32.mrf.mxu0
        %v3697 = vadd.f32 %v3654, %v3696
        %v3698 = vpop.f32.mrf.mxu0
        %v3699 = vadd.f32 %v3656, %v3698
        %v3700 = vpop.f32.mrf.mxu0
        %v3701 = vadd.f32 %v3658, %v3700
        %v3702 = vpop.f32.mrf.mxu0
        %v3703 = vadd.f32 %v3660, %v3702
        %3704 = vdwg.mxu0
        %3705 = vmatprep.subr.bf16.mxu0 %v2815
        %3706 = vmatpush1.bf16.msra.mxu0 %v2814
        %3707 = vmatprep.subr.bf16.mxu0 %v2811
        %3708 = vmatpush1.bf16.msra.mxu0 %v2810
        %3709 = vmatprep.subr.bf16.mxu0 %v2807
        %3710 = vmatpush1.bf16.msra.mxu0 %v2806
        %3711 = vmatprep.subr.bf16.mxu0 %v2803
        %3712 = vmatpush1.bf16.msra.mxu0 %v2802
        %3713 = vmatprep.subr.bf16.mxu0 %v2799
        %3714 = vmatpush1.bf16.msra.mxu0 %v2798
        %3715 = vmatprep.subr.bf16.mxu0 %v2795
        %3716 = vmatpush1.bf16.msra.mxu0 %v2794
        %3717 = vmatprep.subr.bf16.mxu0 %v2791
        %3718 = vmatpush1.bf16.msra.mxu0 %v2790
        %3719 = vmatprep.subr.bf16.mxu0 %v2787
        %3720 = vmatpush1.bf16.msra.mxu0 %v2786
        %3721 = vmatprep.subr.bf16.mxu0 %v2847
        %3722 = vmatpush2.bf16.msra.mxu0 %v2846
        %3723 = vmatprep.subr.bf16.mxu0 %v2843
        %3724 = vmatpush2.bf16.msra.mxu0 %v2842
        %3725 = vmatprep.subr.bf16.mxu0 %v2839
        %3726 = vmatpush2.bf16.msra.mxu0 %v2838
        %3727 = vmatprep.subr.bf16.mxu0 %v2835
        %3728 = vmatpush2.bf16.msra.mxu0 %v2834
        %3729 = vmatprep.subr.bf16.mxu0 %v2831
        %3730 = vmatpush2.bf16.msra.mxu0 %v2830
        %3731 = vmatprep.subr.bf16.mxu0 %v2827
        %3732 = vmatpush2.bf16.msra.mxu0 %v2826
        %3733 = vmatprep.subr.bf16.mxu0 %v2823
        %3734 = vmatpush2.bf16.msra.mxu0 %v2822
        %3735 = vmatprep.subr.bf16.mxu0 %v2819
        %3736 = vmatpush2.bf16.msra.mxu0 %v2818
        %3737 = vmatprep.mubr.bf16.mxu0 %v909
        %3738 = vmatmul.mubr.bf16.gmra.mxu0 %v908
        %v3739 = vpop.f32.mrf.mxu0
        %v3740 = vadd.f32 %v3697, %v3739
        %v3741 = vpop.f32.mrf.mxu0
        %v3742 = vadd.f32 %v3699, %v3741
        %v3743 = vpop.f32.mrf.mxu0
        %v3744 = vadd.f32 %v3701, %v3743
        %v3745 = vpop.f32.mrf.mxu0
        %v3746 = vadd.f32 %v3703, %v3745
        %3747 = vdwg.mxu0
        %3748 = vmatprep.subr.bf16.mxu0 %v2879
        %3749 = vmatpush1.bf16.msra.mxu0 %v2878
        %3750 = vmatprep.subr.bf16.mxu0 %v2875
        %3751 = vmatpush1.bf16.msra.mxu0 %v2874
        %3752 = vmatprep.subr.bf16.mxu0 %v2871
        %3753 = vmatpush1.bf16.msra.mxu0 %v2870
        %3754 = vmatprep.subr.bf16.mxu0 %v2867
        %3755 = vmatpush1.bf16.msra.mxu0 %v2866
        %3756 = vmatprep.subr.bf16.mxu0 %v2863
        %3757 = vmatpush1.bf16.msra.mxu0 %v2862
        %3758 = vmatprep.subr.bf16.mxu0 %v2859
        %3759 = vmatpush1.bf16.msra.mxu0 %v2858
        %3760 = vmatprep.subr.bf16.mxu0 %v2855
        %3761 = vmatpush1.bf16.msra.mxu0 %v2854
        %3762 = vmatprep.subr.bf16.mxu0 %v2851
        %3763 = vmatpush1.bf16.msra.mxu0 %v2850
        %3764 = vmatprep.subr.bf16.mxu0 %v2911
        %3765 = vmatpush2.bf16.msra.mxu0 %v2910
        %3766 = vmatprep.subr.bf16.mxu0 %v2907
        %3767 = vmatpush2.bf16.msra.mxu0 %v2906
        %3768 = vmatprep.subr.bf16.mxu0 %v2903
        %3769 = vmatpush2.bf16.msra.mxu0 %v2902
        %3770 = vmatprep.subr.bf16.mxu0 %v2899
        %3771 = vmatpush2.bf16.msra.mxu0 %v2898
        %3772 = vmatprep.subr.bf16.mxu0 %v2895
        %3773 = vmatpush2.bf16.msra.mxu0 %v2894
        %3774 = vmatprep.subr.bf16.mxu0 %v2891
        %3775 = vmatpush2.bf16.msra.mxu0 %v2890
        %3776 = vmatprep.subr.bf16.mxu0 %v2887
        %3777 = vmatpush2.bf16.msra.mxu0 %v2886
        %3778 = vmatprep.subr.bf16.mxu0 %v2883
        %3779 = vmatpush2.bf16.msra.mxu0 %v2882
        %3780 = vmatprep.mubr.bf16.mxu0 %v911
        %3781 = vmatmul.mubr.bf16.gmra.mxu0 %v910
        %v3782 = vpop.f32.mrf.mxu0
        %v3783 = vadd.f32 %v3740, %v3782
        %v3784 = vpop.f32.mrf.mxu0
        %v3785 = vadd.f32 %v3742, %v3784
        %v3786 = vpop.f32.mrf.mxu0
        %v3787 = vadd.f32 %v3744, %v3786
        %v3788 = vpop.f32.mrf.mxu0
        %v3789 = vadd.f32 %v3746, %v3788
        %3790 = vdwg.mxu0
        %3791 = vmatprep.subr.bf16.mxu0 %v2943
        %3792 = vmatpush1.bf16.msra.mxu0 %v2942
        %3793 = vmatprep.subr.bf16.mxu0 %v2939
        %3794 = vmatpush1.bf16.msra.mxu0 %v2938
        %3795 = vmatprep.subr.bf16.mxu0 %v2935
        %3796 = vmatpush1.bf16.msra.mxu0 %v2934
        %3797 = vmatprep.subr.bf16.mxu0 %v2931
        %3798 = vmatpush1.bf16.msra.mxu0 %v2930
        %3799 = vmatprep.subr.bf16.mxu0 %v2927
        %3800 = vmatpush1.bf16.msra.mxu0 %v2926
        %3801 = vmatprep.subr.bf16.mxu0 %v2923
        %3802 = vmatpush1.bf16.msra.mxu0 %v2922
        %3803 = vmatprep.subr.bf16.mxu0 %v2919
        %3804 = vmatpush1.bf16.msra.mxu0 %v2918
        %3805 = vmatprep.subr.bf16.mxu0 %v2915
        %3806 = vmatpush1.bf16.msra.mxu0 %v2914
        %3807 = vmatprep.subr.bf16.mxu0 %v2975
        %3808 = vmatpush2.bf16.msra.mxu0 %v2974
        %3809 = vmatprep.subr.bf16.mxu0 %v2971
        %3810 = vmatpush2.bf16.msra.mxu0 %v2970
        %3811 = vmatprep.subr.bf16.mxu0 %v2967
        %3812 = vmatpush2.bf16.msra.mxu0 %v2966
        %3813 = vmatprep.subr.bf16.mxu0 %v2963
        %3814 = vmatpush2.bf16.msra.mxu0 %v2962
        %3815 = vmatprep.subr.bf16.mxu0 %v2959
        %3816 = vmatpush2.bf16.msra.mxu0 %v2958
        %3817 = vmatprep.subr.bf16.mxu0 %v2955
        %3818 = vmatpush2.bf16.msra.mxu0 %v2954
        %3819 = vmatprep.subr.bf16.mxu0 %v2951
        %3820 = vmatpush2.bf16.msra.mxu0 %v2950
        %3821 = vmatprep.subr.bf16.mxu0 %v2947
        %3822 = vmatpush2.bf16.msra.mxu0 %v2946
        %3823 = vmatprep.mubr.bf16.mxu0 %v913
        %3824 = vmatmul.mubr.bf16.gmra.mxu0 %v912
        %v3825 = vpop.f32.mrf.mxu0
        %v3826 = vadd.f32 %v3783, %v3825
        %v3827 = vpop.f32.mrf.mxu0
        %v3828 = vadd.f32 %v3785, %v3827
        %v3829 = vpop.f32.mrf.mxu0
        %v3830 = vadd.f32 %v3787, %v3829
        %v3831 = vpop.f32.mrf.mxu0
        %v3832 = vadd.f32 %v3789, %v3831
        %3833 = vdwg.mxu0
        %3834 = vmatprep.subr.bf16.mxu0 %v2497
        %3835 = vmatpush1.bf16.msra.mxu0 %v2496
        %3836 = vmatprep.subr.bf16.mxu0 %v2493
        %3837 = vmatpush1.bf16.msra.mxu0 %v2492
        %3838 = vmatprep.subr.bf16.mxu0 %v2489
        %3839 = vmatpush1.bf16.msra.mxu0 %v2488
        %3840 = vmatprep.subr.bf16.mxu0 %v2485
        %3841 = vmatpush1.bf16.msra.mxu0 %v2484
        %3842 = vmatprep.subr.bf16.mxu0 %v2481
        %3843 = vmatpush1.bf16.msra.mxu0 %v2480
        %3844 = vmatprep.subr.bf16.mxu0 %v2477
        %3845 = vmatpush1.bf16.msra.mxu0 %v2476
        %3846 = vmatprep.subr.bf16.mxu0 %v2473
        %3847 = vmatpush1.bf16.msra.mxu0 %v2472
        %3848 = vmatprep.subr.bf16.mxu0 %v2469
        %3849 = vmatpush1.bf16.msra.mxu0 %v2468
        %3850 = vmatprep.subr.bf16.mxu0 %v2529
        %3851 = vmatpush2.bf16.msra.mxu0 %v2528
        %3852 = vmatprep.subr.bf16.mxu0 %v2525
        %3853 = vmatpush2.bf16.msra.mxu0 %v2524
        %3854 = vmatprep.subr.bf16.mxu0 %v2521
        %3855 = vmatpush2.bf16.msra.mxu0 %v2520
        %3856 = vmatprep.subr.bf16.mxu0 %v2517
        %3857 = vmatpush2.bf16.msra.mxu0 %v2516
        %3858 = vmatprep.subr.bf16.mxu0 %v2513
        %3859 = vmatpush2.bf16.msra.mxu0 %v2512
        %3860 = vmatprep.subr.bf16.mxu0 %v2509
        %3861 = vmatpush2.bf16.msra.mxu0 %v2508
        %3862 = vmatprep.subr.bf16.mxu0 %v2505
        %3863 = vmatpush2.bf16.msra.mxu0 %v2504
        %3864 = vmatprep.subr.bf16.mxu0 %v2501
        %3865 = vmatpush2.bf16.msra.mxu0 %v2500
        %3866 = vmatprep.mubr.bf16.mxu0 %v899
        %3867 = vmatmul.mubr.bf16.gmra.mxu0 %v898
        %v3868 = vpop.f32.mrf.mxu0
        %v3869 = vadd.f32 0.0, %v3868
        %v3870 = vpop.f32.mrf.mxu0
        %v3871 = vadd.f32 0.0, %v3870
        %v3872 = vpop.f32.mrf.mxu0
        %v3873 = vadd.f32 0.0, %v3872
        %v3874 = vpop.f32.mrf.mxu0
        %v3875 = vadd.f32 0.0, %v3874
        %3876 = vdwg.mxu0
        %3877 = vmatprep.subr.bf16.mxu0 %v2561
        %3878 = vmatpush1.bf16.msra.mxu0 %v2560
        %3879 = vmatprep.subr.bf16.mxu0 %v2557
        %3880 = vmatpush1.bf16.msra.mxu0 %v2556
        %3881 = vmatprep.subr.bf16.mxu0 %v2553
        %3882 = vmatpush1.bf16.msra.mxu0 %v2552
        %3883 = vmatprep.subr.bf16.mxu0 %v2549
        %3884 = vmatpush1.bf16.msra.mxu0 %v2548
        %3885 = vmatprep.subr.bf16.mxu0 %v2545
        %3886 = vmatpush1.bf16.msra.mxu0 %v2544
        %3887 = vmatprep.subr.bf16.mxu0 %v2541
        %3888 = vmatpush1.bf16.msra.mxu0 %v2540
        %3889 = vmatprep.subr.bf16.mxu0 %v2537
        %3890 = vmatpush1.bf16.msra.mxu0 %v2536
        %3891 = vmatprep.subr.bf16.mxu0 %v2533
        %3892 = vmatpush1.bf16.msra.mxu0 %v2532
        %3893 = vmatprep.subr.bf16.mxu0 %v2593
        %3894 = vmatpush2.bf16.msra.mxu0 %v2592
        %3895 = vmatprep.subr.bf16.mxu0 %v2589
        %3896 = vmatpush2.bf16.msra.mxu0 %v2588
        %3897 = vmatprep.subr.bf16.mxu0 %v2585
        %3898 = vmatpush2.bf16.msra.mxu0 %v2584
        %3899 = vmatprep.subr.bf16.mxu0 %v2581
        %3900 = vmatpush2.bf16.msra.mxu0 %v2580
        %3901 = vmatprep.subr.bf16.mxu0 %v2577
        %3902 = vmatpush2.bf16.msra.mxu0 %v2576
        %3903 = vmatprep.subr.bf16.mxu0 %v2573
        %3904 = vmatpush2.bf16.msra.mxu0 %v2572
        %3905 = vmatprep.subr.bf16.mxu0 %v2569
        %3906 = vmatpush2.bf16.msra.mxu0 %v2568
        %3907 = vmatprep.subr.bf16.mxu0 %v2565
        %3908 = vmatpush2.bf16.msra.mxu0 %v2564
        %3909 = vmatprep.mubr.bf16.mxu0 %v901
        %3910 = vmatmul.mubr.bf16.gmra.mxu0 %v900
        %v3911 = vpop.f32.mrf.mxu0
        %v3912 = vadd.f32 %v3869, %v3911
        %v3913 = vpop.f32.mrf.mxu0
        %v3914 = vadd.f32 %v3871, %v3913
        %v3915 = vpop.f32.mrf.mxu0
        %v3916 = vadd.f32 %v3873, %v3915
        %v3917 = vpop.f32.mrf.mxu0
        %v3918 = vadd.f32 %v3875, %v3917
        %3919 = vdwg.mxu0
        %3920 = vmatprep.subr.bf16.mxu0 %v2625
        %3921 = vmatpush1.bf16.msra.mxu0 %v2624
        %3922 = vmatprep.subr.bf16.mxu0 %v2621
        %3923 = vmatpush1.bf16.msra.mxu0 %v2620
        %3924 = vmatprep.subr.bf16.mxu0 %v2617
        %3925 = vmatpush1.bf16.msra.mxu0 %v2616
        %3926 = vmatprep.subr.bf16.mxu0 %v2613
        %3927 = vmatpush1.bf16.msra.mxu0 %v2612
        %3928 = vmatprep.subr.bf16.mxu0 %v2609
        %3929 = vmatpush1.bf16.msra.mxu0 %v2608
        %3930 = vmatprep.subr.bf16.mxu0 %v2605
        %3931 = vmatpush1.bf16.msra.mxu0 %v2604
        %3932 = vmatprep.subr.bf16.mxu0 %v2601
        %3933 = vmatpush1.bf16.msra.mxu0 %v2600
        %3934 = vmatprep.subr.bf16.mxu0 %v2597
        %3935 = vmatpush1.bf16.msra.mxu0 %v2596
        %3936 = vmatprep.subr.bf16.mxu0 %v2657
        %3937 = vmatpush2.bf16.msra.mxu0 %v2656
        %3938 = vmatprep.subr.bf16.mxu0 %v2653
        %3939 = vmatpush2.bf16.msra.mxu0 %v2652
        %3940 = vmatprep.subr.bf16.mxu0 %v2649
        %3941 = vmatpush2.bf16.msra.mxu0 %v2648
        %3942 = vmatprep.subr.bf16.mxu0 %v2645
        %3943 = vmatpush2.bf16.msra.mxu0 %v2644
        %3944 = vmatprep.subr.bf16.mxu0 %v2641
        %3945 = vmatpush2.bf16.msra.mxu0 %v2640
        %3946 = vmatprep.subr.bf16.mxu0 %v2637
        %3947 = vmatpush2.bf16.msra.mxu0 %v2636
        %3948 = vmatprep.subr.bf16.mxu0 %v2633
        %3949 = vmatpush2.bf16.msra.mxu0 %v2632
        %3950 = vmatprep.subr.bf16.mxu0 %v2629
        %3951 = vmatpush2.bf16.msra.mxu0 %v2628
        %3952 = vmatprep.mubr.bf16.mxu0 %v903
        %3953 = vmatmul.mubr.bf16.gmra.mxu0 %v902
        %v3954 = vpop.f32.mrf.mxu0
        %v3955 = vadd.f32 %v3912, %v3954
        %v3956 = vpop.f32.mrf.mxu0
        %v3957 = vadd.f32 %v3914, %v3956
        %v3958 = vpop.f32.mrf.mxu0
        %v3959 = vadd.f32 %v3916, %v3958
        %v3960 = vpop.f32.mrf.mxu0
        %v3961 = vadd.f32 %v3918, %v3960
        %3962 = vdwg.mxu0
        %3963 = vmatprep.subr.bf16.mxu0 %v2689
        %3964 = vmatpush1.bf16.msra.mxu0 %v2688
        %3965 = vmatprep.subr.bf16.mxu0 %v2685
        %3966 = vmatpush1.bf16.msra.mxu0 %v2684
        %3967 = vmatprep.subr.bf16.mxu0 %v2681
        %3968 = vmatpush1.bf16.msra.mxu0 %v2680
        %3969 = vmatprep.subr.bf16.mxu0 %v2677
        %3970 = vmatpush1.bf16.msra.mxu0 %v2676
        %3971 = vmatprep.subr.bf16.mxu0 %v2673
        %3972 = vmatpush1.bf16.msra.mxu0 %v2672
        %3973 = vmatprep.subr.bf16.mxu0 %v2669
        %3974 = vmatpush1.bf16.msra.mxu0 %v2668
        %3975 = vmatprep.subr.bf16.mxu0 %v2665
        %3976 = vmatpush1.bf16.msra.mxu0 %v2664
        %3977 = vmatprep.subr.bf16.mxu0 %v2661
        %3978 = vmatpush1.bf16.msra.mxu0 %v2660
        %3979 = vmatprep.subr.bf16.mxu0 %v2721
        %3980 = vmatpush2.bf16.msra.mxu0 %v2720
        %3981 = vmatprep.subr.bf16.mxu0 %v2717
        %3982 = vmatpush2.bf16.msra.mxu0 %v2716
        %3983 = vmatprep.subr.bf16.mxu0 %v2713
        %3984 = vmatpush2.bf16.msra.mxu0 %v2712
        %3985 = vmatprep.subr.bf16.mxu0 %v2709
        %3986 = vmatpush2.bf16.msra.mxu0 %v2708
        %3987 = vmatprep.subr.bf16.mxu0 %v2705
        %3988 = vmatpush2.bf16.msra.mxu0 %v2704
        %3989 = vmatprep.subr.bf16.mxu0 %v2701
        %3990 = vmatpush2.bf16.msra.mxu0 %v2700
        %3991 = vmatprep.subr.bf16.mxu0 %v2697
        %3992 = vmatpush2.bf16.msra.mxu0 %v2696
        %3993 = vmatprep.subr.bf16.mxu0 %v2693
        %3994 = vmatpush2.bf16.msra.mxu0 %v2692
        %3995 = vmatprep.mubr.bf16.mxu0 %v905
        %3996 = vmatmul.mubr.bf16.gmra.mxu0 %v904
        %v3997 = vpop.f32.mrf.mxu0
        %v3998 = vadd.f32 %v3955, %v3997
        %v3999 = vpop.f32.mrf.mxu0
        %v4000 = vadd.f32 %v3957, %v3999
        %v4001 = vpop.f32.mrf.mxu0
        %v4002 = vadd.f32 %v3959, %v4001
        %v4003 = vpop.f32.mrf.mxu0
        %v4004 = vadd.f32 %v3961, %v4003
        %4005 = vdwg.mxu0
        %4006 = vmatprep.subr.bf16.mxu0 %v2753
        %4007 = vmatpush1.bf16.msra.mxu0 %v2752
        %4008 = vmatprep.subr.bf16.mxu0 %v2749
        %4009 = vmatpush1.bf16.msra.mxu0 %v2748
        %4010 = vmatprep.subr.bf16.mxu0 %v2745
        %4011 = vmatpush1.bf16.msra.mxu0 %v2744
        %4012 = vmatprep.subr.bf16.mxu0 %v2741
        %4013 = vmatpush1.bf16.msra.mxu0 %v2740
        %4014 = vmatprep.subr.bf16.mxu0 %v2737
        %4015 = vmatpush1.bf16.msra.mxu0 %v2736
        %4016 = vmatprep.subr.bf16.mxu0 %v2733
        %4017 = vmatpush1.bf16.msra.mxu0 %v2732
        %4018 = vmatprep.subr.bf16.mxu0 %v2729
        %4019 = vmatpush1.bf16.msra.mxu0 %v2728
        %4020 = vmatprep.subr.bf16.mxu0 %v2725
        %4021 = vmatpush1.bf16.msra.mxu0 %v2724
        %4022 = vmatprep.subr.bf16.mxu0 %v2785
        %4023 = vmatpush2.bf16.msra.mxu0 %v2784
        %4024 = vmatprep.subr.bf16.mxu0 %v2781
        %4025 = vmatpush2.bf16.msra.mxu0 %v2780
        %4026 = vmatprep.subr.bf16.mxu0 %v2777
        %4027 = vmatpush2.bf16.msra.mxu0 %v2776
        %4028 = vmatprep.subr.bf16.mxu0 %v2773
        %4029 = vmatpush2.bf16.msra.mxu0 %v2772
        %4030 = vmatprep.subr.bf16.mxu0 %v2769
        %4031 = vmatpush2.bf16.msra.mxu0 %v2768
        %4032 = vmatprep.subr.bf16.mxu0 %v2765
        %4033 = vmatpush2.bf16.msra.mxu0 %v2764
        %4034 = vmatprep.subr.bf16.mxu0 %v2761
        %4035 = vmatpush2.bf16.msra.mxu0 %v2760
        %4036 = vmatprep.subr.bf16.mxu0 %v2757
        %4037 = vmatpush2.bf16.msra.mxu0 %v2756
        %4038 = vmatprep.mubr.bf16.mxu0 %v907
        %4039 = vmatmul.mubr.bf16.gmra.mxu0 %v906
        %v4040 = vpop.f32.mrf.mxu0
        %v4041 = vadd.f32 %v3998, %v4040
        %v4042 = vpop.f32.mrf.mxu0
        %v4043 = vadd.f32 %v4000, %v4042
        %v4044 = vpop.f32.mrf.mxu0
        %v4045 = vadd.f32 %v4002, %v4044
        %v4046 = vpop.f32.mrf.mxu0
        %v4047 = vadd.f32 %v4004, %v4046
        %4048 = vdwg.mxu0
        %4049 = vmatprep.subr.bf16.mxu0 %v2817
        %4050 = vmatpush1.bf16.msra.mxu0 %v2816
        %4051 = vmatprep.subr.bf16.mxu0 %v2813
        %4052 = vmatpush1.bf16.msra.mxu0 %v2812
        %4053 = vmatprep.subr.bf16.mxu0 %v2809
        %4054 = vmatpush1.bf16.msra.mxu0 %v2808
        %4055 = vmatprep.subr.bf16.mxu0 %v2805
        %4056 = vmatpush1.bf16.msra.mxu0 %v2804
        %4057 = vmatprep.subr.bf16.mxu0 %v2801
        %4058 = vmatpush1.bf16.msra.mxu0 %v2800
        %4059 = vmatprep.subr.bf16.mxu0 %v2797
        %4060 = vmatpush1.bf16.msra.mxu0 %v2796
        %4061 = vmatprep.subr.bf16.mxu0 %v2793
        %4062 = vmatpush1.bf16.msra.mxu0 %v2792
        %4063 = vmatprep.subr.bf16.mxu0 %v2789
        %4064 = vmatpush1.bf16.msra.mxu0 %v2788
        %4065 = vmatprep.subr.bf16.mxu0 %v2849
        %4066 = vmatpush2.bf16.msra.mxu0 %v2848
        %4067 = vmatprep.subr.bf16.mxu0 %v2845
        %4068 = vmatpush2.bf16.msra.mxu0 %v2844
        %4069 = vmatprep.subr.bf16.mxu0 %v2841
        %4070 = vmatpush2.bf16.msra.mxu0 %v2840
        %4071 = vmatprep.subr.bf16.mxu0 %v2837
        %4072 = vmatpush2.bf16.msra.mxu0 %v2836
        %4073 = vmatprep.subr.bf16.mxu0 %v2833
        %4074 = vmatpush2.bf16.msra.mxu0 %v2832
        %4075 = vmatprep.subr.bf16.mxu0 %v2829
        %4076 = vmatpush2.bf16.msra.mxu0 %v2828
        %4077 = vmatprep.subr.bf16.mxu0 %v2825
        %4078 = vmatpush2.bf16.msra.mxu0 %v2824
        %4079 = vmatprep.subr.bf16.mxu0 %v2821
        %4080 = vmatpush2.bf16.msra.mxu0 %v2820
        %4081 = vmatprep.mubr.bf16.mxu0 %v909
        %4082 = vmatmul.mubr.bf16.gmra.mxu0 %v908
        %v4083 = vpop.f32.mrf.mxu0
        %v4084 = vadd.f32 %v4041, %v4083
        %v4085 = vpop.f32.mrf.mxu0
        %v4086 = vadd.f32 %v4043, %v4085
        %v4087 = vpop.f32.mrf.mxu0
        %v4088 = vadd.f32 %v4045, %v4087
        %v4089 = vpop.f32.mrf.mxu0
        %v4090 = vadd.f32 %v4047, %v4089
        %4091 = vdwg.mxu0
        %4092 = vmatprep.subr.bf16.mxu0 %v2881
        %4093 = vmatpush1.bf16.msra.mxu0 %v2880
        %4094 = vmatprep.subr.bf16.mxu0 %v2877
        %4095 = vmatpush1.bf16.msra.mxu0 %v2876
        %4096 = vmatprep.subr.bf16.mxu0 %v2873
        %4097 = vmatpush1.bf16.msra.mxu0 %v2872
        %4098 = vmatprep.subr.bf16.mxu0 %v2869
        %4099 = vmatpush1.bf16.msra.mxu0 %v2868
        %4100 = vmatprep.subr.bf16.mxu0 %v2865
        %4101 = vmatpush1.bf16.msra.mxu0 %v2864
        %4102 = vmatprep.subr.bf16.mxu0 %v2861
        %4103 = vmatpush1.bf16.msra.mxu0 %v2860
        %4104 = vmatprep.subr.bf16.mxu0 %v2857
        %4105 = vmatpush1.bf16.msra.mxu0 %v2856
        %4106 = vmatprep.subr.bf16.mxu0 %v2853
        %4107 = vmatpush1.bf16.msra.mxu0 %v2852
        %4108 = vmatprep.subr.bf16.mxu0 %v2913
        %4109 = vmatpush2.bf16.msra.mxu0 %v2912
        %4110 = vmatprep.subr.bf16.mxu0 %v2909
        %4111 = vmatpush2.bf16.msra.mxu0 %v2908
        %4112 = vmatprep.subr.bf16.mxu0 %v2905
        %4113 = vmatpush2.bf16.msra.mxu0 %v2904
        %4114 = vmatprep.subr.bf16.mxu0 %v2901
        %4115 = vmatpush2.bf16.msra.mxu0 %v2900
        %4116 = vmatprep.subr.bf16.mxu0 %v2897
        %4117 = vmatpush2.bf16.msra.mxu0 %v2896
        %4118 = vmatprep.subr.bf16.mxu0 %v2893
        %4119 = vmatpush2.bf16.msra.mxu0 %v2892
        %4120 = vmatprep.subr.bf16.mxu0 %v2889
        %4121 = vmatpush2.bf16.msra.mxu0 %v2888
        %4122 = vmatprep.subr.bf16.mxu0 %v2885
        %4123 = vmatpush2.bf16.msra.mxu0 %v2884
        %4124 = vmatprep.mubr.bf16.mxu0 %v911
        %4125 = vmatmul.mubr.bf16.gmra.mxu0 %v910
        %v4126 = vpop.f32.mrf.mxu0
        %v4127 = vadd.f32 %v4084, %v4126
        %v4128 = vpop.f32.mrf.mxu0
        %v4129 = vadd.f32 %v4086, %v4128
        %v4130 = vpop.f32.mrf.mxu0
        %v4131 = vadd.f32 %v4088, %v4130
        %v4132 = vpop.f32.mrf.mxu0
        %v4133 = vadd.f32 %v4090, %v4132
        %4134 = vdwg.mxu0
        %4135 = vmatprep.subr.bf16.mxu0 %v2945
        %4136 = vmatpush1.bf16.msra.mxu0 %v2944
        %4137 = vmatprep.subr.bf16.mxu0 %v2941
        %4138 = vmatpush1.bf16.msra.mxu0 %v2940
        %4139 = vmatprep.subr.bf16.mxu0 %v2937
        %4140 = vmatpush1.bf16.msra.mxu0 %v2936
        %4141 = vmatprep.subr.bf16.mxu0 %v2933
        %4142 = vmatpush1.bf16.msra.mxu0 %v2932
        %4143 = vmatprep.subr.bf16.mxu0 %v2929
        %4144 = vmatpush1.bf16.msra.mxu0 %v2928
        %4145 = vmatprep.subr.bf16.mxu0 %v2925
        %4146 = vmatpush1.bf16.msra.mxu0 %v2924
        %4147 = vmatprep.subr.bf16.mxu0 %v2921
        %4148 = vmatpush1.bf16.msra.mxu0 %v2920
        %4149 = vmatprep.subr.bf16.mxu0 %v2917
        %4150 = vmatpush1.bf16.msra.mxu0 %v2916
        %4151 = vmatprep.subr.bf16.mxu0 %v2977
        %4152 = vmatpush2.bf16.msra.mxu0 %v2976
        %4153 = vmatprep.subr.bf16.mxu0 %v2973
        %4154 = vmatpush2.bf16.msra.mxu0 %v2972
        %4155 = vmatprep.subr.bf16.mxu0 %v2969
        %4156 = vmatpush2.bf16.msra.mxu0 %v2968
        %4157 = vmatprep.subr.bf16.mxu0 %v2965
        %4158 = vmatpush2.bf16.msra.mxu0 %v2964
        %4159 = vmatprep.subr.bf16.mxu0 %v2961
        %4160 = vmatpush2.bf16.msra.mxu0 %v2960
        %4161 = vmatprep.subr.bf16.mxu0 %v2957
        %4162 = vmatpush2.bf16.msra.mxu0 %v2956
        %4163 = vmatprep.subr.bf16.mxu0 %v2953
        %4164 = vmatpush2.bf16.msra.mxu0 %v2952
        %4165 = vmatprep.subr.bf16.mxu0 %v2949
        %4166 = vmatpush2.bf16.msra.mxu0 %v2948
        %4167 = vmatprep.mubr.bf16.mxu0 %v913
        %4168 = vmatmul.mubr.bf16.gmra.mxu0 %v912
        %v4169 = vpop.f32.mrf.mxu0
        %v4170 = vadd.f32 %v4127, %v4169
        %v4171 = vpop.f32.mrf.mxu0
        %v4172 = vadd.f32 %v4129, %v4171
        %v4173 = vpop.f32.mrf.mxu0
        %v4174 = vadd.f32 %v4131, %v4173
        %v4175 = vpop.f32.mrf.mxu0
        %v4176 = vadd.f32 %v4133, %v4175
        %4177 = vdwg.mxu0
        %v4178 = vadd.f32 %v314, %v3826
        %v4179 = vadd.f32 %v315, %v3828
        %v4180 = vadd.f32 %v316, %v4170
        %v4181 = vadd.f32 %v317, %v4172
        %v4182 = vadd.f32 %v318, %v3830
        %v4183 = vadd.f32 %v319, %v3832
        %v4184 = vadd.f32 %v320, %v4174
        %v4185 = vadd.f32 %v321, %v4176
        %4186 = vst [vmem:[#allocation2] sm:$0xff] %v4178
        %4187 = vst [vmem:[#allocation2 + $0x8] sm:$0xff] %v4179
        %4188 = vst [vmem:[#allocation2 + $0x10] sm:$0xff] %v4180
        %4189 = vst [vmem:[#allocation2 + $0x18] sm:$0xff] %v4181
        %4190 = vst [vmem:[#allocation2 + $0x20] sm:$0xff] %v4182
        %4191 = vst [vmem:[#allocation2 + $0x28] sm:$0xff] %v4183
        %4192 = vst [vmem:[#allocation2 + $0x30] sm:$0xff] %v4184
        %4193 = vst [vmem:[#allocation2 + $0x38] sm:$0xff] %v4185
        %p4194 = scmp.eq.s32.totalorder %s30, 3
        // Predicated region
        $region49: #{_mm_call.1} parent=31 // pred_check
          %p4195 = pneg %p4194
        $region50: #{_mm_call.1} parent=31 // pred_check_branch
          %4197 = sbr.rel (%p4195) target = $region52
        $region51: #{_mm_call.1} parent=31 // pred_region
          %v4198 = vld [vmem:[#allocation2] sm:$0xff]
          %v4199 = vld [vmem:[#allocation2 + $0x8] sm:$0xff]
          %v4200 = vld [vmem:[#allocation2 + $0x10] sm:$0xff]
          %v4201 = vld [vmem:[#allocation2 + $0x18] sm:$0xff]
          %v4202 = vld [vmem:[#allocation2 + $0x20] sm:$0xff]
          %v4203 = vld [vmem:[#allocation2 + $0x28] sm:$0xff]
          %v4204 = vld [vmem:[#allocation2 + $0x30] sm:$0xff]
          %v4205 = vld [vmem:[#allocation2 + $0x38] sm:$0xff]
          %v4206 = vld [vmem:[%s262] sm:$0xf]
          %v4208 = vlaneseq
          %v4209 = vshrl.u32 %v4208, 7
          %v4210 = vsub.s32 0, %v4209
          %v4211 = vrot.slane %v4206, %v4210
          %v4212 = vlaneseq
          %v4213 = vshrl.u32 %v4212, 7
          %v4214 = vsub.s32 1, %v4213
          %v4215 = vrot.slane %v4206, %v4214
          %v4216 = vlaneseq
          %v4217 = vshrl.u32 %v4216, 7
          %v4218 = vsub.s32 2, %v4217
          %v4219 = vrot.slane %v4206, %v4218
          %v4220 = vlaneseq
          %v4221 = vshrl.u32 %v4220, 7
          %v4222 = vsub.s32 3, %v4221
          %v4223 = vrot.slane %v4206, %v4222
          %v4228 = vadd.f32 %v4198, %v4211
          %v4229 = vadd.f32 %v4199, %v4215
          %v4230 = vadd.f32 %v4200, %v4219
          %v4231 = vadd.f32 %v4201, %v4223
          %v4232 = vadd.f32 %v4202, %v4211
          %v4233 = vadd.f32 %v4203, %v4215
          %v4234 = vadd.f32 %v4204, %v4219
          %v4235 = vadd.f32 %v4205, %v4223
          %4236 = vst [vmem:[%s294] sm:$0xff] %v4228
          %4237 = vst [vmem:[%s294 + $0x8] sm:$0xff] %v4229
          %4238 = vst [vmem:[%s294 + $0x10] sm:$0xff] %v4230
          %4239 = vst [vmem:[%s294 + $0x18] sm:$0xff] %v4231
          %4240 = vst [vmem:[%s294 + $0x20] sm:$0xff] %v4232
          %4241 = vst [vmem:[%s294 + $0x28] sm:$0xff] %v4233
          %4242 = vst [vmem:[%s294 + $0x30] sm:$0xff] %v4234
          %4243 = vst [vmem:[%s294 + $0x38] sm:$0xff] %v4235
        $region52: #{_mm_call.1} parent=31 // pred_fallthru
          _
        %s4244 = sand.u32 %s134, 1
        %s4245 = scalar_lea.sflag [#allocation5], %s4244
        %s4246 = sand.u32 %s134, 1
        %s4247 = smul.addr %s4246, 64
        %s4248 = scalar_lea.vmem [#allocation9], %s4247
        // Predicated region
        $region53: #{_mm_call.1} parent=31 // pred_check
          %p4249 = pneg %p144
        $region54: #{_mm_call.1} parent=31 // pred_check_branch
          %4251 = sbr.rel (%p4249) target = $region56
        $region55: #{_mm_call.1} parent=31 // pred_region
          %s4252 = smul.u32 2, %s28
          %s4253 = smul.u32 4, %s29
          %s4255 = ssub.s32 1024, 1024
          %4256 = vsyncadd %s4245, %s4255
          %s4257 = smul.addr %s4252, 16
          %s4258 = sadd.s32 %s4253, %s4257
          %s4259 = smul.addr %s4258, 128
          %s4260 = scalar_lea.hbm %s3, %s4259
          %s4261 = sshll.u32 %s4248, 4
          %s4262 = int_to_ptr.vmem [resolvable:$true] %s4261
          %4267 = dma.vmem_to_hbm [thread:$0]  %s4262, 1024, %s4260, %s4245, 512, 2048, 32
        $region56: #{_mm_call.1} parent=31 // pred_fallthru
          _
      $region32: #{_mm_call.1} parent=5 // pred_fallthru
        _
      %p4268 = scmp.le.s32.totalorder 2, %s18
      // Predicated region
      $region57: #{_mm_call.1} parent=5 // pred_check
        %p4269 = pneg %p4268
      $region58: #{_mm_call.1} parent=5 // pred_check_branch
        %4271 = sbr.rel (%p4269) target = $region60
      $region59: #{_mm_call.1} parent=5 // pred_region
        %s4272 = ssub.s32 %s18, 2
        // Predicated region
        $region61: #{_mm_call.1} parent=59 // pred_check
          %p4273 = pneg %p150
        $region62: #{_mm_call.1} parent=59 // pred_check_branch
          %4275 = sbr.rel (%p4273) target = $region64
        $region63: #{_mm_call.1} parent=59 // pred_region
          %s4276 = sand.u32 %s135, 1
          %s4277 = scalar_lea.sflag [#allocation5], %s4276
          %s4278 = sand.u32 %s135, 1
          %s4279 = smul.addr %s4278, 64
          %s4280 = scalar_lea.vmem [#allocation9], %s4279
          %4281 = dma.done %s4277, 1024
        $region64: #{_mm_call.1} parent=59 // pred_fallthru
          _
      $region60: #{_mm_call.1} parent=5 // pred_fallthru
        _
    $region6: #{_mm_call.1} parent=1 // loop_footer
      %s22 = sadd.s32 1, %s18
    $region7: #{_mm_call.1} parent=1 // loop_footer_branch
      %17 = sbr.rel target = $region3
    $region8: #{_mm_call.1} parent=1 // loop_exit
      _
    %4282 = vsyncpa [#allocation4], 1
    %s4283 = scalar_lea.sflag [#allocation4], 1
    %4284 = vsyncpa %s4283, 1
    %4285 = vsyncpa [#allocation7], 1
    %s4286 = scalar_lea.sflag [#allocation7], 1
    %4287 = vsyncpa %s4286, 1
    %4288 = vsyncpa [#allocation5], 1
    %s4289 = scalar_lea.sflag [#allocation5], 1
    %4290 = vsyncpa %s4289, 1

</llo_original>
